<compile_context>
chip_gen: v7x
topology: tpu7x:2x2x1
jax: 0.10.0
libtpu: 0.0.40
codegen_flags: <defaults>
</compile_context>

<pallas_src>
import functools

import jax
import jax.numpy as jnp
from jax import lax
from jax.experimental import pallas as pl
from jax.experimental.pallas import tpu as pltpu


# ---------------------------------------------------------------------------
# Fused encoder kernel
# ---------------------------------------------------------------------------
def _encoder_kernel(x_ref, lens_ref, convw_ref, shift_ref, wih2_ref, b2_ref,
                    whh2_ref, out_ref,
                    xpad_ref, xin2_ref, xw8_ref,
                    *, T, B, C, K, depth, H, pad):
    # x_ref    : (T*B, C)   f32  embedded tokens, time-major rows (row = t*B+b)
    # lens_ref : (B, 1)     i32  sequence lengths
    # convw_ref: (depth,K,C,C) bf16  conv weights, BN scale folded in
    # shift_ref: (depth,1,C)   f32   folded conv-bias + BN shift
    # wih2_ref : (2C, 8H)   bf16  block-diag packed [fwd|bwd] input weights,
    #                             gate-major columns [i_f i_b f_f f_b o_f o_b g_f g_b]
    # b2_ref   : (1, 8H)    f32   packed biases (b_ih + b_hh per direction)
    # whh2_ref : (2H, 8H)   bf16  block-diag packed recurrent weights
    # out_ref  : (T*B, 2H)  f32   [forward | backward] hidden states
    # xpad_ref : ((T+2*pad)*B, C) f32 scratch, zero halo for "same" conv
    # xin2_ref : (T*B, 2C)  f32   scratch, [x_t | x_{T-1-t}] rows
    # xw8_ref  : (T*B, 8H)  f32   scratch, fused input projections
    TB = T * B
    row0 = pad * B
    H2, H4, H6, H8 = 2 * H, 4 * H, 6 * H, 8 * H

    # ---- zero only the conv halos ------------------------------------------
    xpad_ref[0:row0] = jnp.zeros((row0, C), jnp.float32)
    xpad_ref[row0 + TB:row0 + TB + row0] = jnp.zeros((row0, C), jnp.float32)

    # ---- conv stack: Conv1d + folded-BN shift + ReLU, `depth` times --------
    # (Dropout is identity in eval mode.)
    cur = x_ref[...]                                   # (TB, C) f32
    for d in range(depth):
        xpad_ref[row0:row0 + TB] = cur
        acc = jnp.zeros((TB, C), jnp.float32)
        for k in range(K):                             # static unroll over taps
            tap = xpad_ref[k * B:k * B + TB]           # (TB, C), static slice
            acc = acc + jnp.dot(tap.astype(jnp.bfloat16), convw_ref[d, k],
                                preferred_element_type=jnp.float32)
        cur = jnp.maximum(acc + shift_ref[d], 0.0)     # (TB, C)

    # ---- build [x_t | x_{T-1-t}] rows for the fused input projection -------
    xin2_ref[:, 0:C] = cur
    for t in range(T):
        tr = T - 1 - t
        xin2_ref[t * B:(t + 1) * B, C:2 * C] = cur[tr * B:(tr + 1) * B]

    # ---- one matmul: both directions' input projections (lane-dense 8H) ----
    xw8_ref[...] = jnp.dot(xin2_ref[...].astype(jnp.bfloat16), wih2_ref[...],
                           preferred_element_type=jnp.float32) + b2_ref[...]

    lens = lens_ref[...]                               # (B, 1) int32
    whh2 = whh2_ref[...]                               # (2H, 8H) bf16
    col_is_fwd = lax.broadcasted_iota(jnp.int32, (1, H2), 1) < H

    # ---- fused bidirectional recurrence (fully unrolled, static indexing) --
    # state layout: h = [h_fwd | h_bwd], c = [c_fwd | c_bwd]  -> (B, 2H)
    h = jnp.zeros((B, H2), jnp.float32)
    c = jnp.zeros((B, H2), jnp.float32)
    for s in range(T):
        tb = T - 1 - s                                 # backward time index
        xw_t = xw8_ref[s * B:(s + 1) * B]              # (B, 8H) contiguous
        gates = xw_t + jnp.dot(h.astype(jnp.bfloat16), whh2,
                               preferred_element_type=jnp.float32)
        # gate-major layout: [i_f i_b | f_f f_b | o_f o_b | g_f g_b]
        sig = jax.nn.sigmoid(gates[:, 0:H6])           # i,f,o for both dirs
        g_cat = jnp.tanh(gates[:, H6:H8])              # g for both dirs
        i_cat = sig[:, 0:H2]
        f_cat = sig[:, H2:H4]
        o_cat = sig[:, H4:H6]
        c_new = f_cat * c + i_cat * g_cat              # (B, 2H)
        h_new = o_cat * jnp.tanh(c_new)

        # packed-sequence mask: fwd half valid iff s < len, bwd iff tb < len
        thr = jnp.where(col_is_fwd, s, tb)             # (1, 2H) const per step
        valid = lens > thr                             # (B, 2H)
        h = jnp.where(valid, h_new, h)
        c = jnp.where(valid, c_new, c)
        row = jnp.where(valid, h_new, 0.0)             # zero past the length
        out_ref[s * B:(s + 1) * B, 0:H] = row[:, 0:H]          # forward @ t=s
        out_ref[tb * B:(tb + 1) * B, H:H2] = row[:, H:H2]      # backward @ t=tb


# ---------------------------------------------------------------------------
# Wrapper: embedding gather + single fused pallas_call + layout glue
# ---------------------------------------------------------------------------
@functools.partial(jax.jit, static_argnames=("kernel_size",))
def text_encoder_forward(tokens, lengths, params, kernel_size):
    B, T = tokens.shape
    emb = params["embedding"]                 # (n_symbols, C) f32
    C = emb.shape[1]
    pad = (kernel_size - 1) // 2
    convw = params["conv_w"]                  # (depth, K, C, C) bf16
    shift = params["conv_shift"]              # (depth, 1, C)    f32
    wih2 = params["lstm_wih2"]                # (2C, 8H)         bf16
    b2 = params["lstm_b2"]                    # (1, 8H)          f32
    whh2 = params["lstm_whh2"]                # (2H, 8H)         bf16
    depth, K = convw.shape[0], convw.shape[1]
    H = whh2.shape[0] // 2

    # Embedding lookup (single XLA gather), time-major rows for the kernel.
    x = jnp.take(emb, tokens.T, axis=0).reshape(T * B, C)    # (T*B, C)
    lens2d = lengths.reshape(B, 1).astype(jnp.int32)

    kern = functools.partial(_encoder_kernel, T=T, B=B, C=C, K=K,
                             depth=depth, H=H, pad=pad)

    out = pl.pallas_call(
        kern,
        out_shape=jax.ShapeDtypeStruct((T * B, 2 * H), jnp.float32),
        scratch_shapes=[
            pltpu.VMEM(((T + 2 * pad) * B, C), jnp.float32),  # padded acts
            pltpu.VMEM((T * B, 2 * C), jnp.float32),          # [x_t | x_rev]
            pltpu.VMEM((T * B, 8 * H), jnp.float32),          # input projections
        ],
    )(x, lens2d, convw, shift, wih2, b2, whh2)

    # pad_packed_sequence layout: (B, T, 2H), features = [forward | backward].
    return jnp.transpose(out.reshape(T, B, 2 * H), (1, 0, 2))


# ---------------------------------------------------------------------------
# Parameter construction (deterministic, synthetic)
# ---------------------------------------------------------------------------
def _pack_lstm(w_ih_f, w_hh_f, b_f, w_ih_b, w_hh_b, b_b, C, H):
    """Pack PyTorch-layout LSTM weights into block-diag, gate-major matrices.

    PyTorch row order within 4H is [i; f; g; o].  Fused column layout is
    [i_f i_b | f_f f_b | o_f o_b | g_f g_b] (each block H wide, total 8H).
    """
    H8 = 8 * H
    wih2 = jnp.zeros((2 * C, H8), jnp.float32)
    whh2 = jnp.zeros((2 * H, H8), jnp.float32)
    b2 = jnp.zeros((H8,), jnp.float32)
    gate_src = {"i": 0, "f": 1, "g": 2, "o": 3}     # PyTorch row-block order
    gate_dst = {"i": 0, "f": 2, "o": 4, "g": 6}     # fused column-block order
    dirs = [(w_ih_f, w_hh_f, b_f), (w_ih_b, w_hh_b, b_b)]
    for dir_idx, (w_ih, w_hh, b) in enumerate(dirs):
        for gname in ("i", "f", "g", "o"):
            src = slice(gate_src[gname] * H, (gate_src[gname] + 1) * H)
            dst = slice((gate_dst[gname] + dir_idx) * H,
                        (gate_dst[gname] + dir_idx + 1) * H)
            wih2 = wih2.at[dir_idx * C:(dir_idx + 1) * C, dst].set(w_ih[src].T)
            whh2 = whh2.at[dir_idx * H:(dir_idx + 1) * H, dst].set(w_hh[src].T)
            b2 = b2.at[dst].set(b[src])
    return (wih2.astype(jnp.bfloat16), whh2.astype(jnp.bfloat16),
            b2.reshape(1, H8))


def init_params(key, channels, kernel_size, depth, n_symbols):
    H = channels // 2
    eps = 1e-5
    keys = jax.random.split(key, depth + 3)
    params = {}
    params["embedding"] = 0.1 * jax.random.normal(
        keys[0], (n_symbols, channels), jnp.float32)

    conv_w, conv_shift = [], []
    for d in range(depth):
        kk = jax.random.split(keys[1 + d], 6)
        # PyTorch Conv1d weight layout: (C_out, C_in, K)
        w_pt = 0.1 * jax.random.normal(kk[0], (channels, channels, kernel_size),
                                       jnp.float32)
        b_conv = 0.1 * jax.random.normal(kk[1], (channels,), jnp.float32)
        gamma = 1.0 + 0.1 * jax.random.normal(kk[2], (channels,), jnp.float32)
        beta = 0.1 * jax.random.normal(kk[3], (channels,), jnp.float32)
        rmean = 0.1 * jax.random.normal(kk[4], (channels,), jnp.float32)
        rvar = jnp.abs(1.0 + 0.1 * jax.random.normal(kk[5], (channels,),
                                                     jnp.float32))
        s = gamma / jnp.sqrt(rvar + eps)                    # (C_out,)
        w_fold = w_pt * s[:, None, None]                    # BN scale folded
        conv_w.append(jnp.transpose(w_fold, (2, 1, 0)))     # (K, C_in, C_out)
        conv_shift.append(((b_conv - rmean) * s + beta).reshape(1, channels))
    params["conv_w"] = jnp.stack(conv_w).astype(jnp.bfloat16)   # (depth,K,C,C)
    params["conv_shift"] = jnp.stack(conv_shift)                # (depth,1,C)

    def lstm_dir(k):
        kk = jax.random.split(k, 4)
        w_ih = 0.1 * jax.random.normal(kk[0], (4 * H, channels), jnp.float32)
        w_hh = 0.1 * jax.random.normal(kk[1], (4 * H, H), jnp.float32)
        b_ih = 0.1 * jax.random.normal(kk[2], (4 * H,), jnp.float32)
        b_hh = 0.1 * jax.random.normal(kk[3], (4 * H,), jnp.float32)
        return w_ih, w_hh, b_ih + b_hh

    wihf, whhf, bf = lstm_dir(keys[1 + depth])
    wihb, whhb, bb = lstm_dir(keys[2 + depth])
    wih2, whh2, b2 = _pack_lstm(wihf, whhf, bf, wihb, whhb, bb, channels, H)
    params["lstm_wih2"] = wih2                                  # (2C, 8H)
    params["lstm_whh2"] = whh2                                  # (2H, 8H)
    params["lstm_b2"] = b2                                      # (1, 8H)
    return params


if __name__ == "__main__":
    # Small shapes consistent with the module.
    B, T = 2, 16
    channels = 32
    kernel_size = 5
    depth = 2
    dropout_rate = 0.1     # identity in eval mode
    n_symbols = 40
    H = channels // 2

    key = jax.random.PRNGKey(0)
    kp, kt = jax.random.split(key)
    params = init_params(kp, channels, kernel_size, depth, n_symbols)

    tokens = jax.random.randint(kt, (B, T), 0, n_symbols, dtype=jnp.int32)
    lengths = jnp.array([16, 11], dtype=jnp.int32)   # max(lengths) == T

    out = text_encoder_forward(tokens, lengths, params, kernel_size)
    out = jax.block_until_ready(out)

    assert out.shape == (B, T, 2 * H), out.shape
    # packed-sequence semantics: positions past the sequence length are zero.
    assert bool(jnp.all(out[1, int(lengths[1]):, :] == 0.0))
    assert bool(jnp.all(jnp.isfinite(out)))
    print("KERNEL_OK")
</pallas_src>

<mosaic_0001>
module attributes {stable_mosaic.version = 11 : i64} {
  func.func @_encoder_kernel(%arg0: memref<32x32xf32, #tpu.memory_space<vmem>>, %arg1: memref<2x1xi32, #tpu.memory_space<vmem>>, %arg2: memref<2x5x32x32xbf16, #tpu.memory_space<vmem>>, %arg3: memref<2x1x32xf32, #tpu.memory_space<vmem>>, %arg4: memref<64x128xbf16, #tpu.memory_space<vmem>>, %arg5: memref<1x128xf32, #tpu.memory_space<vmem>>, %arg6: memref<32x128xbf16, #tpu.memory_space<vmem>>, %arg7: memref<32x32xf32, #tpu.memory_space<vmem>>, %arg8: memref<40x32xf32, #tpu.memory_space<vmem>>, %arg9: memref<32x64xf32, #tpu.memory_space<vmem>>, %arg10: memref<32x128xf32, #tpu.memory_space<vmem>>) attributes {dimension_semantics = [], scalar_prefetch = 0 : i64, scratch_operands = 3 : i64, tpu.core_type = #tpu.core_type<tc>} {
    %cst = arith.constant 0.000000e+00 : f32
    %0 = vector.broadcast %cst : f32 to vector<4x32xf32>
    %c0 = arith.constant 0 : index
    %c0_0 = arith.constant 0 : index
    %1 = vector.load %arg8[%c0, %c0_0] : memref<40x32xf32, #tpu.memory_space<vmem>>, vector<4x32xf32>
    tpu.vector_store %arg8[%c0, %c0_0], %0 {strides = array<i32>} : memref<40x32xf32, #tpu.memory_space<vmem>>, vector<4x32xf32>,
    %cst_1 = arith.constant 0.000000e+00 : f32
    %2 = vector.broadcast %cst_1 : f32 to vector<4x32xf32>
    %c36 = arith.constant 36 : index
    %c0_2 = arith.constant 0 : index
    %3 = vector.load %arg8[%c36, %c0_2] : memref<40x32xf32, #tpu.memory_space<vmem>>, vector<4x32xf32>
    tpu.vector_store %arg8[%c36, %c0_2], %2 {strides = array<i32>} : memref<40x32xf32, #tpu.memory_space<vmem>>, vector<4x32xf32>,
    %c0_3 = arith.constant 0 : index
    %c0_4 = arith.constant 0 : index
    %4 = vector.load %arg0[%c0_3, %c0_4] : memref<32x32xf32, #tpu.memory_space<vmem>>, vector<32x32xf32>
    %c4 = arith.constant 4 : index
    %c0_5 = arith.constant 0 : index
    %5 = vector.load %arg8[%c4, %c0_5] : memref<40x32xf32, #tpu.memory_space<vmem>>, vector<32x32xf32>
    tpu.vector_store %arg8[%c4, %c0_5], %4 {strides = array<i32>} : memref<40x32xf32, #tpu.memory_space<vmem>>, vector<32x32xf32>,
    %cst_6 = arith.constant 0.000000e+00 : f32
    %6 = vector.broadcast %cst_6 : f32 to vector<32x32xf32>
    %c0_7 = arith.constant 0 : index
    %c0_8 = arith.constant 0 : index
    %7 = vector.load %arg8[%c0_7, %c0_8] : memref<40x32xf32, #tpu.memory_space<vmem>>, vector<32x32xf32>
    %8 = arith.truncf %7 : vector<32x32xf32> to vector<32x32xbf16>
    %c0_9 = arith.constant 0 : index
    %c0_10 = arith.constant 0 : index
    %c0_11 = arith.constant 0 : index
    %c0_12 = arith.constant 0 : index
    %9 = vector.load %arg2[%c0_9, %c0_10, %c0_11, %c0_12] : memref<2x5x32x32xbf16, #tpu.memory_space<vmem>>, vector<1x1x32x32xbf16>
    %10 = vector.shape_cast %9 : vector<1x1x32x32xbf16> to vector<32x32xbf16>
    %cst_13 = arith.constant dense<0.000000e+00> : vector<32x32xf32>
    %11 = tpu.matmul %8, %10, %cst_13 {dimension_numbers = #tpu.dot_dimension_numbers<[1], [0], [0], [1], [0, 0, 1, 1], [], []>} : vector<32x32xbf16>, vector<32x32xbf16>, vector<32x32xf32> -> vector<32x32xf32>
    %12 = arith.addf %6, %11 : vector<32x32xf32>
    %c2 = arith.constant 2 : index
    %c0_14 = arith.constant 0 : index
    %13 = vector.load %arg8[%c2, %c0_14] : memref<40x32xf32, #tpu.memory_space<vmem>>, vector<32x32xf32>
    %14 = arith.truncf %13 : vector<32x32xf32> to vector<32x32xbf16>
    %c0_15 = arith.constant 0 : index
    %c1 = arith.constant 1 : index
    %c0_16 = arith.constant 0 : index
    %c0_17 = arith.constant 0 : index
    %15 = vector.load %arg2[%c0_15, %c1, %c0_16, %c0_17] : memref<2x5x32x32xbf16, #tpu.memory_space<vmem>>, vector<1x1x32x32xbf16>
    %16 = vector.shape_cast %15 : vector<1x1x32x32xbf16> to vector<32x32xbf16>
    %cst_18 = arith.constant dense<0.000000e+00> : vector<32x32xf32>
    %17 = tpu.matmul %14, %16, %cst_18 {dimension_numbers = #tpu.dot_dimension_numbers<[1], [0], [0], [1], [0, 0, 1, 1], [], []>} : vector<32x32xbf16>, vector<32x32xbf16>, vector<32x32xf32> -> vector<32x32xf32>
    %18 = arith.addf %12, %17 : vector<32x32xf32>
    %c4_19 = arith.constant 4 : index
    %c0_20 = arith.constant 0 : index
    %19 = vector.load %arg8[%c4_19, %c0_20] : memref<40x32xf32, #tpu.memory_space<vmem>>, vector<32x32xf32>
    %20 = arith.truncf %19 : vector<32x32xf32> to vector<32x32xbf16>
    %c0_21 = arith.constant 0 : index
    %c2_22 = arith.constant 2 : index
    %c0_23 = arith.constant 0 : index
    %c0_24 = arith.constant 0 : index
    %21 = vector.load %arg2[%c0_21, %c2_22, %c0_23, %c0_24] : memref<2x5x32x32xbf16, #tpu.memory_space<vmem>>, vector<1x1x32x32xbf16>
    %22 = vector.shape_cast %21 : vector<1x1x32x32xbf16> to vector<32x32xbf16>
    %cst_25 = arith.constant dense<0.000000e+00> : vector<32x32xf32>
    %23 = tpu.matmul %20, %22, %cst_25 {dimension_numbers = #tpu.dot_dimension_numbers<[1], [0], [0], [1], [0, 0, 1, 1], [], []>} : vector<32x32xbf16>, vector<32x32xbf16>, vector<32x32xf32> -> vector<32x32xf32>
    %24 = arith.addf %18, %23 : vector<32x32xf32>
    %c6 = arith.constant 6 : index
    %c0_26 = arith.constant 0 : index
    %25 = vector.load %arg8[%c6, %c0_26] : memref<40x32xf32, #tpu.memory_space<vmem>>, vector<32x32xf32>
    %26 = arith.truncf %25 : vector<32x32xf32> to vector<32x32xbf16>
    %c0_27 = arith.constant 0 : index
    %c3 = arith.constant 3 : index
    %c0_28 = arith.constant 0 : index
    %c0_29 = arith.constant 0 : index
    %27 = vector.load %arg2[%c0_27, %c3, %c0_28, %c0_29] : memref<2x5x32x32xbf16, #tpu.memory_space<vmem>>, vector<1x1x32x32xbf16>
    %28 = vector.shape_cast %27 : vector<1x1x32x32xbf16> to vector<32x32xbf16>
    %cst_30 = arith.constant dense<0.000000e+00> : vector<32x32xf32>
    %29 = tpu.matmul %26, %28, %cst_30 {dimension_numbers = #tpu.dot_dimension_numbers<[1], [0], [0], [1], [0, 0, 1, 1], [], []>} : vector<32x32xbf16>, vector<32x32xbf16>, vector<32x32xf32> -> vector<32x32xf32>
    %30 = arith.addf %24, %29 : vector<32x32xf32>
    %c8 = arith.constant 8 : index
    %c0_31 = arith.constant 0 : index
    %31 = vector.load %arg8[%c8, %c0_31] : memref<40x32xf32, #tpu.memory_space<vmem>>, vector<32x32xf32>
    %32 = arith.truncf %31 : vector<32x32xf32> to vector<32x32xbf16>
    %c0_32 = arith.constant 0 : index
    %c4_33 = arith.constant 4 : index
    %c0_34 = arith.constant 0 : index
    %c0_35 = arith.constant 0 : index
    %33 = vector.load %arg2[%c0_32, %c4_33, %c0_34, %c0_35] : memref<2x5x32x32xbf16, #tpu.memory_space<vmem>>, vector<1x1x32x32xbf16>
    %34 = vector.shape_cast %33 : vector<1x1x32x32xbf16> to vector<32x32xbf16>
    %cst_36 = arith.constant dense<0.000000e+00> : vector<32x32xf32>
    %35 = tpu.matmul %32, %34, %cst_36 {dimension_numbers = #tpu.dot_dimension_numbers<[1], [0], [0], [1], [0, 0, 1, 1], [], []>} : vector<32x32xbf16>, vector<32x32xbf16>, vector<32x32xf32> -> vector<32x32xf32>
    %36 = arith.addf %30, %35 : vector<32x32xf32>
    %c0_37 = arith.constant 0 : index
    %c0_38 = arith.constant 0 : index
    %c0_39 = arith.constant 0 : index
    %37 = vector.load %arg3[%c0_37, %c0_38, %c0_39] : memref<2x1x32xf32, #tpu.memory_space<vmem>>, vector<1x1x32xf32>
    %38 = vector.shape_cast %37 : vector<1x1x32xf32> to vector<1x32xf32>
    %39 = vector.broadcast %38 : vector<1x32xf32> to vector<32x32xf32>
    %40 = arith.addf %36, %39 : vector<32x32xf32>
    %cst_40 = arith.constant 0.000000e+00 : f32
    %41 = vector.broadcast %cst_40 : f32 to vector<32x32xf32>
    %42 = arith.maximumf %40, %41 : vector<32x32xf32>
    %c4_41 = arith.constant 4 : index
    %c0_42 = arith.constant 0 : index
    %43 = vector.load %arg8[%c4_41, %c0_42] : memref<40x32xf32, #tpu.memory_space<vmem>>, vector<32x32xf32>
    tpu.vector_store %arg8[%c4_41, %c0_42], %42 {strides = array<i32>} : memref<40x32xf32, #tpu.memory_space<vmem>>, vector<32x32xf32>,
    %cst_43 = arith.constant 0.000000e+00 : f32
    %44 = vector.broadcast %cst_43 : f32 to vector<32x32xf32>
    %c0_44 = arith.constant 0 : index
    %c0_45 = arith.constant 0 : index
    %45 = vector.load %arg8[%c0_44, %c0_45] : memref<40x32xf32, #tpu.memory_space<vmem>>, vector<32x32xf32>
    %46 = arith.truncf %45 : vector<32x32xf32> to vector<32x32xbf16>
    %c1_46 = arith.constant 1 : index
    %c0_47 = arith.constant 0 : index
    %c0_48 = arith.constant 0 : index
    %c0_49 = arith.constant 0 : index
    %47 = vector.load %arg2[%c1_46, %c0_47, %c0_48, %c0_49] : memref<2x5x32x32xbf16, #tpu.memory_space<vmem>>, vector<1x1x32x32xbf16>
    %48 = vector.shape_cast %47 : vector<1x1x32x32xbf16> to vector<32x32xbf16>
    %cst_50 = arith.constant dense<0.000000e+00> : vector<32x32xf32>
    %49 = tpu.matmul %46, %48, %cst_50 {dimension_numbers = #tpu.dot_dimension_numbers<[1], [0], [0], [1], [0, 0, 1, 1], [], []>} : vector<32x32xbf16>, vector<32x32xbf16>, vector<32x32xf32> -> vector<32x32xf32>
    %50 = arith.addf %44, %49 : vector<32x32xf32>
    %c2_51 = arith.constant 2 : index
    %c0_52 = arith.constant 0 : index
    %51 = vector.load %arg8[%c2_51, %c0_52] : memref<40x32xf32, #tpu.memory_space<vmem>>, vector<32x32xf32>
    %52 = arith.truncf %51 : vector<32x32xf32> to vector<32x32xbf16>
    %c1_53 = arith.constant 1 : index
    %c1_54 = arith.constant 1 : index
    %c0_55 = arith.constant 0 : index
    %c0_56 = arith.constant 0 : index
    %53 = vector.load %arg2[%c1_53, %c1_54, %c0_55, %c0_56] : memref<2x5x32x32xbf16, #tpu.memory_space<vmem>>, vector<1x1x32x32xbf16>
    %54 = vector.shape_cast %53 : vector<1x1x32x32xbf16> to vector<32x32xbf16>
    %cst_57 = arith.constant dense<0.000000e+00> : vector<32x32xf32>
    %55 = tpu.matmul %52, %54, %cst_57 {dimension_numbers = #tpu.dot_dimension_numbers<[1], [0], [0], [1], [0, 0, 1, 1], [], []>} : vector<32x32xbf16>, vector<32x32xbf16>, vector<32x32xf32> -> vector<32x32xf32>
    %56 = arith.addf %50, %55 : vector<32x32xf32>
    %c4_58 = arith.constant 4 : index
    %c0_59 = arith.constant 0 : index
    %57 = vector.load %arg8[%c4_58, %c0_59] : memref<40x32xf32, #tpu.memory_space<vmem>>, vector<32x32xf32>
    %58 = arith.truncf %57 : vector<32x32xf32> to vector<32x32xbf16>
    %c1_60 = arith.constant 1 : index
    %c2_61 = arith.constant 2 : index
    %c0_62 = arith.constant 0 : index
    %c0_63 = arith.constant 0 : index
    %59 = vector.load %arg2[%c1_60, %c2_61, %c0_62, %c0_63] : memref<2x5x32x32xbf16, #tpu.memory_space<vmem>>, vector<1x1x32x32xbf16>
    %60 = vector.shape_cast %59 : vector<1x1x32x32xbf16> to vector<32x32xbf16>
    %cst_64 = arith.constant dense<0.000000e+00> : vector<32x32xf32>
    %61 = tpu.matmul %58, %60, %cst_64 {dimension_numbers = #tpu.dot_dimension_numbers<[1], [0], [0], [1], [0, 0, 1, 1], [], []>} : vector<32x32xbf16>, vector<32x32xbf16>, vector<32x32xf32> -> vector<32x32xf32>
    %62 = arith.addf %56, %61 : vector<32x32xf32>
    %c6_65 = arith.constant 6 : index
    %c0_66 = arith.constant 0 : index
    %63 = vector.load %arg8[%c6_65, %c0_66] : memref<40x32xf32, #tpu.memory_space<vmem>>, vector<32x32xf32>
    %64 = arith.truncf %63 : vector<32x32xf32> to vector<32x32xbf16>
    %c1_67 = arith.constant 1 : index
    %c3_68 = arith.constant 3 : index
    %c0_69 = arith.constant 0 : index
    %c0_70 = arith.constant 0 : index
    %65 = vector.load %arg2[%c1_67, %c3_68, %c0_69, %c0_70] : memref<2x5x32x32xbf16, #tpu.memory_space<vmem>>, vector<1x1x32x32xbf16>
    %66 = vector.shape_cast %65 : vector<1x1x32x32xbf16> to vector<32x32xbf16>
    %cst_71 = arith.constant dense<0.000000e+00> : vector<32x32xf32>
    %67 = tpu.matmul %64, %66, %cst_71 {dimension_numbers = #tpu.dot_dimension_numbers<[1], [0], [0], [1], [0, 0, 1, 1], [], []>} : vector<32x32xbf16>, vector<32x32xbf16>, vector<32x32xf32> -> vector<32x32xf32>
    %68 = arith.addf %62, %67 : vector<32x32xf32>
    %c8_72 = arith.constant 8 : index
    %c0_73 = arith.constant 0 : index
    %69 = vector.load %arg8[%c8_72, %c0_73] : memref<40x32xf32, #tpu.memory_space<vmem>>, vector<32x32xf32>
    %70 = arith.truncf %69 : vector<32x32xf32> to vector<32x32xbf16>
    %c1_74 = arith.constant 1 : index
    %c4_75 = arith.constant 4 : index
    %c0_76 = arith.constant 0 : index
    %c0_77 = arith.constant 0 : index
    %71 = vector.load %arg2[%c1_74, %c4_75, %c0_76, %c0_77] : memref<2x5x32x32xbf16, #tpu.memory_space<vmem>>, vector<1x1x32x32xbf16>
    %72 = vector.shape_cast %71 : vector<1x1x32x32xbf16> to vector<32x32xbf16>
    %cst_78 = arith.constant dense<0.000000e+00> : vector<32x32xf32>
    %73 = tpu.matmul %70, %72, %cst_78 {dimension_numbers = #tpu.dot_dimension_numbers<[1], [0], [0], [1], [0, 0, 1, 1], [], []>} : vector<32x32xbf16>, vector<32x32xbf16>, vector<32x32xf32> -> vector<32x32xf32>
    %74 = arith.addf %68, %73 : vector<32x32xf32>
    %c1_79 = arith.constant 1 : index
    %c0_80 = arith.constant 0 : index
    %c0_81 = arith.constant 0 : index
    %75 = vector.load %arg3[%c1_79, %c0_80, %c0_81] : memref<2x1x32xf32, #tpu.memory_space<vmem>>, vector<1x1x32xf32>
    %76 = vector.shape_cast %75 : vector<1x1x32xf32> to vector<1x32xf32>
    %77 = vector.broadcast %76 : vector<1x32xf32> to vector<32x32xf32>
    %78 = arith.addf %74, %77 : vector<32x32xf32>
    %cst_82 = arith.constant 0.000000e+00 : f32
    %79 = vector.broadcast %cst_82 : f32 to vector<32x32xf32>
    %80 = arith.maximumf %78, %79 : vector<32x32xf32>
    %c0_83 = arith.constant 0 : index
    %c0_84 = arith.constant 0 : index
    %81 = vector.load %arg9[%c0_83, %c0_84] : memref<32x64xf32, #tpu.memory_space<vmem>>, vector<32x32xf32>
    tpu.vector_store %arg9[%c0_83, %c0_84], %80 {strides = array<i32>} : memref<32x64xf32, #tpu.memory_space<vmem>>, vector<32x32xf32>,
    %82 = vector.extract_strided_slice %80 {offsets = [30, 0], sizes = [2, 32], strides = [1, 1]} : vector<32x32xf32> to vector<2x32xf32>
    %c0_85 = arith.constant 0 : index
    %c32 = arith.constant 32 : index
    %83 = vector.load %arg9[%c0_85, %c32] : memref<32x64xf32, #tpu.memory_space<vmem>>, vector<2x32xf32>
    tpu.vector_store %arg9[%c0_85, %c32], %82 {strides = array<i32>} : memref<32x64xf32, #tpu.memory_space<vmem>>, vector<2x32xf32>,
    %84 = vector.extract_strided_slice %80 {offsets = [28, 0], sizes = [2, 32], strides = [1, 1]} : vector<32x32xf32> to vector<2x32xf32>
    %c2_86 = arith.constant 2 : index
    %c32_87 = arith.constant 32 : index
    %85 = vector.load %arg9[%c2_86, %c32_87] : memref<32x64xf32, #tpu.memory_space<vmem>>, vector<2x32xf32>
    tpu.vector_store %arg9[%c2_86, %c32_87], %84 {strides = array<i32>} : memref<32x64xf32, #tpu.memory_space<vmem>>, vector<2x32xf32>,
    %86 = vector.extract_strided_slice %80 {offsets = [26, 0], sizes = [2, 32], strides = [1, 1]} : vector<32x32xf32> to vector<2x32xf32>
    %c4_88 = arith.constant 4 : index
    %c32_89 = arith.constant 32 : index
    %87 = vector.load %arg9[%c4_88, %c32_89] : memref<32x64xf32, #tpu.memory_space<vmem>>, vector<2x32xf32>
    tpu.vector_store %arg9[%c4_88, %c32_89], %86 {strides = array<i32>} : memref<32x64xf32, #tpu.memory_space<vmem>>, vector<2x32xf32>,
    %88 = vector.extract_strided_slice %80 {offsets = [24, 0], sizes = [2, 32], strides = [1, 1]} : vector<32x32xf32> to vector<2x32xf32>
    %c6_90 = arith.constant 6 : index
    %c32_91 = arith.constant 32 : index
    %89 = vector.load %arg9[%c6_90, %c32_91] : memref<32x64xf32, #tpu.memory_space<vmem>>, vector<2x32xf32>
    tpu.vector_store %arg9[%c6_90, %c32_91], %88 {strides = array<i32>} : memref<32x64xf32, #tpu.memory_space<vmem>>, vector<2x32xf32>,
    %90 = vector.extract_strided_slice %80 {offsets = [22, 0], sizes = [2, 32], strides = [1, 1]} : vector<32x32xf32> to vector<2x32xf32>
    %c8_92 = arith.constant 8 : index
    %c32_93 = arith.constant 32 : index
    %91 = vector.load %arg9[%c8_92, %c32_93] : memref<32x64xf32, #tpu.memory_space<vmem>>, vector<2x32xf32>
    tpu.vector_store %arg9[%c8_92, %c32_93], %90 {strides = array<i32>} : memref<32x64xf32, #tpu.memory_space<vmem>>, vector<2x32xf32>,
    %92 = vector.extract_strided_slice %80 {offsets = [20, 0], sizes = [2, 32], strides = [1, 1]} : vector<32x32xf32> to vector<2x32xf32>
    %c10 = arith.constant 10 : index
    %c32_94 = arith.constant 32 : index
    %93 = vector.load %arg9[%c10, %c32_94] : memref<32x64xf32, #tpu.memory_space<vmem>>, vector<2x32xf32>
    tpu.vector_store %arg9[%c10, %c32_94], %92 {strides = array<i32>} : memref<32x64xf32, #tpu.memory_space<vmem>>, vector<2x32xf32>,
    %94 = vector.extract_strided_slice %80 {offsets = [18, 0], sizes = [2, 32], strides = [1, 1]} : vector<32x32xf32> to vector<2x32xf32>
    %c12 = arith.constant 12 : index
    %c32_95 = arith.constant 32 : index
    %95 = vector.load %arg9[%c12, %c32_95] : memref<32x64xf32, #tpu.memory_space<vmem>>, vector<2x32xf32>
    tpu.vector_store %arg9[%c12, %c32_95], %94 {strides = array<i32>} : memref<32x64xf32, #tpu.memory_space<vmem>>, vector<2x32xf32>,
    %96 = vector.extract_strided_slice %80 {offsets = [16, 0], sizes = [2, 32], strides = [1, 1]} : vector<32x32xf32> to vector<2x32xf32>
    %c14 = arith.constant 14 : index
    %c32_96 = arith.constant 32 : index
    %97 = vector.load %arg9[%c14, %c32_96] : memref<32x64xf32, #tpu.memory_space<vmem>>, vector<2x32xf32>
    tpu.vector_store %arg9[%c14, %c32_96], %96 {strides = array<i32>} : memref<32x64xf32, #tpu.memory_space<vmem>>, vector<2x32xf32>,
    %98 = vector.extract_strided_slice %80 {offsets = [14, 0], sizes = [2, 32], strides = [1, 1]} : vector<32x32xf32> to vector<2x32xf32>
    %c16 = arith.constant 16 : index
    %c32_97 = arith.constant 32 : index
    %99 = vector.load %arg9[%c16, %c32_97] : memref<32x64xf32, #tpu.memory_space<vmem>>, vector<2x32xf32>
    tpu.vector_store %arg9[%c16, %c32_97], %98 {strides = array<i32>} : memref<32x64xf32, #tpu.memory_space<vmem>>, vector<2x32xf32>,
    %100 = vector.extract_strided_slice %80 {offsets = [12, 0], sizes = [2, 32], strides = [1, 1]} : vector<32x32xf32> to vector<2x32xf32>
    %c18 = arith.constant 18 : index
    %c32_98 = arith.constant 32 : index
    %101 = vector.load %arg9[%c18, %c32_98] : memref<32x64xf32, #tpu.memory_space<vmem>>, vector<2x32xf32>
    tpu.vector_store %arg9[%c18, %c32_98], %100 {strides = array<i32>} : memref<32x64xf32, #tpu.memory_space<vmem>>, vector<2x32xf32>,
    %102 = vector.extract_strided_slice %80 {offsets = [10, 0], sizes = [2, 32], strides = [1, 1]} : vector<32x32xf32> to vector<2x32xf32>
    %c20 = arith.constant 20 : index
    %c32_99 = arith.constant 32 : index
    %103 = vector.load %arg9[%c20, %c32_99] : memref<32x64xf32, #tpu.memory_space<vmem>>, vector<2x32xf32>
    tpu.vector_store %arg9[%c20, %c32_99], %102 {strides = array<i32>} : memref<32x64xf32, #tpu.memory_space<vmem>>, vector<2x32xf32>,
    %104 = vector.extract_strided_slice %80 {offsets = [8, 0], sizes = [2, 32], strides = [1, 1]} : vector<32x32xf32> to vector<2x32xf32>
    %c22 = arith.constant 22 : index
    %c32_100 = arith.constant 32 : index
    %105 = vector.load %arg9[%c22, %c32_100] : memref<32x64xf32, #tpu.memory_space<vmem>>, vector<2x32xf32>
    tpu.vector_store %arg9[%c22, %c32_100], %104 {strides = array<i32>} : memref<32x64xf32, #tpu.memory_space<vmem>>, vector<2x32xf32>,
    %106 = vector.extract_strided_slice %80 {offsets = [6, 0], sizes = [2, 32], strides = [1, 1]} : vector<32x32xf32> to vector<2x32xf32>
    %c24 = arith.constant 24 : index
    %c32_101 = arith.constant 32 : index
    %107 = vector.load %arg9[%c24, %c32_101] : memref<32x64xf32, #tpu.memory_space<vmem>>, vector<2x32xf32>
    tpu.vector_store %arg9[%c24, %c32_101], %106 {strides = array<i32>} : memref<32x64xf32, #tpu.memory_space<vmem>>, vector<2x32xf32>,
    %108 = vector.extract_strided_slice %80 {offsets = [4, 0], sizes = [2, 32], strides = [1, 1]} : vector<32x32xf32> to vector<2x32xf32>
    %c26 = arith.constant 26 : index
    %c32_102 = arith.constant 32 : index
    %109 = vector.load %arg9[%c26, %c32_102] : memref<32x64xf32, #tpu.memory_space<vmem>>, vector<2x32xf32>
    tpu.vector_store %arg9[%c26, %c32_102], %108 {strides = array<i32>} : memref<32x64xf32, #tpu.memory_space<vmem>>, vector<2x32xf32>,
    %110 = vector.extract_strided_slice %80 {offsets = [2, 0], sizes = [2, 32], strides = [1, 1]} : vector<32x32xf32> to vector<2x32xf32>
    %c28 = arith.constant 28 : index
    %c32_103 = arith.constant 32 : index
    %111 = vector.load %arg9[%c28, %c32_103] : memref<32x64xf32, #tpu.memory_space<vmem>>, vector<2x32xf32>
    tpu.vector_store %arg9[%c28, %c32_103], %110 {strides = array<i32>} : memref<32x64xf32, #tpu.memory_space<vmem>>, vector<2x32xf32>,
    %112 = vector.extract_strided_slice %80 {offsets = [0, 0], sizes = [2, 32], strides = [1, 1]} : vector<32x32xf32> to vector<2x32xf32>
    %c30 = arith.constant 30 : index
    %c32_104 = arith.constant 32 : index
    %113 = vector.load %arg9[%c30, %c32_104] : memref<32x64xf32, #tpu.memory_space<vmem>>, vector<2x32xf32>
    tpu.vector_store %arg9[%c30, %c32_104], %112 {strides = array<i32>} : memref<32x64xf32, #tpu.memory_space<vmem>>, vector<2x32xf32>,
    %c0_105 = arith.constant 0 : index
    %c0_106 = arith.constant 0 : index
    %114 = vector.load %arg9[%c0_105, %c0_106] : memref<32x64xf32, #tpu.memory_space<vmem>>, vector<32x64xf32>
    %115 = arith.truncf %114 : vector<32x64xf32> to vector<32x64xbf16>
    %c0_107 = arith.constant 0 : index
    %c0_108 = arith.constant 0 : index
    %116 = vector.load %arg4[%c0_107, %c0_108] : memref<64x128xbf16, #tpu.memory_space<vmem>>, vector<64x128xbf16>
    %cst_109 = arith.constant dense<0.000000e+00> : vector<32x128xf32>
    %117 = tpu.matmul %115, %116, %cst_109 {dimension_numbers = #tpu.dot_dimension_numbers<[1], [0], [0], [1], [0, 0, 1, 1], [], []>} : vector<32x64xbf16>, vector<64x128xbf16>, vector<32x128xf32> -> vector<32x128xf32>
    %c0_110 = arith.constant 0 : index
    %c0_111 = arith.constant 0 : index
    %118 = vector.load %arg5[%c0_110, %c0_111] : memref<1x128xf32, #tpu.memory_space<vmem>>, vector<1x128xf32>
    %119 = vector.broadcast %118 : vector<1x128xf32> to vector<32x128xf32>
    %120 = arith.addf %117, %119 : vector<32x128xf32>
    %c0_112 = arith.constant 0 : index
    %c0_113 = arith.constant 0 : index
    %121 = vector.load %arg10[%c0_112, %c0_113] : memref<32x128xf32, #tpu.memory_space<vmem>>, vector<32x128xf32>
    tpu.vector_store %arg10[%c0_112, %c0_113], %120 {strides = array<i32>} : memref<32x128xf32, #tpu.memory_space<vmem>>, vector<32x128xf32>,
    %c0_114 = arith.constant 0 : index
    %c0_115 = arith.constant 0 : index
    %122 = vector.load %arg1[%c0_114, %c0_115] : memref<2x1xi32, #tpu.memory_space<vmem>>, vector<2x1xi32>
    %c0_116 = arith.constant 0 : index
    %c0_117 = arith.constant 0 : index
    %123 = vector.load %arg6[%c0_116, %c0_117] : memref<32x128xbf16, #tpu.memory_space<vmem>>, vector<32x128xbf16>
    %124 = tpu.iota {dimensions = array<i32: 1>} : vector<1x32xi32>
    %c16_i32 = arith.constant 16 : i32
    %125 = vector.broadcast %c16_i32 : i32 to vector<1x32xi32>
    %126 = arith.cmpi slt, %124, %125 : vector<1x32xi32>
    %cst_118 = arith.constant 0.000000e+00 : f32
    %127 = vector.broadcast %cst_118 : f32 to vector<2x32xf32>
    %cst_119 = arith.constant 0.000000e+00 : f32
    %128 = vector.broadcast %cst_119 : f32 to vector<2x32xf32>
    %c0_120 = arith.constant 0 : index
    %c0_121 = arith.constant 0 : index
    %129 = vector.load %arg10[%c0_120, %c0_121] : memref<32x128xf32, #tpu.memory_space<vmem>>, vector<2x128xf32>
    %130 = arith.truncf %127 : vector<2x32xf32> to vector<2x32xbf16>
    %cst_122 = arith.constant dense<0.000000e+00> : vector<2x128xf32>
    %131 = tpu.matmul %130, %123, %cst_122 {dimension_numbers = #tpu.dot_dimension_numbers<[1], [0], [0], [1], [0, 0, 1, 1], [], []>} : vector<2x32xbf16>, vector<32x128xbf16>, vector<2x128xf32> -> vector<2x128xf32>
    %132 = arith.addf %129, %131 : vector<2x128xf32>
    %133 = vector.extract_strided_slice %132 {offsets = [0, 0], sizes = [2, 96], strides = [1, 1]} : vector<2x128xf32> to vector<2x96xf32>
    %134 = arith.negf %133 : vector<2x96xf32>
    %135 = math.exp %134 : vector<2x96xf32>
    %cst_123 = arith.constant 1.000000e+00 : f32
    %136 = vector.broadcast %cst_123 : f32 to vector<2x96xf32>
    %137 = arith.addf %136, %135 : vector<2x96xf32>
    %138 = arith.divf %136, %137 : vector<2x96xf32>
    %139 = vector.extract_strided_slice %132 {offsets = [0, 96], sizes = [2, 32], strides = [1, 1]} : vector<2x128xf32> to vector<2x32xf32>
    %140 = math.tanh %139 : vector<2x32xf32>
    %141 = vector.extract_strided_slice %138 {offsets = [0, 0], sizes = [2, 32], strides = [1, 1]} : vector<2x96xf32> to vector<2x32xf32>
    %142 = vector.extract_strided_slice %138 {offsets = [0, 32], sizes = [2, 32], strides = [1, 1]} : vector<2x96xf32> to vector<2x32xf32>
    %143 = vector.extract_strided_slice %138 {offsets = [0, 64], sizes = [2, 32], strides = [1, 1]} : vector<2x96xf32> to vector<2x32xf32>
    %144 = arith.mulf %142, %128 : vector<2x32xf32>
    %145 = arith.mulf %141, %140 : vector<2x32xf32>
    %146 = arith.addf %144, %145 : vector<2x32xf32>
    %147 = math.tanh %146 : vector<2x32xf32>
    %148 = arith.mulf %143, %147 : vector<2x32xf32>
    %c0_i32 = arith.constant 0 : i32
    %c15_i32 = arith.constant 15 : i32
    %149 = vector.broadcast %c0_i32 : i32 to vector<1x32xi32>
    %150 = vector.broadcast %c15_i32 : i32 to vector<1x32xi32>
    %151 = arith.select %126, %149, %150 : vector<1x32xi1>, vector<1x32xi32>
    %152 = vector.broadcast %122 : vector<2x1xi32> to vector<2x32xi32>
    %153 = vector.broadcast %151 : vector<1x32xi32> to vector<2x32xi32>
    %154 = arith.cmpi sgt, %152, %153 : vector<2x32xi32>
    %155 = arith.select %154, %148, %127 : vector<2x32xi1>, vector<2x32xf32>
    %156 = arith.select %154, %146, %128 : vector<2x32xi1>, vector<2x32xf32>
    %cst_124 = arith.constant 0.000000e+00 : f32
    %157 = vector.broadcast %cst_124 : f32 to vector<2x32xf32>
    %158 = arith.select %154, %148, %157 : vector<2x32xi1>, vector<2x32xf32>
    %159 = vector.extract_strided_slice %158 {offsets = [0, 0], sizes = [2, 16], strides = [1, 1]} : vector<2x32xf32> to vector<2x16xf32>
    %c0_125 = arith.constant 0 : index
    %c0_126 = arith.constant 0 : index
    %160 = vector.load %arg7[%c0_125, %c0_126] : memref<32x32xf32, #tpu.memory_space<vmem>>, vector<2x16xf32>
    tpu.vector_store %arg7[%c0_125, %c0_126], %159 {strides = array<i32>} : memref<32x32xf32, #tpu.memory_space<vmem>>, vector<2x16xf32>,
    %161 = vector.extract_strided_slice %158 {offsets = [0, 16], sizes = [2, 16], strides = [1, 1]} : vector<2x32xf32> to vector<2x16xf32>
    %c30_127 = arith.constant 30 : index
    %c16_128 = arith.constant 16 : index
    %162 = vector.load %arg7[%c30_127, %c16_128] : memref<32x32xf32, #tpu.memory_space<vmem>>, vector<2x16xf32>
    tpu.vector_store %arg7[%c30_127, %c16_128], %161 {strides = array<i32>} : memref<32x32xf32, #tpu.memory_space<vmem>>, vector<2x16xf32>,
    %c2_129 = arith.constant 2 : index
    %c0_130 = arith.constant 0 : index
    %163 = vector.load %arg10[%c2_129, %c0_130] : memref<32x128xf32, #tpu.memory_space<vmem>>, vector<2x128xf32>
    %164 = arith.truncf %155 : vector<2x32xf32> to vector<2x32xbf16>
    %cst_131 = arith.constant dense<0.000000e+00> : vector<2x128xf32>
    %165 = tpu.matmul %164, %123, %cst_131 {dimension_numbers = #tpu.dot_dimension_numbers<[1], [0], [0], [1], [0, 0, 1, 1], [], []>} : vector<2x32xbf16>, vector<32x128xbf16>, vector<2x128xf32> -> vector<2x128xf32>
    %166 = arith.addf %163, %165 : vector<2x128xf32>
    %167 = vector.extract_strided_slice %166 {offsets = [0, 0], sizes = [2, 96], strides = [1, 1]} : vector<2x128xf32> to vector<2x96xf32>
    %168 = arith.negf %167 : vector<2x96xf32>
    %169 = math.exp %168 : vector<2x96xf32>
    %cst_132 = arith.constant 1.000000e+00 : f32
    %170 = vector.broadcast %cst_132 : f32 to vector<2x96xf32>
    %171 = arith.addf %170, %169 : vector<2x96xf32>
    %172 = arith.divf %170, %171 : vector<2x96xf32>
    %173 = vector.extract_strided_slice %166 {offsets = [0, 96], sizes = [2, 32], strides = [1, 1]} : vector<2x128xf32> to vector<2x32xf32>
    %174 = math.tanh %173 : vector<2x32xf32>
    %175 = vector.extract_strided_slice %172 {offsets = [0, 0], sizes = [2, 32], strides = [1, 1]} : vector<2x96xf32> to vector<2x32xf32>
    %176 = vector.extract_strided_slice %172 {offsets = [0, 32], sizes = [2, 32], strides = [1, 1]} : vector<2x96xf32> to vector<2x32xf32>
    %177 = vector.extract_strided_slice %172 {offsets = [0, 64], sizes = [2, 32], strides = [1, 1]} : vector<2x96xf32> to vector<2x32xf32>
    %178 = arith.mulf %176, %156 : vector<2x32xf32>
    %179 = arith.mulf %175, %174 : vector<2x32xf32>
    %180 = arith.addf %178, %179 : vector<2x32xf32>
    %181 = math.tanh %180 : vector<2x32xf32>
    %182 = arith.mulf %177, %181 : vector<2x32xf32>
    %c1_i32 = arith.constant 1 : i32
    %c14_i32 = arith.constant 14 : i32
    %183 = vector.broadcast %c1_i32 : i32 to vector<1x32xi32>
    %184 = vector.broadcast %c14_i32 : i32 to vector<1x32xi32>
    %185 = arith.select %126, %183, %184 : vector<1x32xi1>, vector<1x32xi32>
    %186 = vector.broadcast %122 : vector<2x1xi32> to vector<2x32xi32>
    %187 = vector.broadcast %185 : vector<1x32xi32> to vector<2x32xi32>
    %188 = arith.cmpi sgt, %186, %187 : vector<2x32xi32>
    %189 = arith.select %188, %182, %155 : vector<2x32xi1>, vector<2x32xf32>
    %190 = arith.select %188, %180, %156 : vector<2x32xi1>, vector<2x32xf32>
    %cst_133 = arith.constant 0.000000e+00 : f32
    %191 = vector.broadcast %cst_133 : f32 to vector<2x32xf32>
    %192 = arith.select %188, %182, %191 : vector<2x32xi1>, vector<2x32xf32>
    %193 = vector.extract_strided_slice %192 {offsets = [0, 0], sizes = [2, 16], strides = [1, 1]} : vector<2x32xf32> to vector<2x16xf32>
    %c2_134 = arith.constant 2 : index
    %c0_135 = arith.constant 0 : index
    %194 = vector.load %arg7[%c2_134, %c0_135] : memref<32x32xf32, #tpu.memory_space<vmem>>, vector<2x16xf32>
    tpu.vector_store %arg7[%c2_134, %c0_135], %193 {strides = array<i32>} : memref<32x32xf32, #tpu.memory_space<vmem>>, vector<2x16xf32>,
    %195 = vector.extract_strided_slice %192 {offsets = [0, 16], sizes = [2, 16], strides = [1, 1]} : vector<2x32xf32> to vector<2x16xf32>
    %c28_136 = arith.constant 28 : index
    %c16_137 = arith.constant 16 : index
    %196 = vector.load %arg7[%c28_136, %c16_137] : memref<32x32xf32, #tpu.memory_space<vmem>>, vector<2x16xf32>
    tpu.vector_store %arg7[%c28_136, %c16_137], %195 {strides = array<i32>} : memref<32x32xf32, #tpu.memory_space<vmem>>, vector<2x16xf32>,
    %c4_138 = arith.constant 4 : index
    %c0_139 = arith.constant 0 : index
    %197 = vector.load %arg10[%c4_138, %c0_139] : memref<32x128xf32, #tpu.memory_space<vmem>>, vector<2x128xf32>
    %198 = arith.truncf %189 : vector<2x32xf32> to vector<2x32xbf16>
    %cst_140 = arith.constant dense<0.000000e+00> : vector<2x128xf32>
    %199 = tpu.matmul %198, %123, %cst_140 {dimension_numbers = #tpu.dot_dimension_numbers<[1], [0], [0], [1], [0, 0, 1, 1], [], []>} : vector<2x32xbf16>, vector<32x128xbf16>, vector<2x128xf32> -> vector<2x128xf32>
    %200 = arith.addf %197, %199 : vector<2x128xf32>
    %201 = vector.extract_strided_slice %200 {offsets = [0, 0], sizes = [2, 96], strides = [1, 1]} : vector<2x128xf32> to vector<2x96xf32>
    %202 = arith.negf %201 : vector<2x96xf32>
    %203 = math.exp %202 : vector<2x96xf32>
    %cst_141 = arith.constant 1.000000e+00 : f32
    %204 = vector.broadcast %cst_141 : f32 to vector<2x96xf32>
    %205 = arith.addf %204, %203 : vector<2x96xf32>
    %206 = arith.divf %204, %205 : vector<2x96xf32>
    %207 = vector.extract_strided_slice %200 {offsets = [0, 96], sizes = [2, 32], strides = [1, 1]} : vector<2x128xf32> to vector<2x32xf32>
    %208 = math.tanh %207 : vector<2x32xf32>
    %209 = vector.extract_strided_slice %206 {offsets = [0, 0], sizes = [2, 32], strides = [1, 1]} : vector<2x96xf32> to vector<2x32xf32>
    %210 = vector.extract_strided_slice %206 {offsets = [0, 32], sizes = [2, 32], strides = [1, 1]} : vector<2x96xf32> to vector<2x32xf32>
    %211 = vector.extract_strided_slice %206 {offsets = [0, 64], sizes = [2, 32], strides = [1, 1]} : vector<2x96xf32> to vector<2x32xf32>
    %212 = arith.mulf %210, %190 : vector<2x32xf32>
    %213 = arith.mulf %209, %208 : vector<2x32xf32>
    %214 = arith.addf %212, %213 : vector<2x32xf32>
    %215 = math.tanh %214 : vector<2x32xf32>
    %216 = arith.mulf %211, %215 : vector<2x32xf32>
    %c2_i32 = arith.constant 2 : i32
    %c13_i32 = arith.constant 13 : i32
    %217 = vector.broadcast %c2_i32 : i32 to vector<1x32xi32>
    %218 = vector.broadcast %c13_i32 : i32 to vector<1x32xi32>
    %219 = arith.select %126, %217, %218 : vector<1x32xi1>, vector<1x32xi32>
    %220 = vector.broadcast %122 : vector<2x1xi32> to vector<2x32xi32>
    %221 = vector.broadcast %219 : vector<1x32xi32> to vector<2x32xi32>
    %222 = arith.cmpi sgt, %220, %221 : vector<2x32xi32>
    %223 = arith.select %222, %216, %189 : vector<2x32xi1>, vector<2x32xf32>
    %224 = arith.select %222, %214, %190 : vector<2x32xi1>, vector<2x32xf32>
    %cst_142 = arith.constant 0.000000e+00 : f32
    %225 = vector.broadcast %cst_142 : f32 to vector<2x32xf32>
    %226 = arith.select %222, %216, %225 : vector<2x32xi1>, vector<2x32xf32>
    %227 = vector.extract_strided_slice %226 {offsets = [0, 0], sizes = [2, 16], strides = [1, 1]} : vector<2x32xf32> to vector<2x16xf32>
    %c4_143 = arith.constant 4 : index
    %c0_144 = arith.constant 0 : index
    %228 = vector.load %arg7[%c4_143, %c0_144] : memref<32x32xf32, #tpu.memory_space<vmem>>, vector<2x16xf32>
    tpu.vector_store %arg7[%c4_143, %c0_144], %227 {strides = array<i32>} : memref<32x32xf32, #tpu.memory_space<vmem>>, vector<2x16xf32>,
    %229 = vector.extract_strided_slice %226 {offsets = [0, 16], sizes = [2, 16], strides = [1, 1]} : vector<2x32xf32> to vector<2x16xf32>
    %c26_145 = arith.constant 26 : index
    %c16_146 = arith.constant 16 : index
    %230 = vector.load %arg7[%c26_145, %c16_146] : memref<32x32xf32, #tpu.memory_space<vmem>>, vector<2x16xf32>
    tpu.vector_store %arg7[%c26_145, %c16_146], %229 {strides = array<i32>} : memref<32x32xf32, #tpu.memory_space<vmem>>, vector<2x16xf32>,
    %c6_147 = arith.constant 6 : index
    %c0_148 = arith.constant 0 : index
    %231 = vector.load %arg10[%c6_147, %c0_148] : memref<32x128xf32, #tpu.memory_space<vmem>>, vector<2x128xf32>
    %232 = arith.truncf %223 : vector<2x32xf32> to vector<2x32xbf16>
    %cst_149 = arith.constant dense<0.000000e+00> : vector<2x128xf32>
    %233 = tpu.matmul %232, %123, %cst_149 {dimension_numbers = #tpu.dot_dimension_numbers<[1], [0], [0], [1], [0, 0, 1, 1], [], []>} : vector<2x32xbf16>, vector<32x128xbf16>, vector<2x128xf32> -> vector<2x128xf32>
    %234 = arith.addf %231, %233 : vector<2x128xf32>
    %235 = vector.extract_strided_slice %234 {offsets = [0, 0], sizes = [2, 96], strides = [1, 1]} : vector<2x128xf32> to vector<2x96xf32>
    %236 = arith.negf %235 : vector<2x96xf32>
    %237 = math.exp %236 : vector<2x96xf32>
    %cst_150 = arith.constant 1.000000e+00 : f32
    %238 = vector.broadcast %cst_150 : f32 to vector<2x96xf32>
    %239 = arith.addf %238, %237 : vector<2x96xf32>
    %240 = arith.divf %238, %239 : vector<2x96xf32>
    %241 = vector.extract_strided_slice %234 {offsets = [0, 96], sizes = [2, 32], strides = [1, 1]} : vector<2x128xf32> to vector<2x32xf32>
    %242 = math.tanh %241 : vector<2x32xf32>
    %243 = vector.extract_strided_slice %240 {offsets = [0, 0], sizes = [2, 32], strides = [1, 1]} : vector<2x96xf32> to vector<2x32xf32>
    %244 = vector.extract_strided_slice %240 {offsets = [0, 32], sizes = [2, 32], strides = [1, 1]} : vector<2x96xf32> to vector<2x32xf32>
    %245 = vector.extract_strided_slice %240 {offsets = [0, 64], sizes = [2, 32], strides = [1, 1]} : vector<2x96xf32> to vector<2x32xf32>
    %246 = arith.mulf %244, %224 : vector<2x32xf32>
    %247 = arith.mulf %243, %242 : vector<2x32xf32>
    %248 = arith.addf %246, %247 : vector<2x32xf32>
    %249 = math.tanh %248 : vector<2x32xf32>
    %250 = arith.mulf %245, %249 : vector<2x32xf32>
    %c3_i32 = arith.constant 3 : i32
    %c12_i32 = arith.constant 12 : i32
    %251 = vector.broadcast %c3_i32 : i32 to vector<1x32xi32>
    %252 = vector.broadcast %c12_i32 : i32 to vector<1x32xi32>
    %253 = arith.select %126, %251, %252 : vector<1x32xi1>, vector<1x32xi32>
    %254 = vector.broadcast %122 : vector<2x1xi32> to vector<2x32xi32>
    %255 = vector.broadcast %253 : vector<1x32xi32> to vector<2x32xi32>
    %256 = arith.cmpi sgt, %254, %255 : vector<2x32xi32>
    %257 = arith.select %256, %250, %223 : vector<2x32xi1>, vector<2x32xf32>
    %258 = arith.select %256, %248, %224 : vector<2x32xi1>, vector<2x32xf32>
    %cst_151 = arith.constant 0.000000e+00 : f32
    %259 = vector.broadcast %cst_151 : f32 to vector<2x32xf32>
    %260 = arith.select %256, %250, %259 : vector<2x32xi1>, vector<2x32xf32>
    %261 = vector.extract_strided_slice %260 {offsets = [0, 0], sizes = [2, 16], strides = [1, 1]} : vector<2x32xf32> to vector<2x16xf32>
    %c6_152 = arith.constant 6 : index
    %c0_153 = arith.constant 0 : index
    %262 = vector.load %arg7[%c6_152, %c0_153] : memref<32x32xf32, #tpu.memory_space<vmem>>, vector<2x16xf32>
    tpu.vector_store %arg7[%c6_152, %c0_153], %261 {strides = array<i32>} : memref<32x32xf32, #tpu.memory_space<vmem>>, vector<2x16xf32>,
    %263 = vector.extract_strided_slice %260 {offsets = [0, 16], sizes = [2, 16], strides = [1, 1]} : vector<2x32xf32> to vector<2x16xf32>
    %c24_154 = arith.constant 24 : index
    %c16_155 = arith.constant 16 : index
    %264 = vector.load %arg7[%c24_154, %c16_155] : memref<32x32xf32, #tpu.memory_space<vmem>>, vector<2x16xf32>
    tpu.vector_store %arg7[%c24_154, %c16_155], %263 {strides = array<i32>} : memref<32x32xf32, #tpu.memory_space<vmem>>, vector<2x16xf32>,
    %c8_156 = arith.constant 8 : index
    %c0_157 = arith.constant 0 : index
    %265 = vector.load %arg10[%c8_156, %c0_157] : memref<32x128xf32, #tpu.memory_space<vmem>>, vector<2x128xf32>
    %266 = arith.truncf %257 : vector<2x32xf32> to vector<2x32xbf16>
    %cst_158 = arith.constant dense<0.000000e+00> : vector<2x128xf32>
    %267 = tpu.matmul %266, %123, %cst_158 {dimension_numbers = #tpu.dot_dimension_numbers<[1], [0], [0], [1], [0, 0, 1, 1], [], []>} : vector<2x32xbf16>, vector<32x128xbf16>, vector<2x128xf32> -> vector<2x128xf32>
    %268 = arith.addf %265, %267 : vector<2x128xf32>
    %269 = vector.extract_strided_slice %268 {offsets = [0, 0], sizes = [2, 96], strides = [1, 1]} : vector<2x128xf32> to vector<2x96xf32>
    %270 = arith.negf %269 : vector<2x96xf32>
    %271 = math.exp %270 : vector<2x96xf32>
    %cst_159 = arith.constant 1.000000e+00 : f32
    %272 = vector.broadcast %cst_159 : f32 to vector<2x96xf32>
    %273 = arith.addf %272, %271 : vector<2x96xf32>
    %274 = arith.divf %272, %273 : vector<2x96xf32>
    %275 = vector.extract_strided_slice %268 {offsets = [0, 96], sizes = [2, 32], strides = [1, 1]} : vector<2x128xf32> to vector<2x32xf32>
    %276 = math.tanh %275 : vector<2x32xf32>
    %277 = vector.extract_strided_slice %274 {offsets = [0, 0], sizes = [2, 32], strides = [1, 1]} : vector<2x96xf32> to vector<2x32xf32>
    %278 = vector.extract_strided_slice %274 {offsets = [0, 32], sizes = [2, 32], strides = [1, 1]} : vector<2x96xf32> to vector<2x32xf32>
    %279 = vector.extract_strided_slice %274 {offsets = [0, 64], sizes = [2, 32], strides = [1, 1]} : vector<2x96xf32> to vector<2x32xf32>
    %280 = arith.mulf %278, %258 : vector<2x32xf32>
    %281 = arith.mulf %277, %276 : vector<2x32xf32>
    %282 = arith.addf %280, %281 : vector<2x32xf32>
    %283 = math.tanh %282 : vector<2x32xf32>
    %284 = arith.mulf %279, %283 : vector<2x32xf32>
    %c4_i32 = arith.constant 4 : i32
    %c11_i32 = arith.constant 11 : i32
    %285 = vector.broadcast %c4_i32 : i32 to vector<1x32xi32>
    %286 = vector.broadcast %c11_i32 : i32 to vector<1x32xi32>
    %287 = arith.select %126, %285, %286 : vector<1x32xi1>, vector<1x32xi32>
    %288 = vector.broadcast %122 : vector<2x1xi32> to vector<2x32xi32>
    %289 = vector.broadcast %287 : vector<1x32xi32> to vector<2x32xi32>
    %290 = arith.cmpi sgt, %288, %289 : vector<2x32xi32>
    %291 = arith.select %290, %284, %257 : vector<2x32xi1>, vector<2x32xf32>
    %292 = arith.select %290, %282, %258 : vector<2x32xi1>, vector<2x32xf32>
    %cst_160 = arith.constant 0.000000e+00 : f32
    %293 = vector.broadcast %cst_160 : f32 to vector<2x32xf32>
    %294 = arith.select %290, %284, %293 : vector<2x32xi1>, vector<2x32xf32>
    %295 = vector.extract_strided_slice %294 {offsets = [0, 0], sizes = [2, 16], strides = [1, 1]} : vector<2x32xf32> to vector<2x16xf32>
    %c8_161 = arith.constant 8 : index
    %c0_162 = arith.constant 0 : index
    %296 = vector.load %arg7[%c8_161, %c0_162] : memref<32x32xf32, #tpu.memory_space<vmem>>, vector<2x16xf32>
    tpu.vector_store %arg7[%c8_161, %c0_162], %295 {strides = array<i32>} : memref<32x32xf32, #tpu.memory_space<vmem>>, vector<2x16xf32>,
    %297 = vector.extract_strided_slice %294 {offsets = [0, 16], sizes = [2, 16], strides = [1, 1]} : vector<2x32xf32> to vector<2x16xf32>
    %c22_163 = arith.constant 22 : index
    %c16_164 = arith.constant 16 : index
    %298 = vector.load %arg7[%c22_163, %c16_164] : memref<32x32xf32, #tpu.memory_space<vmem>>, vector<2x16xf32>
    tpu.vector_store %arg7[%c22_163, %c16_164], %297 {strides = array<i32>} : memref<32x32xf32, #tpu.memory_space<vmem>>, vector<2x16xf32>,
    %c10_165 = arith.constant 10 : index
    %c0_166 = arith.constant 0 : index
    %299 = vector.load %arg10[%c10_165, %c0_166] : memref<32x128xf32, #tpu.memory_space<vmem>>, vector<2x128xf32>
    %300 = arith.truncf %291 : vector<2x32xf32> to vector<2x32xbf16>
    %cst_167 = arith.constant dense<0.000000e+00> : vector<2x128xf32>
    %301 = tpu.matmul %300, %123, %cst_167 {dimension_numbers = #tpu.dot_dimension_numbers<[1], [0], [0], [1], [0, 0, 1, 1], [], []>} : vector<2x32xbf16>, vector<32x128xbf16>, vector<2x128xf32> -> vector<2x128xf32>
    %302 = arith.addf %299, %301 : vector<2x128xf32>
    %303 = vector.extract_strided_slice %302 {offsets = [0, 0], sizes = [2, 96], strides = [1, 1]} : vector<2x128xf32> to vector<2x96xf32>
    %304 = arith.negf %303 : vector<2x96xf32>
    %305 = math.exp %304 : vector<2x96xf32>
    %cst_168 = arith.constant 1.000000e+00 : f32
    %306 = vector.broadcast %cst_168 : f32 to vector<2x96xf32>
    %307 = arith.addf %306, %305 : vector<2x96xf32>
    %308 = arith.divf %306, %307 : vector<2x96xf32>
    %309 = vector.extract_strided_slice %302 {offsets = [0, 96], sizes = [2, 32], strides = [1, 1]} : vector<2x128xf32> to vector<2x32xf32>
    %310 = math.tanh %309 : vector<2x32xf32>
    %311 = vector.extract_strided_slice %308 {offsets = [0, 0], sizes = [2, 32], strides = [1, 1]} : vector<2x96xf32> to vector<2x32xf32>
    %312 = vector.extract_strided_slice %308 {offsets = [0, 32], sizes = [2, 32], strides = [1, 1]} : vector<2x96xf32> to vector<2x32xf32>
    %313 = vector.extract_strided_slice %308 {offsets = [0, 64], sizes = [2, 32], strides = [1, 1]} : vector<2x96xf32> to vector<2x32xf32>
    %314 = arith.mulf %312, %292 : vector<2x32xf32>
    %315 = arith.mulf %311, %310 : vector<2x32xf32>
    %316 = arith.addf %314, %315 : vector<2x32xf32>
    %317 = math.tanh %316 : vector<2x32xf32>
    %318 = arith.mulf %313, %317 : vector<2x32xf32>
    %c5_i32 = arith.constant 5 : i32
    %c10_i32 = arith.constant 10 : i32
    %319 = vector.broadcast %c5_i32 : i32 to vector<1x32xi32>
    %320 = vector.broadcast %c10_i32 : i32 to vector<1x32xi32>
    %321 = arith.select %126, %319, %320 : vector<1x32xi1>, vector<1x32xi32>
    %322 = vector.broadcast %122 : vector<2x1xi32> to vector<2x32xi32>
    %323 = vector.broadcast %321 : vector<1x32xi32> to vector<2x32xi32>
    %324 = arith.cmpi sgt, %322, %323 : vector<2x32xi32>
    %325 = arith.select %324, %318, %291 : vector<2x32xi1>, vector<2x32xf32>
    %326 = arith.select %324, %316, %292 : vector<2x32xi1>, vector<2x32xf32>
    %cst_169 = arith.constant 0.000000e+00 : f32
    %327 = vector.broadcast %cst_169 : f32 to vector<2x32xf32>
    %328 = arith.select %324, %318, %327 : vector<2x32xi1>, vector<2x32xf32>
    %329 = vector.extract_strided_slice %328 {offsets = [0, 0], sizes = [2, 16], strides = [1, 1]} : vector<2x32xf32> to vector<2x16xf32>
    %c10_170 = arith.constant 10 : index
    %c0_171 = arith.constant 0 : index
    %330 = vector.load %arg7[%c10_170, %c0_171] : memref<32x32xf32, #tpu.memory_space<vmem>>, vector<2x16xf32>
    tpu.vector_store %arg7[%c10_170, %c0_171], %329 {strides = array<i32>} : memref<32x32xf32, #tpu.memory_space<vmem>>, vector<2x16xf32>,
    %331 = vector.extract_strided_slice %328 {offsets = [0, 16], sizes = [2, 16], strides = [1, 1]} : vector<2x32xf32> to vector<2x16xf32>
    %c20_172 = arith.constant 20 : index
    %c16_173 = arith.constant 16 : index
    %332 = vector.load %arg7[%c20_172, %c16_173] : memref<32x32xf32, #tpu.memory_space<vmem>>, vector<2x16xf32>
    tpu.vector_store %arg7[%c20_172, %c16_173], %331 {strides = array<i32>} : memref<32x32xf32, #tpu.memory_space<vmem>>, vector<2x16xf32>,
    %c12_174 = arith.constant 12 : index
    %c0_175 = arith.constant 0 : index
    %333 = vector.load %arg10[%c12_174, %c0_175] : memref<32x128xf32, #tpu.memory_space<vmem>>, vector<2x128xf32>
    %334 = arith.truncf %325 : vector<2x32xf32> to vector<2x32xbf16>
    %cst_176 = arith.constant dense<0.000000e+00> : vector<2x128xf32>
    %335 = tpu.matmul %334, %123, %cst_176 {dimension_numbers = #tpu.dot_dimension_numbers<[1], [0], [0], [1], [0, 0, 1, 1], [], []>} : vector<2x32xbf16>, vector<32x128xbf16>, vector<2x128xf32> -> vector<2x128xf32>
    %336 = arith.addf %333, %335 : vector<2x128xf32>
    %337 = vector.extract_strided_slice %336 {offsets = [0, 0], sizes = [2, 96], strides = [1, 1]} : vector<2x128xf32> to vector<2x96xf32>
    %338 = arith.negf %337 : vector<2x96xf32>
    %339 = math.exp %338 : vector<2x96xf32>
    %cst_177 = arith.constant 1.000000e+00 : f32
    %340 = vector.broadcast %cst_177 : f32 to vector<2x96xf32>
    %341 = arith.addf %340, %339 : vector<2x96xf32>
    %342 = arith.divf %340, %341 : vector<2x96xf32>
    %343 = vector.extract_strided_slice %336 {offsets = [0, 96], sizes = [2, 32], strides = [1, 1]} : vector<2x128xf32> to vector<2x32xf32>
    %344 = math.tanh %343 : vector<2x32xf32>
    %345 = vector.extract_strided_slice %342 {offsets = [0, 0], sizes = [2, 32], strides = [1, 1]} : vector<2x96xf32> to vector<2x32xf32>
    %346 = vector.extract_strided_slice %342 {offsets = [0, 32], sizes = [2, 32], strides = [1, 1]} : vector<2x96xf32> to vector<2x32xf32>
    %347 = vector.extract_strided_slice %342 {offsets = [0, 64], sizes = [2, 32], strides = [1, 1]} : vector<2x96xf32> to vector<2x32xf32>
    %348 = arith.mulf %346, %326 : vector<2x32xf32>
    %349 = arith.mulf %345, %344 : vector<2x32xf32>
    %350 = arith.addf %348, %349 : vector<2x32xf32>
    %351 = math.tanh %350 : vector<2x32xf32>
    %352 = arith.mulf %347, %351 : vector<2x32xf32>
    %c6_i32 = arith.constant 6 : i32
    %c9_i32 = arith.constant 9 : i32
    %353 = vector.broadcast %c6_i32 : i32 to vector<1x32xi32>
    %354 = vector.broadcast %c9_i32 : i32 to vector<1x32xi32>
    %355 = arith.select %126, %353, %354 : vector<1x32xi1>, vector<1x32xi32>
    %356 = vector.broadcast %122 : vector<2x1xi32> to vector<2x32xi32>
    %357 = vector.broadcast %355 : vector<1x32xi32> to vector<2x32xi32>
    %358 = arith.cmpi sgt, %356, %357 : vector<2x32xi32>
    %359 = arith.select %358, %352, %325 : vector<2x32xi1>, vector<2x32xf32>
    %360 = arith.select %358, %350, %326 : vector<2x32xi1>, vector<2x32xf32>
    %cst_178 = arith.constant 0.000000e+00 : f32
    %361 = vector.broadcast %cst_178 : f32 to vector<2x32xf32>
    %362 = arith.select %358, %352, %361 : vector<2x32xi1>, vector<2x32xf32>
    %363 = vector.extract_strided_slice %362 {offsets = [0, 0], sizes = [2, 16], strides = [1, 1]} : vector<2x32xf32> to vector<2x16xf32>
    %c12_179 = arith.constant 12 : index
    %c0_180 = arith.constant 0 : index
    %364 = vector.load %arg7[%c12_179, %c0_180] : memref<32x32xf32, #tpu.memory_space<vmem>>, vector<2x16xf32>
    tpu.vector_store %arg7[%c12_179, %c0_180], %363 {strides = array<i32>} : memref<32x32xf32, #tpu.memory_space<vmem>>, vector<2x16xf32>,
    %365 = vector.extract_strided_slice %362 {offsets = [0, 16], sizes = [2, 16], strides = [1, 1]} : vector<2x32xf32> to vector<2x16xf32>
    %c18_181 = arith.constant 18 : index
    %c16_182 = arith.constant 16 : index
    %366 = vector.load %arg7[%c18_181, %c16_182] : memref<32x32xf32, #tpu.memory_space<vmem>>, vector<2x16xf32>
    tpu.vector_store %arg7[%c18_181, %c16_182], %365 {strides = array<i32>} : memref<32x32xf32, #tpu.memory_space<vmem>>, vector<2x16xf32>,
    %c14_183 = arith.constant 14 : index
    %c0_184 = arith.constant 0 : index
    %367 = vector.load %arg10[%c14_183, %c0_184] : memref<32x128xf32, #tpu.memory_space<vmem>>, vector<2x128xf32>
    %368 = arith.truncf %359 : vector<2x32xf32> to vector<2x32xbf16>
    %cst_185 = arith.constant dense<0.000000e+00> : vector<2x128xf32>
    %369 = tpu.matmul %368, %123, %cst_185 {dimension_numbers = #tpu.dot_dimension_numbers<[1], [0], [0], [1], [0, 0, 1, 1], [], []>} : vector<2x32xbf16>, vector<32x128xbf16>, vector<2x128xf32> -> vector<2x128xf32>
    %370 = arith.addf %367, %369 : vector<2x128xf32>
    %371 = vector.extract_strided_slice %370 {offsets = [0, 0], sizes = [2, 96], strides = [1, 1]} : vector<2x128xf32> to vector<2x96xf32>
    %372 = arith.negf %371 : vector<2x96xf32>
    %373 = math.exp %372 : vector<2x96xf32>
    %cst_186 = arith.constant 1.000000e+00 : f32
    %374 = vector.broadcast %cst_186 : f32 to vector<2x96xf32>
    %375 = arith.addf %374, %373 : vector<2x96xf32>
    %376 = arith.divf %374, %375 : vector<2x96xf32>
    %377 = vector.extract_strided_slice %370 {offsets = [0, 96], sizes = [2, 32], strides = [1, 1]} : vector<2x128xf32> to vector<2x32xf32>
    %378 = math.tanh %377 : vector<2x32xf32>
    %379 = vector.extract_strided_slice %376 {offsets = [0, 0], sizes = [2, 32], strides = [1, 1]} : vector<2x96xf32> to vector<2x32xf32>
    %380 = vector.extract_strided_slice %376 {offsets = [0, 32], sizes = [2, 32], strides = [1, 1]} : vector<2x96xf32> to vector<2x32xf32>
    %381 = vector.extract_strided_slice %376 {offsets = [0, 64], sizes = [2, 32], strides = [1, 1]} : vector<2x96xf32> to vector<2x32xf32>
    %382 = arith.mulf %380, %360 : vector<2x32xf32>
    %383 = arith.mulf %379, %378 : vector<2x32xf32>
    %384 = arith.addf %382, %383 : vector<2x32xf32>
    %385 = math.tanh %384 : vector<2x32xf32>
    %386 = arith.mulf %381, %385 : vector<2x32xf32>
    %c7_i32 = arith.constant 7 : i32
    %c8_i32 = arith.constant 8 : i32
    %387 = vector.broadcast %c7_i32 : i32 to vector<1x32xi32>
    %388 = vector.broadcast %c8_i32 : i32 to vector<1x32xi32>
    %389 = arith.select %126, %387, %388 : vector<1x32xi1>, vector<1x32xi32>
    %390 = vector.broadcast %122 : vector<2x1xi32> to vector<2x32xi32>
    %391 = vector.broadcast %389 : vector<1x32xi32> to vector<2x32xi32>
    %392 = arith.cmpi sgt, %390, %391 : vector<2x32xi32>
    %393 = arith.select %392, %386, %359 : vector<2x32xi1>, vector<2x32xf32>
    %394 = arith.select %392, %384, %360 : vector<2x32xi1>, vector<2x32xf32>
    %cst_187 = arith.constant 0.000000e+00 : f32
    %395 = vector.broadcast %cst_187 : f32 to vector<2x32xf32>
    %396 = arith.select %392, %386, %395 : vector<2x32xi1>, vector<2x32xf32>
    %397 = vector.extract_strided_slice %396 {offsets = [0, 0], sizes = [2, 16], strides = [1, 1]} : vector<2x32xf32> to vector<2x16xf32>
    %c14_188 = arith.constant 14 : index
    %c0_189 = arith.constant 0 : index
    %398 = vector.load %arg7[%c14_188, %c0_189] : memref<32x32xf32, #tpu.memory_space<vmem>>, vector<2x16xf32>
    tpu.vector_store %arg7[%c14_188, %c0_189], %397 {strides = array<i32>} : memref<32x32xf32, #tpu.memory_space<vmem>>, vector<2x16xf32>,
    %399 = vector.extract_strided_slice %396 {offsets = [0, 16], sizes = [2, 16], strides = [1, 1]} : vector<2x32xf32> to vector<2x16xf32>
    %c16_190 = arith.constant 16 : index
    %c16_191 = arith.constant 16 : index
    %400 = vector.load %arg7[%c16_190, %c16_191] : memref<32x32xf32, #tpu.memory_space<vmem>>, vector<2x16xf32>
    tpu.vector_store %arg7[%c16_190, %c16_191], %399 {strides = array<i32>} : memref<32x32xf32, #tpu.memory_space<vmem>>, vector<2x16xf32>,
    %c16_192 = arith.constant 16 : index
    %c0_193 = arith.constant 0 : index
    %401 = vector.load %arg10[%c16_192, %c0_193] : memref<32x128xf32, #tpu.memory_space<vmem>>, vector<2x128xf32>
    %402 = arith.truncf %393 : vector<2x32xf32> to vector<2x32xbf16>
    %cst_194 = arith.constant dense<0.000000e+00> : vector<2x128xf32>
    %403 = tpu.matmul %402, %123, %cst_194 {dimension_numbers = #tpu.dot_dimension_numbers<[1], [0], [0], [1], [0, 0, 1, 1], [], []>} : vector<2x32xbf16>, vector<32x128xbf16>, vector<2x128xf32> -> vector<2x128xf32>
    %404 = arith.addf %401, %403 : vector<2x128xf32>
    %405 = vector.extract_strided_slice %404 {offsets = [0, 0], sizes = [2, 96], strides = [1, 1]} : vector<2x128xf32> to vector<2x96xf32>
    %406 = arith.negf %405 : vector<2x96xf32>
    %407 = math.exp %406 : vector<2x96xf32>
    %cst_195 = arith.constant 1.000000e+00 : f32
    %408 = vector.broadcast %cst_195 : f32 to vector<2x96xf32>
    %409 = arith.addf %408, %407 : vector<2x96xf32>
    %410 = arith.divf %408, %409 : vector<2x96xf32>
    %411 = vector.extract_strided_slice %404 {offsets = [0, 96], sizes = [2, 32], strides = [1, 1]} : vector<2x128xf32> to vector<2x32xf32>
    %412 = math.tanh %411 : vector<2x32xf32>
    %413 = vector.extract_strided_slice %410 {offsets = [0, 0], sizes = [2, 32], strides = [1, 1]} : vector<2x96xf32> to vector<2x32xf32>
    %414 = vector.extract_strided_slice %410 {offsets = [0, 32], sizes = [2, 32], strides = [1, 1]} : vector<2x96xf32> to vector<2x32xf32>
    %415 = vector.extract_strided_slice %410 {offsets = [0, 64], sizes = [2, 32], strides = [1, 1]} : vector<2x96xf32> to vector<2x32xf32>
    %416 = arith.mulf %414, %394 : vector<2x32xf32>
    %417 = arith.mulf %413, %412 : vector<2x32xf32>
    %418 = arith.addf %416, %417 : vector<2x32xf32>
    %419 = math.tanh %418 : vector<2x32xf32>
    %420 = arith.mulf %415, %419 : vector<2x32xf32>
    %c8_i32_196 = arith.constant 8 : i32
    %c7_i32_197 = arith.constant 7 : i32
    %421 = vector.broadcast %c8_i32_196 : i32 to vector<1x32xi32>
    %422 = vector.broadcast %c7_i32_197 : i32 to vector<1x32xi32>
    %423 = arith.select %126, %421, %422 : vector<1x32xi1>, vector<1x32xi32>
    %424 = vector.broadcast %122 : vector<2x1xi32> to vector<2x32xi32>
    %425 = vector.broadcast %423 : vector<1x32xi32> to vector<2x32xi32>
    %426 = arith.cmpi sgt, %424, %425 : vector<2x32xi32>
    %427 = arith.select %426, %420, %393 : vector<2x32xi1>, vector<2x32xf32>
    %428 = arith.select %426, %418, %394 : vector<2x32xi1>, vector<2x32xf32>
    %cst_198 = arith.constant 0.000000e+00 : f32
    %429 = vector.broadcast %cst_198 : f32 to vector<2x32xf32>
    %430 = arith.select %426, %420, %429 : vector<2x32xi1>, vector<2x32xf32>
    %431 = vector.extract_strided_slice %430 {offsets = [0, 0], sizes = [2, 16], strides = [1, 1]} : vector<2x32xf32> to vector<2x16xf32>
    %c16_199 = arith.constant 16 : index
    %c0_200 = arith.constant 0 : index
    %432 = vector.load %arg7[%c16_199, %c0_200] : memref<32x32xf32, #tpu.memory_space<vmem>>, vector<2x16xf32>
    tpu.vector_store %arg7[%c16_199, %c0_200], %431 {strides = array<i32>} : memref<32x32xf32, #tpu.memory_space<vmem>>, vector<2x16xf32>,
    %433 = vector.extract_strided_slice %430 {offsets = [0, 16], sizes = [2, 16], strides = [1, 1]} : vector<2x32xf32> to vector<2x16xf32>
    %c14_201 = arith.constant 14 : index
    %c16_202 = arith.constant 16 : index
    %434 = vector.load %arg7[%c14_201, %c16_202] : memref<32x32xf32, #tpu.memory_space<vmem>>, vector<2x16xf32>
    tpu.vector_store %arg7[%c14_201, %c16_202], %433 {strides = array<i32>} : memref<32x32xf32, #tpu.memory_space<vmem>>, vector<2x16xf32>,
    %c18_203 = arith.constant 18 : index
    %c0_204 = arith.constant 0 : index
    %435 = vector.load %arg10[%c18_203, %c0_204] : memref<32x128xf32, #tpu.memory_space<vmem>>, vector<2x128xf32>
    %436 = arith.truncf %427 : vector<2x32xf32> to vector<2x32xbf16>
    %cst_205 = arith.constant dense<0.000000e+00> : vector<2x128xf32>
    %437 = tpu.matmul %436, %123, %cst_205 {dimension_numbers = #tpu.dot_dimension_numbers<[1], [0], [0], [1], [0, 0, 1, 1], [], []>} : vector<2x32xbf16>, vector<32x128xbf16>, vector<2x128xf32> -> vector<2x128xf32>
    %438 = arith.addf %435, %437 : vector<2x128xf32>
    %439 = vector.extract_strided_slice %438 {offsets = [0, 0], sizes = [2, 96], strides = [1, 1]} : vector<2x128xf32> to vector<2x96xf32>
    %440 = arith.negf %439 : vector<2x96xf32>
    %441 = math.exp %440 : vector<2x96xf32>
    %cst_206 = arith.constant 1.000000e+00 : f32
    %442 = vector.broadcast %cst_206 : f32 to vector<2x96xf32>
    %443 = arith.addf %442, %441 : vector<2x96xf32>
    %444 = arith.divf %442, %443 : vector<2x96xf32>
    %445 = vector.extract_strided_slice %438 {offsets = [0, 96], sizes = [2, 32], strides = [1, 1]} : vector<2x128xf32> to vector<2x32xf32>
    %446 = math.tanh %445 : vector<2x32xf32>
    %447 = vector.extract_strided_slice %444 {offsets = [0, 0], sizes = [2, 32], strides = [1, 1]} : vector<2x96xf32> to vector<2x32xf32>
    %448 = vector.extract_strided_slice %444 {offsets = [0, 32], sizes = [2, 32], strides = [1, 1]} : vector<2x96xf32> to vector<2x32xf32>
    %449 = vector.extract_strided_slice %444 {offsets = [0, 64], sizes = [2, 32], strides = [1, 1]} : vector<2x96xf32> to vector<2x32xf32>
    %450 = arith.mulf %448, %428 : vector<2x32xf32>
    %451 = arith.mulf %447, %446 : vector<2x32xf32>
    %452 = arith.addf %450, %451 : vector<2x32xf32>
    %453 = math.tanh %452 : vector<2x32xf32>
    %454 = arith.mulf %449, %453 : vector<2x32xf32>
    %c9_i32_207 = arith.constant 9 : i32
    %c6_i32_208 = arith.constant 6 : i32
    %455 = vector.broadcast %c9_i32_207 : i32 to vector<1x32xi32>
    %456 = vector.broadcast %c6_i32_208 : i32 to vector<1x32xi32>
    %457 = arith.select %126, %455, %456 : vector<1x32xi1>, vector<1x32xi32>
    %458 = vector.broadcast %122 : vector<2x1xi32> to vector<2x32xi32>
    %459 = vector.broadcast %457 : vector<1x32xi32> to vector<2x32xi32>
    %460 = arith.cmpi sgt, %458, %459 : vector<2x32xi32>
    %461 = arith.select %460, %454, %427 : vector<2x32xi1>, vector<2x32xf32>
    %462 = arith.select %460, %452, %428 : vector<2x32xi1>, vector<2x32xf32>
    %cst_209 = arith.constant 0.000000e+00 : f32
    %463 = vector.broadcast %cst_209 : f32 to vector<2x32xf32>
    %464 = arith.select %460, %454, %463 : vector<2x32xi1>, vector<2x32xf32>
    %465 = vector.extract_strided_slice %464 {offsets = [0, 0], sizes = [2, 16], strides = [1, 1]} : vector<2x32xf32> to vector<2x16xf32>
    %c18_210 = arith.constant 18 : index
    %c0_211 = arith.constant 0 : index
    %466 = vector.load %arg7[%c18_210, %c0_211] : memref<32x32xf32, #tpu.memory_space<vmem>>, vector<2x16xf32>
    tpu.vector_store %arg7[%c18_210, %c0_211], %465 {strides = array<i32>} : memref<32x32xf32, #tpu.memory_space<vmem>>, vector<2x16xf32>,
    %467 = vector.extract_strided_slice %464 {offsets = [0, 16], sizes = [2, 16], strides = [1, 1]} : vector<2x32xf32> to vector<2x16xf32>
    %c12_212 = arith.constant 12 : index
    %c16_213 = arith.constant 16 : index
    %468 = vector.load %arg7[%c12_212, %c16_213] : memref<32x32xf32, #tpu.memory_space<vmem>>, vector<2x16xf32>
    tpu.vector_store %arg7[%c12_212, %c16_213], %467 {strides = array<i32>} : memref<32x32xf32, #tpu.memory_space<vmem>>, vector<2x16xf32>,
    %c20_214 = arith.constant 20 : index
    %c0_215 = arith.constant 0 : index
    %469 = vector.load %arg10[%c20_214, %c0_215] : memref<32x128xf32, #tpu.memory_space<vmem>>, vector<2x128xf32>
    %470 = arith.truncf %461 : vector<2x32xf32> to vector<2x32xbf16>
    %cst_216 = arith.constant dense<0.000000e+00> : vector<2x128xf32>
    %471 = tpu.matmul %470, %123, %cst_216 {dimension_numbers = #tpu.dot_dimension_numbers<[1], [0], [0], [1], [0, 0, 1, 1], [], []>} : vector<2x32xbf16>, vector<32x128xbf16>, vector<2x128xf32> -> vector<2x128xf32>
    %472 = arith.addf %469, %471 : vector<2x128xf32>
    %473 = vector.extract_strided_slice %472 {offsets = [0, 0], sizes = [2, 96], strides = [1, 1]} : vector<2x128xf32> to vector<2x96xf32>
    %474 = arith.negf %473 : vector<2x96xf32>
    %475 = math.exp %474 : vector<2x96xf32>
    %cst_217 = arith.constant 1.000000e+00 : f32
    %476 = vector.broadcast %cst_217 : f32 to vector<2x96xf32>
    %477 = arith.addf %476, %475 : vector<2x96xf32>
    %478 = arith.divf %476, %477 : vector<2x96xf32>
    %479 = vector.extract_strided_slice %472 {offsets = [0, 96], sizes = [2, 32], strides = [1, 1]} : vector<2x128xf32> to vector<2x32xf32>
    %480 = math.tanh %479 : vector<2x32xf32>
    %481 = vector.extract_strided_slice %478 {offsets = [0, 0], sizes = [2, 32], strides = [1, 1]} : vector<2x96xf32> to vector<2x32xf32>
    %482 = vector.extract_strided_slice %478 {offsets = [0, 32], sizes = [2, 32], strides = [1, 1]} : vector<2x96xf32> to vector<2x32xf32>
    %483 = vector.extract_strided_slice %478 {offsets = [0, 64], sizes = [2, 32], strides = [1, 1]} : vector<2x96xf32> to vector<2x32xf32>
    %484 = arith.mulf %482, %462 : vector<2x32xf32>
    %485 = arith.mulf %481, %480 : vector<2x32xf32>
    %486 = arith.addf %484, %485 : vector<2x32xf32>
    %487 = math.tanh %486 : vector<2x32xf32>
    %488 = arith.mulf %483, %487 : vector<2x32xf32>
    %c10_i32_218 = arith.constant 10 : i32
    %c5_i32_219 = arith.constant 5 : i32
    %489 = vector.broadcast %c10_i32_218 : i32 to vector<1x32xi32>
    %490 = vector.broadcast %c5_i32_219 : i32 to vector<1x32xi32>
    %491 = arith.select %126, %489, %490 : vector<1x32xi1>, vector<1x32xi32>
    %492 = vector.broadcast %122 : vector<2x1xi32> to vector<2x32xi32>
    %493 = vector.broadcast %491 : vector<1x32xi32> to vector<2x32xi32>
    %494 = arith.cmpi sgt, %492, %493 : vector<2x32xi32>
    %495 = arith.select %494, %488, %461 : vector<2x32xi1>, vector<2x32xf32>
    %496 = arith.select %494, %486, %462 : vector<2x32xi1>, vector<2x32xf32>
    %cst_220 = arith.constant 0.000000e+00 : f32
    %497 = vector.broadcast %cst_220 : f32 to vector<2x32xf32>
    %498 = arith.select %494, %488, %497 : vector<2x32xi1>, vector<2x32xf32>
    %499 = vector.extract_strided_slice %498 {offsets = [0, 0], sizes = [2, 16], strides = [1, 1]} : vector<2x32xf32> to vector<2x16xf32>
    %c20_221 = arith.constant 20 : index
    %c0_222 = arith.constant 0 : index
    %500 = vector.load %arg7[%c20_221, %c0_222] : memref<32x32xf32, #tpu.memory_space<vmem>>, vector<2x16xf32>
    tpu.vector_store %arg7[%c20_221, %c0_222], %499 {strides = array<i32>} : memref<32x32xf32, #tpu.memory_space<vmem>>, vector<2x16xf32>,
    %501 = vector.extract_strided_slice %498 {offsets = [0, 16], sizes = [2, 16], strides = [1, 1]} : vector<2x32xf32> to vector<2x16xf32>
    %c10_223 = arith.constant 10 : index
    %c16_224 = arith.constant 16 : index
    %502 = vector.load %arg7[%c10_223, %c16_224] : memref<32x32xf32, #tpu.memory_space<vmem>>, vector<2x16xf32>
    tpu.vector_store %arg7[%c10_223, %c16_224], %501 {strides = array<i32>} : memref<32x32xf32, #tpu.memory_space<vmem>>, vector<2x16xf32>,
    %c22_225 = arith.constant 22 : index
    %c0_226 = arith.constant 0 : index
    %503 = vector.load %arg10[%c22_225, %c0_226] : memref<32x128xf32, #tpu.memory_space<vmem>>, vector<2x128xf32>
    %504 = arith.truncf %495 : vector<2x32xf32> to vector<2x32xbf16>
    %cst_227 = arith.constant dense<0.000000e+00> : vector<2x128xf32>
    %505 = tpu.matmul %504, %123, %cst_227 {dimension_numbers = #tpu.dot_dimension_numbers<[1], [0], [0], [1], [0, 0, 1, 1], [], []>} : vector<2x32xbf16>, vector<32x128xbf16>, vector<2x128xf32> -> vector<2x128xf32>
    %506 = arith.addf %503, %505 : vector<2x128xf32>
    %507 = vector.extract_strided_slice %506 {offsets = [0, 0], sizes = [2, 96], strides = [1, 1]} : vector<2x128xf32> to vector<2x96xf32>
    %508 = arith.negf %507 : vector<2x96xf32>
    %509 = math.exp %508 : vector<2x96xf32>
    %cst_228 = arith.constant 1.000000e+00 : f32
    %510 = vector.broadcast %cst_228 : f32 to vector<2x96xf32>
    %511 = arith.addf %510, %509 : vector<2x96xf32>
    %512 = arith.divf %510, %511 : vector<2x96xf32>
    %513 = vector.extract_strided_slice %506 {offsets = [0, 96], sizes = [2, 32], strides = [1, 1]} : vector<2x128xf32> to vector<2x32xf32>
    %514 = math.tanh %513 : vector<2x32xf32>
    %515 = vector.extract_strided_slice %512 {offsets = [0, 0], sizes = [2, 32], strides = [1, 1]} : vector<2x96xf32> to vector<2x32xf32>
    %516 = vector.extract_strided_slice %512 {offsets = [0, 32], sizes = [2, 32], strides = [1, 1]} : vector<2x96xf32> to vector<2x32xf32>
    %517 = vector.extract_strided_slice %512 {offsets = [0, 64], sizes = [2, 32], strides = [1, 1]} : vector<2x96xf32> to vector<2x32xf32>
    %518 = arith.mulf %516, %496 : vector<2x32xf32>
    %519 = arith.mulf %515, %514 : vector<2x32xf32>
    %520 = arith.addf %518, %519 : vector<2x32xf32>
    %521 = math.tanh %520 : vector<2x32xf32>
    %522 = arith.mulf %517, %521 : vector<2x32xf32>
    %c11_i32_229 = arith.constant 11 : i32
    %c4_i32_230 = arith.constant 4 : i32
    %523 = vector.broadcast %c11_i32_229 : i32 to vector<1x32xi32>
    %524 = vector.broadcast %c4_i32_230 : i32 to vector<1x32xi32>
    %525 = arith.select %126, %523, %524 : vector<1x32xi1>, vector<1x32xi32>
    %526 = vector.broadcast %122 : vector<2x1xi32> to vector<2x32xi32>
    %527 = vector.broadcast %525 : vector<1x32xi32> to vector<2x32xi32>
    %528 = arith.cmpi sgt, %526, %527 : vector<2x32xi32>
    %529 = arith.select %528, %522, %495 : vector<2x32xi1>, vector<2x32xf32>
    %530 = arith.select %528, %520, %496 : vector<2x32xi1>, vector<2x32xf32>
    %cst_231 = arith.constant 0.000000e+00 : f32
    %531 = vector.broadcast %cst_231 : f32 to vector<2x32xf32>
    %532 = arith.select %528, %522, %531 : vector<2x32xi1>, vector<2x32xf32>
    %533 = vector.extract_strided_slice %532 {offsets = [0, 0], sizes = [2, 16], strides = [1, 1]} : vector<2x32xf32> to vector<2x16xf32>
    %c22_232 = arith.constant 22 : index
    %c0_233 = arith.constant 0 : index
    %534 = vector.load %arg7[%c22_232, %c0_233] : memref<32x32xf32, #tpu.memory_space<vmem>>, vector<2x16xf32>
    tpu.vector_store %arg7[%c22_232, %c0_233], %533 {strides = array<i32>} : memref<32x32xf32, #tpu.memory_space<vmem>>, vector<2x16xf32>,
    %535 = vector.extract_strided_slice %532 {offsets = [0, 16], sizes = [2, 16], strides = [1, 1]} : vector<2x32xf32> to vector<2x16xf32>
    %c8_234 = arith.constant 8 : index
    %c16_235 = arith.constant 16 : index
    %536 = vector.load %arg7[%c8_234, %c16_235] : memref<32x32xf32, #tpu.memory_space<vmem>>, vector<2x16xf32>
    tpu.vector_store %arg7[%c8_234, %c16_235], %535 {strides = array<i32>} : memref<32x32xf32, #tpu.memory_space<vmem>>, vector<2x16xf32>,
    %c24_236 = arith.constant 24 : index
    %c0_237 = arith.constant 0 : index
    %537 = vector.load %arg10[%c24_236, %c0_237] : memref<32x128xf32, #tpu.memory_space<vmem>>, vector<2x128xf32>
    %538 = arith.truncf %529 : vector<2x32xf32> to vector<2x32xbf16>
    %cst_238 = arith.constant dense<0.000000e+00> : vector<2x128xf32>
    %539 = tpu.matmul %538, %123, %cst_238 {dimension_numbers = #tpu.dot_dimension_numbers<[1], [0], [0], [1], [0, 0, 1, 1], [], []>} : vector<2x32xbf16>, vector<32x128xbf16>, vector<2x128xf32> -> vector<2x128xf32>
    %540 = arith.addf %537, %539 : vector<2x128xf32>
    %541 = vector.extract_strided_slice %540 {offsets = [0, 0], sizes = [2, 96], strides = [1, 1]} : vector<2x128xf32> to vector<2x96xf32>
    %542 = arith.negf %541 : vector<2x96xf32>
    %543 = math.exp %542 : vector<2x96xf32>
    %cst_239 = arith.constant 1.000000e+00 : f32
    %544 = vector.broadcast %cst_239 : f32 to vector<2x96xf32>
    %545 = arith.addf %544, %543 : vector<2x96xf32>
    %546 = arith.divf %544, %545 : vector<2x96xf32>
    %547 = vector.extract_strided_slice %540 {offsets = [0, 96], sizes = [2, 32], strides = [1, 1]} : vector<2x128xf32> to vector<2x32xf32>
    %548 = math.tanh %547 : vector<2x32xf32>
    %549 = vector.extract_strided_slice %546 {offsets = [0, 0], sizes = [2, 32], strides = [1, 1]} : vector<2x96xf32> to vector<2x32xf32>
    %550 = vector.extract_strided_slice %546 {offsets = [0, 32], sizes = [2, 32], strides = [1, 1]} : vector<2x96xf32> to vector<2x32xf32>
    %551 = vector.extract_strided_slice %546 {offsets = [0, 64], sizes = [2, 32], strides = [1, 1]} : vector<2x96xf32> to vector<2x32xf32>
    %552 = arith.mulf %550, %530 : vector<2x32xf32>
    %553 = arith.mulf %549, %548 : vector<2x32xf32>
    %554 = arith.addf %552, %553 : vector<2x32xf32>
    %555 = math.tanh %554 : vector<2x32xf32>
    %556 = arith.mulf %551, %555 : vector<2x32xf32>
    %c12_i32_240 = arith.constant 12 : i32
    %c3_i32_241 = arith.constant 3 : i32
    %557 = vector.broadcast %c12_i32_240 : i32 to vector<1x32xi32>
    %558 = vector.broadcast %c3_i32_241 : i32 to vector<1x32xi32>
    %559 = arith.select %126, %557, %558 : vector<1x32xi1>, vector<1x32xi32>
    %560 = vector.broadcast %122 : vector<2x1xi32> to vector<2x32xi32>
    %561 = vector.broadcast %559 : vector<1x32xi32> to vector<2x32xi32>
    %562 = arith.cmpi sgt, %560, %561 : vector<2x32xi32>
    %563 = arith.select %562, %556, %529 : vector<2x32xi1>, vector<2x32xf32>
    %564 = arith.select %562, %554, %530 : vector<2x32xi1>, vector<2x32xf32>
    %cst_242 = arith.constant 0.000000e+00 : f32
    %565 = vector.broadcast %cst_242 : f32 to vector<2x32xf32>
    %566 = arith.select %562, %556, %565 : vector<2x32xi1>, vector<2x32xf32>
    %567 = vector.extract_strided_slice %566 {offsets = [0, 0], sizes = [2, 16], strides = [1, 1]} : vector<2x32xf32> to vector<2x16xf32>
    %c24_243 = arith.constant 24 : index
    %c0_244 = arith.constant 0 : index
    %568 = vector.load %arg7[%c24_243, %c0_244] : memref<32x32xf32, #tpu.memory_space<vmem>>, vector<2x16xf32>
    tpu.vector_store %arg7[%c24_243, %c0_244], %567 {strides = array<i32>} : memref<32x32xf32, #tpu.memory_space<vmem>>, vector<2x16xf32>,
    %569 = vector.extract_strided_slice %566 {offsets = [0, 16], sizes = [2, 16], strides = [1, 1]} : vector<2x32xf32> to vector<2x16xf32>
    %c6_245 = arith.constant 6 : index
    %c16_246 = arith.constant 16 : index
    %570 = vector.load %arg7[%c6_245, %c16_246] : memref<32x32xf32, #tpu.memory_space<vmem>>, vector<2x16xf32>
    tpu.vector_store %arg7[%c6_245, %c16_246], %569 {strides = array<i32>} : memref<32x32xf32, #tpu.memory_space<vmem>>, vector<2x16xf32>,
    %c26_247 = arith.constant 26 : index
    %c0_248 = arith.constant 0 : index
    %571 = vector.load %arg10[%c26_247, %c0_248] : memref<32x128xf32, #tpu.memory_space<vmem>>, vector<2x128xf32>
    %572 = arith.truncf %563 : vector<2x32xf32> to vector<2x32xbf16>
    %cst_249 = arith.constant dense<0.000000e+00> : vector<2x128xf32>
    %573 = tpu.matmul %572, %123, %cst_249 {dimension_numbers = #tpu.dot_dimension_numbers<[1], [0], [0], [1], [0, 0, 1, 1], [], []>} : vector<2x32xbf16>, vector<32x128xbf16>, vector<2x128xf32> -> vector<2x128xf32>
    %574 = arith.addf %571, %573 : vector<2x128xf32>
    %575 = vector.extract_strided_slice %574 {offsets = [0, 0], sizes = [2, 96], strides = [1, 1]} : vector<2x128xf32> to vector<2x96xf32>
    %576 = arith.negf %575 : vector<2x96xf32>
    %577 = math.exp %576 : vector<2x96xf32>
    %cst_250 = arith.constant 1.000000e+00 : f32
    %578 = vector.broadcast %cst_250 : f32 to vector<2x96xf32>
    %579 = arith.addf %578, %577 : vector<2x96xf32>
    %580 = arith.divf %578, %579 : vector<2x96xf32>
    %581 = vector.extract_strided_slice %574 {offsets = [0, 96], sizes = [2, 32], strides = [1, 1]} : vector<2x128xf32> to vector<2x32xf32>
    %582 = math.tanh %581 : vector<2x32xf32>
    %583 = vector.extract_strided_slice %580 {offsets = [0, 0], sizes = [2, 32], strides = [1, 1]} : vector<2x96xf32> to vector<2x32xf32>
    %584 = vector.extract_strided_slice %580 {offsets = [0, 32], sizes = [2, 32], strides = [1, 1]} : vector<2x96xf32> to vector<2x32xf32>
    %585 = vector.extract_strided_slice %580 {offsets = [0, 64], sizes = [2, 32], strides = [1, 1]} : vector<2x96xf32> to vector<2x32xf32>
    %586 = arith.mulf %584, %564 : vector<2x32xf32>
    %587 = arith.mulf %583, %582 : vector<2x32xf32>
    %588 = arith.addf %586, %587 : vector<2x32xf32>
    %589 = math.tanh %588 : vector<2x32xf32>
    %590 = arith.mulf %585, %589 : vector<2x32xf32>
    %c13_i32_251 = arith.constant 13 : i32
    %c2_i32_252 = arith.constant 2 : i32
    %591 = vector.broadcast %c13_i32_251 : i32 to vector<1x32xi32>
    %592 = vector.broadcast %c2_i32_252 : i32 to vector<1x32xi32>
    %593 = arith.select %126, %591, %592 : vector<1x32xi1>, vector<1x32xi32>
    %594 = vector.broadcast %122 : vector<2x1xi32> to vector<2x32xi32>
    %595 = vector.broadcast %593 : vector<1x32xi32> to vector<2x32xi32>
    %596 = arith.cmpi sgt, %594, %595 : vector<2x32xi32>
    %597 = arith.select %596, %590, %563 : vector<2x32xi1>, vector<2x32xf32>
    %598 = arith.select %596, %588, %564 : vector<2x32xi1>, vector<2x32xf32>
    %cst_253 = arith.constant 0.000000e+00 : f32
    %599 = vector.broadcast %cst_253 : f32 to vector<2x32xf32>
    %600 = arith.select %596, %590, %599 : vector<2x32xi1>, vector<2x32xf32>
    %601 = vector.extract_strided_slice %600 {offsets = [0, 0], sizes = [2, 16], strides = [1, 1]} : vector<2x32xf32> to vector<2x16xf32>
    %c26_254 = arith.constant 26 : index
    %c0_255 = arith.constant 0 : index
    %602 = vector.load %arg7[%c26_254, %c0_255] : memref<32x32xf32, #tpu.memory_space<vmem>>, vector<2x16xf32>
    tpu.vector_store %arg7[%c26_254, %c0_255], %601 {strides = array<i32>} : memref<32x32xf32, #tpu.memory_space<vmem>>, vector<2x16xf32>,
    %603 = vector.extract_strided_slice %600 {offsets = [0, 16], sizes = [2, 16], strides = [1, 1]} : vector<2x32xf32> to vector<2x16xf32>
    %c4_256 = arith.constant 4 : index
    %c16_257 = arith.constant 16 : index
    %604 = vector.load %arg7[%c4_256, %c16_257] : memref<32x32xf32, #tpu.memory_space<vmem>>, vector<2x16xf32>
    tpu.vector_store %arg7[%c4_256, %c16_257], %603 {strides = array<i32>} : memref<32x32xf32, #tpu.memory_space<vmem>>, vector<2x16xf32>,
    %c28_258 = arith.constant 28 : index
    %c0_259 = arith.constant 0 : index
    %605 = vector.load %arg10[%c28_258, %c0_259] : memref<32x128xf32, #tpu.memory_space<vmem>>, vector<2x128xf32>
    %606 = arith.truncf %597 : vector<2x32xf32> to vector<2x32xbf16>
    %cst_260 = arith.constant dense<0.000000e+00> : vector<2x128xf32>
    %607 = tpu.matmul %606, %123, %cst_260 {dimension_numbers = #tpu.dot_dimension_numbers<[1], [0], [0], [1], [0, 0, 1, 1], [], []>} : vector<2x32xbf16>, vector<32x128xbf16>, vector<2x128xf32> -> vector<2x128xf32>
    %608 = arith.addf %605, %607 : vector<2x128xf32>
    %609 = vector.extract_strided_slice %608 {offsets = [0, 0], sizes = [2, 96], strides = [1, 1]} : vector<2x128xf32> to vector<2x96xf32>
    %610 = arith.negf %609 : vector<2x96xf32>
    %611 = math.exp %610 : vector<2x96xf32>
    %cst_261 = arith.constant 1.000000e+00 : f32
    %612 = vector.broadcast %cst_261 : f32 to vector<2x96xf32>
    %613 = arith.addf %612, %611 : vector<2x96xf32>
    %614 = arith.divf %612, %613 : vector<2x96xf32>
    %615 = vector.extract_strided_slice %608 {offsets = [0, 96], sizes = [2, 32], strides = [1, 1]} : vector<2x128xf32> to vector<2x32xf32>
    %616 = math.tanh %615 : vector<2x32xf32>
    %617 = vector.extract_strided_slice %614 {offsets = [0, 0], sizes = [2, 32], strides = [1, 1]} : vector<2x96xf32> to vector<2x32xf32>
    %618 = vector.extract_strided_slice %614 {offsets = [0, 32], sizes = [2, 32], strides = [1, 1]} : vector<2x96xf32> to vector<2x32xf32>
    %619 = vector.extract_strided_slice %614 {offsets = [0, 64], sizes = [2, 32], strides = [1, 1]} : vector<2x96xf32> to vector<2x32xf32>
    %620 = arith.mulf %618, %598 : vector<2x32xf32>
    %621 = arith.mulf %617, %616 : vector<2x32xf32>
    %622 = arith.addf %620, %621 : vector<2x32xf32>
    %623 = math.tanh %622 : vector<2x32xf32>
    %624 = arith.mulf %619, %623 : vector<2x32xf32>
    %c14_i32_262 = arith.constant 14 : i32
    %c1_i32_263 = arith.constant 1 : i32
    %625 = vector.broadcast %c14_i32_262 : i32 to vector<1x32xi32>
    %626 = vector.broadcast %c1_i32_263 : i32 to vector<1x32xi32>
    %627 = arith.select %126, %625, %626 : vector<1x32xi1>, vector<1x32xi32>
    %628 = vector.broadcast %122 : vector<2x1xi32> to vector<2x32xi32>
    %629 = vector.broadcast %627 : vector<1x32xi32> to vector<2x32xi32>
    %630 = arith.cmpi sgt, %628, %629 : vector<2x32xi32>
    %631 = arith.select %630, %624, %597 : vector<2x32xi1>, vector<2x32xf32>
    %632 = arith.select %630, %622, %598 : vector<2x32xi1>, vector<2x32xf32>
    %cst_264 = arith.constant 0.000000e+00 : f32
    %633 = vector.broadcast %cst_264 : f32 to vector<2x32xf32>
    %634 = arith.select %630, %624, %633 : vector<2x32xi1>, vector<2x32xf32>
    %635 = vector.extract_strided_slice %634 {offsets = [0, 0], sizes = [2, 16], strides = [1, 1]} : vector<2x32xf32> to vector<2x16xf32>
    %c28_265 = arith.constant 28 : index
    %c0_266 = arith.constant 0 : index
    %636 = vector.load %arg7[%c28_265, %c0_266] : memref<32x32xf32, #tpu.memory_space<vmem>>, vector<2x16xf32>
    tpu.vector_store %arg7[%c28_265, %c0_266], %635 {strides = array<i32>} : memref<32x32xf32, #tpu.memory_space<vmem>>, vector<2x16xf32>,
    %637 = vector.extract_strided_slice %634 {offsets = [0, 16], sizes = [2, 16], strides = [1, 1]} : vector<2x32xf32> to vector<2x16xf32>
    %c2_267 = arith.constant 2 : index
    %c16_268 = arith.constant 16 : index
    %638 = vector.load %arg7[%c2_267, %c16_268] : memref<32x32xf32, #tpu.memory_space<vmem>>, vector<2x16xf32>
    tpu.vector_store %arg7[%c2_267, %c16_268], %637 {strides = array<i32>} : memref<32x32xf32, #tpu.memory_space<vmem>>, vector<2x16xf32>,
    %c30_269 = arith.constant 30 : index
    %c0_270 = arith.constant 0 : index
    %639 = vector.load %arg10[%c30_269, %c0_270] : memref<32x128xf32, #tpu.memory_space<vmem>>, vector<2x128xf32>
    %640 = arith.truncf %631 : vector<2x32xf32> to vector<2x32xbf16>
    %cst_271 = arith.constant dense<0.000000e+00> : vector<2x128xf32>
    %641 = tpu.matmul %640, %123, %cst_271 {dimension_numbers = #tpu.dot_dimension_numbers<[1], [0], [0], [1], [0, 0, 1, 1], [], []>} : vector<2x32xbf16>, vector<32x128xbf16>, vector<2x128xf32> -> vector<2x128xf32>
    %642 = arith.addf %639, %641 : vector<2x128xf32>
    %643 = vector.extract_strided_slice %642 {offsets = [0, 0], sizes = [2, 96], strides = [1, 1]} : vector<2x128xf32> to vector<2x96xf32>
    %644 = arith.negf %643 : vector<2x96xf32>
    %645 = math.exp %644 : vector<2x96xf32>
    %cst_272 = arith.constant 1.000000e+00 : f32
    %646 = vector.broadcast %cst_272 : f32 to vector<2x96xf32>
    %647 = arith.addf %646, %645 : vector<2x96xf32>
    %648 = arith.divf %646, %647 : vector<2x96xf32>
    %649 = vector.extract_strided_slice %642 {offsets = [0, 96], sizes = [2, 32], strides = [1, 1]} : vector<2x128xf32> to vector<2x32xf32>
    %650 = math.tanh %649 : vector<2x32xf32>
    %651 = vector.extract_strided_slice %648 {offsets = [0, 0], sizes = [2, 32], strides = [1, 1]} : vector<2x96xf32> to vector<2x32xf32>
    %652 = vector.extract_strided_slice %648 {offsets = [0, 32], sizes = [2, 32], strides = [1, 1]} : vector<2x96xf32> to vector<2x32xf32>
    %653 = vector.extract_strided_slice %648 {offsets = [0, 64], sizes = [2, 32], strides = [1, 1]} : vector<2x96xf32> to vector<2x32xf32>
    %654 = arith.mulf %652, %632 : vector<2x32xf32>
    %655 = arith.mulf %651, %650 : vector<2x32xf32>
    %656 = arith.addf %654, %655 : vector<2x32xf32>
    %657 = math.tanh %656 : vector<2x32xf32>
    %658 = arith.mulf %653, %657 : vector<2x32xf32>
    %c15_i32_273 = arith.constant 15 : i32
    %c0_i32_274 = arith.constant 0 : i32
    %659 = vector.broadcast %c15_i32_273 : i32 to vector<1x32xi32>
    %660 = vector.broadcast %c0_i32_274 : i32 to vector<1x32xi32>
    %661 = arith.select %126, %659, %660 : vector<1x32xi1>, vector<1x32xi32>
    %662 = vector.broadcast %122 : vector<2x1xi32> to vector<2x32xi32>
    %663 = vector.broadcast %661 : vector<1x32xi32> to vector<2x32xi32>
    %664 = arith.cmpi sgt, %662, %663 : vector<2x32xi32>
    %cst_275 = arith.constant 0.000000e+00 : f32
    %665 = vector.broadcast %cst_275 : f32 to vector<2x32xf32>
    %666 = arith.select %664, %658, %665 : vector<2x32xi1>, vector<2x32xf32>
    %667 = vector.extract_strided_slice %666 {offsets = [0, 0], sizes = [2, 16], strides = [1, 1]} : vector<2x32xf32> to vector<2x16xf32>
    %c30_276 = arith.constant 30 : index
    %c0_277 = arith.constant 0 : index
    %668 = vector.load %arg7[%c30_276, %c0_277] : memref<32x32xf32, #tpu.memory_space<vmem>>, vector<2x16xf32>
    tpu.vector_store %arg7[%c30_276, %c0_277], %667 {strides = array<i32>} : memref<32x32xf32, #tpu.memory_space<vmem>>, vector<2x16xf32>,
    %669 = vector.extract_strided_slice %666 {offsets = [0, 16], sizes = [2, 16], strides = [1, 1]} : vector<2x32xf32> to vector<2x16xf32>
    %c0_278 = arith.constant 0 : index
    %c16_279 = arith.constant 16 : index
    %670 = vector.load %arg7[%c0_278, %c16_279] : memref<32x32xf32, #tpu.memory_space<vmem>>, vector<2x16xf32>
    tpu.vector_store %arg7[%c0_278, %c16_279], %669 {strides = array<i32>} : memref<32x32xf32, #tpu.memory_space<vmem>>, vector<2x16xf32>,
    return
  }
}

</mosaic_0001>

<llo_original>
// kernel: text_encoder_forward.1
$region0: #{text_encoder_forward.1}
  #allocation0 [shape = 'u32[]', space=smem, size = 0x4, offset = 0x4, fixed_abs, tag = 'smem constant byte address 0x4 - core index']
  #allocation1 [shape = 'u32[144,128]{1,0:T(1,128)}', space=vmem, size = 0x12000, scoped, tag = 'internal scratch']
  #allocation2 [shape = 'f32[40,32]{1,0:T(8,128)}', space=vmem, size = 0x5000, scoped, tag = 'scratch operand']
  #allocation3 [shape = 'f32[32,64]{1,0:T(8,128)}', space=vmem, size = 0x4000, scoped, tag = 'scratch operand']
  #allocation4 [shape = 'f32[32,128]{1,0:T(8,128)}', space=vmem, size = 0x4000, scoped, tag = 'scratch operand']
  %s0 = inlined_call_operand.vmem [shape: f32[32,32], index: 0, kind: input, shape index: {}]
  %s1 = inlined_call_operand.vmem [shape: s32[2,1], index: 1, kind: input, shape index: {}]
  %s2 = inlined_call_operand.vmem [shape: bf16[2,5,32,32], index: 2, kind: input, shape index: {}]
  %s3 = inlined_call_operand.vmem [shape: f32[2,1,32], index: 3, kind: input, shape index: {}]
  %s4 = inlined_call_operand.vmem [shape: bf16[64,128], index: 4, kind: input, shape index: {}]
  %s5 = inlined_call_operand.vmem [shape: f32[1,128], index: 5, kind: input, shape index: {}]
  %s6 = inlined_call_operand.vmem [shape: bf16[32,128], index: 6, kind: input, shape index: {}]
  %s7 = inlined_call_operand.vmem [shape: f32[32,32], index: 7, kind: output, shape index: {}]
  %s8 = sld [smem:[#allocation0]]
  $region38: #{text_encoder_forward.1} parent=0
    _
  %s10 = ssub.s32 1, %s8
  %s11 = scalar_select 0, %s10, %s8
  // Predicated region
  $region2: #{text_encoder_forward.1} parent=0 // pred_check
    _
  $region3: #{text_encoder_forward.1} parent=0 // pred_check_branch
    %13 = sbr.rel (0) target = $region5
  $region4: #{text_encoder_forward.1} parent=0 // pred_region
    _
  $region5: #{text_encoder_forward.1} parent=0 // pred_fallthru
    _
  // Predicated region
  $region6: #{text_encoder_forward.1} parent=0 // pred_check
    _
  $region7: #{text_encoder_forward.1} parent=0 // pred_check_branch
    %15 = sbr.rel (0) target = $region9
  $region8: #{text_encoder_forward.1} parent=0 // pred_region
    _
  $region9: #{text_encoder_forward.1} parent=0 // pred_fallthru
    _
  // Predicated region
  $region10: #{text_encoder_forward.1} parent=0 // pred_check
    _
  $region11: #{text_encoder_forward.1} parent=0 // pred_check_branch
    %17 = sbr.rel (0) target = $region13
  $region12: #{text_encoder_forward.1} parent=0 // pred_region
    _
  $region13: #{text_encoder_forward.1} parent=0 // pred_fallthru
    _
  // Predicated region
  $region14: #{text_encoder_forward.1} parent=0 // pred_check
    _
  $region15: #{text_encoder_forward.1} parent=0 // pred_check_branch
    %19 = sbr.rel (0) target = $region17
  $region16: #{text_encoder_forward.1} parent=0 // pred_region
    _
  $region17: #{text_encoder_forward.1} parent=0 // pred_fallthru
    _
  // Predicated region
  $region18: #{text_encoder_forward.1} parent=0 // pred_check
    _
  $region19: #{text_encoder_forward.1} parent=0 // pred_check_branch
    %21 = sbr.rel (0) target = $region21
  $region20: #{text_encoder_forward.1} parent=0 // pred_region
    _
  $region21: #{text_encoder_forward.1} parent=0 // pred_fallthru
    _
  // Predicated region
  $region22: #{text_encoder_forward.1} parent=0 // pred_check
    _
  $region23: #{text_encoder_forward.1} parent=0 // pred_check_branch
    %23 = sbr.rel (0) target = $region25
  $region24: #{text_encoder_forward.1} parent=0 // pred_region
    _
  $region25: #{text_encoder_forward.1} parent=0 // pred_fallthru
    _
  // Predicated region
  $region26: #{text_encoder_forward.1} parent=0 // pred_check
    _
  $region27: #{text_encoder_forward.1} parent=0 // pred_check_branch
    %25 = sbr.rel (0) target = $region29
  $region28: #{text_encoder_forward.1} parent=0 // pred_region
    _
  $region29: #{text_encoder_forward.1} parent=0 // pred_fallthru
    _
  %vm27 = vcmask 257024
  %28 = vst.msk [vmem:[#allocation2] sm:$0xf] %vm27, 0.0
  %29 = vst.msk [vmem:[#allocation2 + $0x24] sm:$0xf] %vm27, 0.0
  %v30 = vld [vmem:[%s0] sm:$0xff]
  %v31 = vld [vmem:[%s0 + $0x8] sm:$0xff]
  %v32 = vld [vmem:[%s0 + $0x10] sm:$0xff]
  %v33 = vld [vmem:[%s0 + $0x18] sm:$0xff]
  %vm34 = vcmask 261120
  %35 = vst.msk [vmem:[#allocation2 + $0x4] sm:$0xff] %vm34, %v30
  %36 = vst.msk [vmem:[#allocation2 + $0xc] sm:$0xff] %vm34, %v31
  %37 = vst.msk [vmem:[#allocation2 + $0x14] sm:$0xff] %vm34, %v32
  %38 = vst.msk [vmem:[#allocation2 + $0x1c] sm:$0xff] %vm34, %v33
  %v39 = vld [vmem:[#allocation2] sm:$0xff]
  %v40 = vld [vmem:[#allocation2 + $0x8] sm:$0xff]
  %v41 = vld [vmem:[#allocation2 + $0x10] sm:$0xff]
  %v42 = vld [vmem:[#allocation2 + $0x18] sm:$0xff]
  %v43 = vpack.c.bf16 %v40, %v39
  %v44 = vpack.c.bf16 %v42, %v41
  %v45 = vld [vmem:[%s2] sm:$0xf]
  %v46 = vld [vmem:[%s2 + $0x4] sm:$0xf]
  %v47 = vld [vmem:[%s2 + $0x8] sm:$0xf]
  %v48 = vld [vmem:[%s2 + $0xc] sm:$0xf]
  %v49 = vld [vmem:[#allocation2 + $0x2] sm:$0xff]
  %v50 = vld [vmem:[#allocation2 + $0xa] sm:$0xff]
  %v51 = vld [vmem:[#allocation2 + $0x12] sm:$0xff]
  %v52 = vld [vmem:[#allocation2 + $0x1a] sm:$0xff]
  %v53 = vpack.c.bf16 %v50, %v49
  %v54 = vpack.c.bf16 %v52, %v51
  %s55 = scalar_lea.vmem %s2, 16
  %v56 = vld [vmem:[%s55] sm:$0xf]
  %v57 = vld [vmem:[%s55 + $0x4] sm:$0xf]
  %v58 = vld [vmem:[%s55 + $0x8] sm:$0xf]
  %v59 = vld [vmem:[%s55 + $0xc] sm:$0xf]
  %v64 = vunpack.c.l.b16 %v56
  %v65 = vunpack.c.l.b16 %v57
  %v66 = vunpack.c.l.b16 %v58
  %v67 = vunpack.c.l.b16 %v59
  %v68 = vpack.c.b16 %v65, %v64
  %v69 = vpack.c.b16 %v67, %v66
  %v73 = vsel %vm34, %v53, 0
  %v76 = vsel %vm34, %v54, 0
  %78 = vmatprep.subr.bf16.mxu0 0
  %79 = vmatpush1.bf16.msra.mxu0 %v68
  %80 = vmatprep.subr.bf16.mxu0 0
  %81 = vmatpush1.bf16.msra.mxu0 %v69
  %82 = vmatprep.subr.bf16.mxu0 0
  %83 = vmatpush1.bf16.msra.mxu0 0
  %84 = vmatprep.subr.bf16.mxu0 0
  %85 = vmatpush1.bf16.msra.mxu0 0
  %86 = vmatprep.subr.bf16.mxu0 0
  %87 = vmatpush1.bf16.msra.mxu0 0
  %88 = vmatprep.subr.bf16.mxu0 0
  %89 = vmatpush1.bf16.msra.mxu0 0
  %90 = vmatprep.subr.bf16.mxu0 0
  %91 = vmatpush1.bf16.msra.mxu0 0
  %92 = vmatprep.subr.bf16.mxu0 0
  %93 = vmatpush1.bf16.msra.mxu0 0
  %94 = vmatprep.subr.bf16.mxu0 0
  %95 = vmatpush1.bf16.msra.mxu0 0
  %96 = vmatprep.subr.bf16.mxu0 0
  %97 = vmatpush1.bf16.msra.mxu0 0
  %98 = vmatprep.subr.bf16.mxu0 0
  %99 = vmatpush1.bf16.msra.mxu0 0
  %100 = vmatprep.subr.bf16.mxu0 0
  %101 = vmatpush1.bf16.msra.mxu0 0
  %102 = vmatprep.subr.bf16.mxu0 0
  %103 = vmatpush1.bf16.msra.mxu0 0
  %104 = vmatprep.subr.bf16.mxu0 0
  %105 = vmatpush1.bf16.msra.mxu0 0
  %106 = vmatprep.subr.bf16.mxu0 0
  %107 = vmatpush1.bf16.msra.mxu0 0
  %108 = vmatprep.subr.bf16.mxu0 0
  %109 = vmatpush1.bf16.msra.mxu0 0
  %110 = vmatprep.mubr.bf16.mxu0 0
  %111 = vmatmul.mubr.bf16.gmra.mrb[0].mxu0 %v73
  %v112 = vpop.f32.mrb[0].mxu0
  %v113 = vadd.f32 0.0, %v112
  %v114 = vpop.f32.mrb[0].mxu0
  %v115 = vpop.f32.mrb[0].mxu0
  %v116 = vadd.f32 0.0, %v115
  %v117 = vpop.f32.mrb[0].mxu0
  %118 = vmatprep.mubr.bf16.mxu0 0
  %119 = vmatmul.mubr.bf16.gmra.mrb[0].mxu0 %v76
  %v120 = vpop.f32.mrb[0].mxu0
  %v121 = vadd.f32 0.0, %v120
  %v122 = vpop.f32.mrb[0].mxu0
  %v123 = vpop.f32.mrb[0].mxu0
  %v124 = vadd.f32 0.0, %v123
  %v125 = vpop.f32.mrb[0].mxu0
  %126 = vdwg.mxu0
  %v131 = vunpack.c.l.b16 %v45
  %v132 = vunpack.c.l.b16 %v46
  %v133 = vunpack.c.l.b16 %v47
  %v134 = vunpack.c.l.b16 %v48
  %v135 = vpack.c.b16 %v132, %v131
  %v136 = vpack.c.b16 %v134, %v133
  %v140 = vsel %vm34, %v43, 0
  %v143 = vsel %vm34, %v44, 0
  %145 = vmatprep.subr.bf16.mxu0 0
  %146 = vmatpush1.bf16.msra.mxu0 %v135
  %147 = vmatprep.subr.bf16.mxu0 0
  %148 = vmatpush1.bf16.msra.mxu0 %v136
  %149 = vmatprep.subr.bf16.mxu0 0
  %150 = vmatpush1.bf16.msra.mxu0 0
  %151 = vmatprep.subr.bf16.mxu0 0
  %152 = vmatpush1.bf16.msra.mxu0 0
  %153 = vmatprep.subr.bf16.mxu0 0
  %154 = vmatpush1.bf16.msra.mxu0 0
  %155 = vmatprep.subr.bf16.mxu0 0
  %156 = vmatpush1.bf16.msra.mxu0 0
  %157 = vmatprep.subr.bf16.mxu0 0
  %158 = vmatpush1.bf16.msra.mxu0 0
  %159 = vmatprep.subr.bf16.mxu0 0
  %160 = vmatpush1.bf16.msra.mxu0 0
  %161 = vmatprep.subr.bf16.mxu0 0
  %162 = vmatpush1.bf16.msra.mxu0 0
  %163 = vmatprep.subr.bf16.mxu0 0
  %164 = vmatpush1.bf16.msra.mxu0 0
  %165 = vmatprep.subr.bf16.mxu0 0
  %166 = vmatpush1.bf16.msra.mxu0 0
  %167 = vmatprep.subr.bf16.mxu0 0
  %168 = vmatpush1.bf16.msra.mxu0 0
  %169 = vmatprep.subr.bf16.mxu0 0
  %170 = vmatpush1.bf16.msra.mxu0 0
  %171 = vmatprep.subr.bf16.mxu0 0
  %172 = vmatpush1.bf16.msra.mxu0 0
  %173 = vmatprep.subr.bf16.mxu0 0
  %174 = vmatpush1.bf16.msra.mxu0 0
  %175 = vmatprep.subr.bf16.mxu0 0
  %176 = vmatpush1.bf16.msra.mxu0 0
  %177 = vmatprep.mubr.bf16.mxu0 0
  %178 = vmatmul.mubr.bf16.gmra.mrb[0].mxu0 %v140
  %v179 = vpop.f32.mrb[0].mxu0
  %v180 = vadd.f32 %v113, %v179
  %v181 = vpop.f32.mrb[0].mxu0
  %v182 = vpop.f32.mrb[0].mxu0
  %v183 = vadd.f32 %v116, %v182
  %v184 = vpop.f32.mrb[0].mxu0
  %185 = vmatprep.mubr.bf16.mxu0 0
  %186 = vmatmul.mubr.bf16.gmra.mrb[0].mxu0 %v143
  %v187 = vpop.f32.mrb[0].mxu0
  %v188 = vadd.f32 %v121, %v187
  %v189 = vpop.f32.mrb[0].mxu0
  %v190 = vpop.f32.mrb[0].mxu0
  %v191 = vadd.f32 %v124, %v190
  %v192 = vpop.f32.mrb[0].mxu0
  %193 = vdwg.mxu0
  %v194 = vld [vmem:[#allocation2 + $0x4] sm:$0xff]
  %v195 = vld [vmem:[#allocation2 + $0xc] sm:$0xff]
  %v196 = vld [vmem:[#allocation2 + $0x14] sm:$0xff]
  %v197 = vld [vmem:[#allocation2 + $0x1c] sm:$0xff]
  %v198 = vpack.c.bf16 %v195, %v194
  %v199 = vpack.c.bf16 %v197, %v196
  %s200 = scalar_lea.vmem %s2, 32
  %v201 = vld [vmem:[%s200] sm:$0xf]
  %v202 = vld [vmem:[%s200 + $0x4] sm:$0xf]
  %v203 = vld [vmem:[%s200 + $0x8] sm:$0xf]
  %v204 = vld [vmem:[%s200 + $0xc] sm:$0xf]
  %v209 = vunpack.c.l.b16 %v201
  %v210 = vunpack.c.l.b16 %v202
  %v211 = vunpack.c.l.b16 %v203
  %v212 = vunpack.c.l.b16 %v204
  %v213 = vpack.c.b16 %v210, %v209
  %v214 = vpack.c.b16 %v212, %v211
  %v218 = vsel %vm34, %v198, 0
  %v221 = vsel %vm34, %v199, 0
  %223 = vmatprep.subr.bf16.mxu0 0
  %224 = vmatpush1.bf16.msra.mxu0 %v213
  %225 = vmatprep.subr.bf16.mxu0 0
  %226 = vmatpush1.bf16.msra.mxu0 %v214
  %227 = vmatprep.subr.bf16.mxu0 0
  %228 = vmatpush1.bf16.msra.mxu0 0
  %229 = vmatprep.subr.bf16.mxu0 0
  %230 = vmatpush1.bf16.msra.mxu0 0
  %231 = vmatprep.subr.bf16.mxu0 0
  %232 = vmatpush1.bf16.msra.mxu0 0
  %233 = vmatprep.subr.bf16.mxu0 0
  %234 = vmatpush1.bf16.msra.mxu0 0
  %235 = vmatprep.subr.bf16.mxu0 0
  %236 = vmatpush1.bf16.msra.mxu0 0
  %237 = vmatprep.subr.bf16.mxu0 0
  %238 = vmatpush1.bf16.msra.mxu0 0
  %239 = vmatprep.subr.bf16.mxu0 0
  %240 = vmatpush1.bf16.msra.mxu0 0
  %241 = vmatprep.subr.bf16.mxu0 0
  %242 = vmatpush1.bf16.msra.mxu0 0
  %243 = vmatprep.subr.bf16.mxu0 0
  %244 = vmatpush1.bf16.msra.mxu0 0
  %245 = vmatprep.subr.bf16.mxu0 0
  %246 = vmatpush1.bf16.msra.mxu0 0
  %247 = vmatprep.subr.bf16.mxu0 0
  %248 = vmatpush1.bf16.msra.mxu0 0
  %249 = vmatprep.subr.bf16.mxu0 0
  %250 = vmatpush1.bf16.msra.mxu0 0
  %251 = vmatprep.subr.bf16.mxu0 0
  %252 = vmatpush1.bf16.msra.mxu0 0
  %253 = vmatprep.subr.bf16.mxu0 0
  %254 = vmatpush1.bf16.msra.mxu0 0
  %255 = vmatprep.mubr.bf16.mxu0 0
  %256 = vmatmul.mubr.bf16.gmra.mrb[0].mxu0 %v218
  %v257 = vpop.f32.mrb[0].mxu0
  %v258 = vadd.f32 0.0, %v257
  %v259 = vpop.f32.mrb[0].mxu0
  %v260 = vpop.f32.mrb[0].mxu0
  %v261 = vadd.f32 0.0, %v260
  %v262 = vpop.f32.mrb[0].mxu0
  %263 = vmatprep.mubr.bf16.mxu0 0
  %264 = vmatmul.mubr.bf16.gmra.mrb[0].mxu0 %v221
  %v265 = vpop.f32.mrb[0].mxu0
  %v266 = vadd.f32 0.0, %v265
  %v267 = vpop.f32.mrb[0].mxu0
  %v268 = vpop.f32.mrb[0].mxu0
  %v269 = vadd.f32 0.0, %v268
  %v270 = vpop.f32.mrb[0].mxu0
  %271 = vdwg.mxu0
  %v272 = vadd.f32 %v180, %v258
  %v273 = vadd.f32 %v183, %v261
  %v274 = vadd.f32 %v188, %v266
  %v275 = vadd.f32 %v191, %v269
  %v276 = vld [vmem:[#allocation2 + $0x6] sm:$0xff]
  %v277 = vld [vmem:[#allocation2 + $0xe] sm:$0xff]
  %v278 = vld [vmem:[#allocation2 + $0x16] sm:$0xff]
  %v279 = vld [vmem:[#allocation2 + $0x1e] sm:$0xff]
  %v280 = vpack.c.bf16 %v277, %v276
  %v281 = vpack.c.bf16 %v279, %v278
  %s282 = scalar_lea.vmem %s2, 48
  %v283 = vld [vmem:[%s282] sm:$0xf]
  %v284 = vld [vmem:[%s282 + $0x4] sm:$0xf]
  %v285 = vld [vmem:[%s282 + $0x8] sm:$0xf]
  %v286 = vld [vmem:[%s282 + $0xc] sm:$0xf]
  %v291 = vunpack.c.l.b16 %v283
  %v292 = vunpack.c.l.b16 %v284
  %v293 = vunpack.c.l.b16 %v285
  %v294 = vunpack.c.l.b16 %v286
  %v295 = vpack.c.b16 %v292, %v291
  %v296 = vpack.c.b16 %v294, %v293
  %v300 = vsel %vm34, %v280, 0
  %v303 = vsel %vm34, %v281, 0
  %305 = vmatprep.subr.bf16.mxu0 0
  %306 = vmatpush1.bf16.msra.mxu0 %v295
  %307 = vmatprep.subr.bf16.mxu0 0
  %308 = vmatpush1.bf16.msra.mxu0 %v296
  %309 = vmatprep.subr.bf16.mxu0 0
  %310 = vmatpush1.bf16.msra.mxu0 0
  %311 = vmatprep.subr.bf16.mxu0 0
  %312 = vmatpush1.bf16.msra.mxu0 0
  %313 = vmatprep.subr.bf16.mxu0 0
  %314 = vmatpush1.bf16.msra.mxu0 0
  %315 = vmatprep.subr.bf16.mxu0 0
  %316 = vmatpush1.bf16.msra.mxu0 0
  %317 = vmatprep.subr.bf16.mxu0 0
  %318 = vmatpush1.bf16.msra.mxu0 0
  %319 = vmatprep.subr.bf16.mxu0 0
  %320 = vmatpush1.bf16.msra.mxu0 0
  %321 = vmatprep.subr.bf16.mxu0 0
  %322 = vmatpush1.bf16.msra.mxu0 0
  %323 = vmatprep.subr.bf16.mxu0 0
  %324 = vmatpush1.bf16.msra.mxu0 0
  %325 = vmatprep.subr.bf16.mxu0 0
  %326 = vmatpush1.bf16.msra.mxu0 0
  %327 = vmatprep.subr.bf16.mxu0 0
  %328 = vmatpush1.bf16.msra.mxu0 0
  %329 = vmatprep.subr.bf16.mxu0 0
  %330 = vmatpush1.bf16.msra.mxu0 0
  %331 = vmatprep.subr.bf16.mxu0 0
  %332 = vmatpush1.bf16.msra.mxu0 0
  %333 = vmatprep.subr.bf16.mxu0 0
  %334 = vmatpush1.bf16.msra.mxu0 0
  %335 = vmatprep.subr.bf16.mxu0 0
  %336 = vmatpush1.bf16.msra.mxu0 0
  %337 = vmatprep.mubr.bf16.mxu0 0
  %338 = vmatmul.mubr.bf16.gmra.mrb[0].mxu0 %v300
  %v339 = vpop.f32.mrb[0].mxu0
  %v340 = vadd.f32 0.0, %v339
  %v341 = vpop.f32.mrb[0].mxu0
  %v342 = vpop.f32.mrb[0].mxu0
  %v343 = vadd.f32 0.0, %v342
  %v344 = vpop.f32.mrb[0].mxu0
  %345 = vmatprep.mubr.bf16.mxu0 0
  %346 = vmatmul.mubr.bf16.gmra.mrb[0].mxu0 %v303
  %v347 = vpop.f32.mrb[0].mxu0
  %v348 = vadd.f32 0.0, %v347
  %v349 = vpop.f32.mrb[0].mxu0
  %v350 = vpop.f32.mrb[0].mxu0
  %v351 = vadd.f32 0.0, %v350
  %v352 = vpop.f32.mrb[0].mxu0
  %353 = vdwg.mxu0
  %v354 = vadd.f32 %v272, %v340
  %v355 = vadd.f32 %v273, %v343
  %v356 = vadd.f32 %v274, %v348
  %v357 = vadd.f32 %v275, %v351
  %v358 = vld [vmem:[#allocation2 + $0x8] sm:$0xff]
  %v359 = vld [vmem:[#allocation2 + $0x10] sm:$0xff]
  %v360 = vld [vmem:[#allocation2 + $0x18] sm:$0xff]
  %v361 = vld [vmem:[#allocation2 + $0x20] sm:$0xff]
  %v362 = vpack.c.bf16 %v359, %v358
  %v363 = vpack.c.bf16 %v361, %v360
  %s364 = scalar_lea.vmem %s2, 64
  %v365 = vld [vmem:[%s364] sm:$0xf]
  %v366 = vld [vmem:[%s364 + $0x4] sm:$0xf]
  %v367 = vld [vmem:[%s364 + $0x8] sm:$0xf]
  %v368 = vld [vmem:[%s364 + $0xc] sm:$0xf]
  %v373 = vunpack.c.l.b16 %v365
  %v374 = vunpack.c.l.b16 %v366
  %v375 = vunpack.c.l.b16 %v367
  %v376 = vunpack.c.l.b16 %v368
  %v377 = vpack.c.b16 %v374, %v373
  %v378 = vpack.c.b16 %v376, %v375
  %v382 = vsel %vm34, %v362, 0
  %v385 = vsel %vm34, %v363, 0
  %387 = vmatprep.subr.bf16.mxu0 0
  %388 = vmatpush1.bf16.msra.mxu0 %v377
  %389 = vmatprep.subr.bf16.mxu0 0
  %390 = vmatpush1.bf16.msra.mxu0 %v378
  %391 = vmatprep.subr.bf16.mxu0 0
  %392 = vmatpush1.bf16.msra.mxu0 0
  %393 = vmatprep.subr.bf16.mxu0 0
  %394 = vmatpush1.bf16.msra.mxu0 0
  %395 = vmatprep.subr.bf16.mxu0 0
  %396 = vmatpush1.bf16.msra.mxu0 0
  %397 = vmatprep.subr.bf16.mxu0 0
  %398 = vmatpush1.bf16.msra.mxu0 0
  %399 = vmatprep.subr.bf16.mxu0 0
  %400 = vmatpush1.bf16.msra.mxu0 0
  %401 = vmatprep.subr.bf16.mxu0 0
  %402 = vmatpush1.bf16.msra.mxu0 0
  %403 = vmatprep.subr.bf16.mxu0 0
  %404 = vmatpush1.bf16.msra.mxu0 0
  %405 = vmatprep.subr.bf16.mxu0 0
  %406 = vmatpush1.bf16.msra.mxu0 0
  %407 = vmatprep.subr.bf16.mxu0 0
  %408 = vmatpush1.bf16.msra.mxu0 0
  %409 = vmatprep.subr.bf16.mxu0 0
  %410 = vmatpush1.bf16.msra.mxu0 0
  %411 = vmatprep.subr.bf16.mxu0 0
  %412 = vmatpush1.bf16.msra.mxu0 0
  %413 = vmatprep.subr.bf16.mxu0 0
  %414 = vmatpush1.bf16.msra.mxu0 0
  %415 = vmatprep.subr.bf16.mxu0 0
  %416 = vmatpush1.bf16.msra.mxu0 0
  %417 = vmatprep.subr.bf16.mxu0 0
  %418 = vmatpush1.bf16.msra.mxu0 0
  %419 = vmatprep.mubr.bf16.mxu0 0
  %420 = vmatmul.mubr.bf16.gmra.mrb[0].mxu0 %v382
  %v421 = vpop.f32.mrb[0].mxu0
  %v422 = vadd.f32 0.0, %v421
  %v423 = vpop.f32.mrb[0].mxu0
  %v424 = vpop.f32.mrb[0].mxu0
  %v425 = vadd.f32 0.0, %v424
  %v426 = vpop.f32.mrb[0].mxu0
  %427 = vmatprep.mubr.bf16.mxu0 0
  %428 = vmatmul.mubr.bf16.gmra.mrb[0].mxu0 %v385
  %v429 = vpop.f32.mrb[0].mxu0
  %v430 = vadd.f32 0.0, %v429
  %v431 = vpop.f32.mrb[0].mxu0
  %v432 = vpop.f32.mrb[0].mxu0
  %v433 = vadd.f32 0.0, %v432
  %v434 = vpop.f32.mrb[0].mxu0
  %435 = vdwg.mxu0
  %v436 = vadd.f32 %v354, %v422
  %v437 = vadd.f32 %v355, %v425
  %v438 = vadd.f32 %v356, %v430
  %v439 = vadd.f32 %v357, %v433
  %v440 = vld [vmem:[%s3] sm:$0x1]
  %v442 = vlaneseq
  %v443 = vshrl.u32 %v442, 7
  %v444 = vsub.s32 0, %v443
  %v445 = vrot.slane %v440, %v444
  %v447 = vadd.f32 %v436, %v445
  %v448 = vadd.f32 %v437, %v445
  %v449 = vadd.f32 %v438, %v445
  %v450 = vadd.f32 %v439, %v445
  %v451 = vmax.f32 %v447, 0.0
  %v452 = vmax.f32 %v448, 0.0
  %v453 = vmax.f32 %v449, 0.0
  %v454 = vmax.f32 %v450, 0.0
  %455 = vst.msk [vmem:[#allocation2 + $0x4] sm:$0xff] %vm34, %v451
  %456 = vst.msk [vmem:[#allocation2 + $0xc] sm:$0xff] %vm34, %v452
  %457 = vst.msk [vmem:[#allocation2 + $0x14] sm:$0xff] %vm34, %v453
  %458 = vst.msk [vmem:[#allocation2 + $0x1c] sm:$0xff] %vm34, %v454
  %v459 = vld [vmem:[#allocation2] sm:$0xff]
  %v460 = vld [vmem:[#allocation2 + $0x8] sm:$0xff]
  %v461 = vld [vmem:[#allocation2 + $0x10] sm:$0xff]
  %v462 = vld [vmem:[#allocation2 + $0x18] sm:$0xff]
  %v463 = vpack.c.bf16 %v460, %v459
  %v464 = vpack.c.bf16 %v462, %v461
  %s465 = scalar_lea.vmem %s2, 80
  %v466 = vld [vmem:[%s465] sm:$0xf]
  %v467 = vld [vmem:[%s465 + $0x4] sm:$0xf]
  %v468 = vld [vmem:[%s465 + $0x8] sm:$0xf]
  %v469 = vld [vmem:[%s465 + $0xc] sm:$0xf]
  %v470 = vld [vmem:[#allocation2 + $0x2] sm:$0xff]
  %v471 = vld [vmem:[#allocation2 + $0xa] sm:$0xff]
  %v472 = vld [vmem:[#allocation2 + $0x12] sm:$0xff]
  %v473 = vld [vmem:[#allocation2 + $0x1a] sm:$0xff]
  %v474 = vpack.c.bf16 %v471, %v470
  %v475 = vpack.c.bf16 %v473, %v472
  %s476 = scalar_lea.vmem %s2, 96
  %v477 = vld [vmem:[%s476] sm:$0xf]
  %v478 = vld [vmem:[%s476 + $0x4] sm:$0xf]
  %v479 = vld [vmem:[%s476 + $0x8] sm:$0xf]
  %v480 = vld [vmem:[%s476 + $0xc] sm:$0xf]
  %v485 = vunpack.c.l.b16 %v477
  %v486 = vunpack.c.l.b16 %v478
  %v487 = vunpack.c.l.b16 %v479
  %v488 = vunpack.c.l.b16 %v480
  %v489 = vpack.c.b16 %v486, %v485
  %v490 = vpack.c.b16 %v488, %v487
  %v494 = vsel %vm34, %v474, 0
  %v497 = vsel %vm34, %v475, 0
  %499 = vmatprep.subr.bf16.mxu0 0
  %500 = vmatpush1.bf16.msra.mxu0 %v489
  %501 = vmatprep.subr.bf16.mxu0 0
  %502 = vmatpush1.bf16.msra.mxu0 %v490
  %503 = vmatprep.subr.bf16.mxu0 0
  %504 = vmatpush1.bf16.msra.mxu0 0
  %505 = vmatprep.subr.bf16.mxu0 0
  %506 = vmatpush1.bf16.msra.mxu0 0
  %507 = vmatprep.subr.bf16.mxu0 0
  %508 = vmatpush1.bf16.msra.mxu0 0
  %509 = vmatprep.subr.bf16.mxu0 0
  %510 = vmatpush1.bf16.msra.mxu0 0
  %511 = vmatprep.subr.bf16.mxu0 0
  %512 = vmatpush1.bf16.msra.mxu0 0
  %513 = vmatprep.subr.bf16.mxu0 0
  %514 = vmatpush1.bf16.msra.mxu0 0
  %515 = vmatprep.subr.bf16.mxu0 0
  %516 = vmatpush1.bf16.msra.mxu0 0
  %517 = vmatprep.subr.bf16.mxu0 0
  %518 = vmatpush1.bf16.msra.mxu0 0
  %519 = vmatprep.subr.bf16.mxu0 0
  %520 = vmatpush1.bf16.msra.mxu0 0
  %521 = vmatprep.subr.bf16.mxu0 0
  %522 = vmatpush1.bf16.msra.mxu0 0
  %523 = vmatprep.subr.bf16.mxu0 0
  %524 = vmatpush1.bf16.msra.mxu0 0
  %525 = vmatprep.subr.bf16.mxu0 0
  %526 = vmatpush1.bf16.msra.mxu0 0
  %527 = vmatprep.subr.bf16.mxu0 0
  %528 = vmatpush1.bf16.msra.mxu0 0
  %529 = vmatprep.subr.bf16.mxu0 0
  %530 = vmatpush1.bf16.msra.mxu0 0
  %531 = vmatprep.mubr.bf16.mxu0 0
  %532 = vmatmul.mubr.bf16.gmra.mrb[0].mxu0 %v494
  %v533 = vpop.f32.mrb[0].mxu0
  %v534 = vadd.f32 0.0, %v533
  %v535 = vpop.f32.mrb[0].mxu0
  %v536 = vpop.f32.mrb[0].mxu0
  %v537 = vadd.f32 0.0, %v536
  %v538 = vpop.f32.mrb[0].mxu0
  %539 = vmatprep.mubr.bf16.mxu0 0
  %540 = vmatmul.mubr.bf16.gmra.mrb[0].mxu0 %v497
  %v541 = vpop.f32.mrb[0].mxu0
  %v542 = vadd.f32 0.0, %v541
  %v543 = vpop.f32.mrb[0].mxu0
  %v544 = vpop.f32.mrb[0].mxu0
  %v545 = vadd.f32 0.0, %v544
  %v546 = vpop.f32.mrb[0].mxu0
  %547 = vdwg.mxu0
  %v552 = vunpack.c.l.b16 %v466
  %v553 = vunpack.c.l.b16 %v467
  %v554 = vunpack.c.l.b16 %v468
  %v555 = vunpack.c.l.b16 %v469
  %v556 = vpack.c.b16 %v553, %v552
  %v557 = vpack.c.b16 %v555, %v554
  %v561 = vsel %vm34, %v463, 0
  %v564 = vsel %vm34, %v464, 0
  %566 = vmatprep.subr.bf16.mxu0 0
  %567 = vmatpush1.bf16.msra.mxu0 %v556
  %568 = vmatprep.subr.bf16.mxu0 0
  %569 = vmatpush1.bf16.msra.mxu0 %v557
  %570 = vmatprep.subr.bf16.mxu0 0
  %571 = vmatpush1.bf16.msra.mxu0 0
  %572 = vmatprep.subr.bf16.mxu0 0
  %573 = vmatpush1.bf16.msra.mxu0 0
  %574 = vmatprep.subr.bf16.mxu0 0
  %575 = vmatpush1.bf16.msra.mxu0 0
  %576 = vmatprep.subr.bf16.mxu0 0
  %577 = vmatpush1.bf16.msra.mxu0 0
  %578 = vmatprep.subr.bf16.mxu0 0
  %579 = vmatpush1.bf16.msra.mxu0 0
  %580 = vmatprep.subr.bf16.mxu0 0
  %581 = vmatpush1.bf16.msra.mxu0 0
  %582 = vmatprep.subr.bf16.mxu0 0
  %583 = vmatpush1.bf16.msra.mxu0 0
  %584 = vmatprep.subr.bf16.mxu0 0
  %585 = vmatpush1.bf16.msra.mxu0 0
  %586 = vmatprep.subr.bf16.mxu0 0
  %587 = vmatpush1.bf16.msra.mxu0 0
  %588 = vmatprep.subr.bf16.mxu0 0
  %589 = vmatpush1.bf16.msra.mxu0 0
  %590 = vmatprep.subr.bf16.mxu0 0
  %591 = vmatpush1.bf16.msra.mxu0 0
  %592 = vmatprep.subr.bf16.mxu0 0
  %593 = vmatpush1.bf16.msra.mxu0 0
  %594 = vmatprep.subr.bf16.mxu0 0
  %595 = vmatpush1.bf16.msra.mxu0 0
  %596 = vmatprep.subr.bf16.mxu0 0
  %597 = vmatpush1.bf16.msra.mxu0 0
  %598 = vmatprep.mubr.bf16.mxu0 0
  %599 = vmatmul.mubr.bf16.gmra.mrb[0].mxu0 %v561
  %v600 = vpop.f32.mrb[0].mxu0
  %v601 = vadd.f32 %v534, %v600
  %v602 = vpop.f32.mrb[0].mxu0
  %v603 = vpop.f32.mrb[0].mxu0
  %v604 = vadd.f32 %v537, %v603
  %v605 = vpop.f32.mrb[0].mxu0
  %606 = vmatprep.mubr.bf16.mxu0 0
  %607 = vmatmul.mubr.bf16.gmra.mrb[0].mxu0 %v564
  %v608 = vpop.f32.mrb[0].mxu0
  %v609 = vadd.f32 %v542, %v608
  %v610 = vpop.f32.mrb[0].mxu0
  %v611 = vpop.f32.mrb[0].mxu0
  %v612 = vadd.f32 %v545, %v611
  %v613 = vpop.f32.mrb[0].mxu0
  %614 = vdwg.mxu0
  %v615 = vld [vmem:[#allocation2 + $0x4] sm:$0xff]
  %v616 = vld [vmem:[#allocation2 + $0xc] sm:$0xff]
  %v617 = vld [vmem:[#allocation2 + $0x14] sm:$0xff]
  %v618 = vld [vmem:[#allocation2 + $0x1c] sm:$0xff]
  %v619 = vpack.c.bf16 %v616, %v615
  %v620 = vpack.c.bf16 %v618, %v617
  %s621 = scalar_lea.vmem %s2, 112
  %v622 = vld [vmem:[%s621] sm:$0xf]
  %v623 = vld [vmem:[%s621 + $0x4] sm:$0xf]
  %v624 = vld [vmem:[%s621 + $0x8] sm:$0xf]
  %v625 = vld [vmem:[%s621 + $0xc] sm:$0xf]
  %v630 = vunpack.c.l.b16 %v622
  %v631 = vunpack.c.l.b16 %v623
  %v632 = vunpack.c.l.b16 %v624
  %v633 = vunpack.c.l.b16 %v625
  %v634 = vpack.c.b16 %v631, %v630
  %v635 = vpack.c.b16 %v633, %v632
  %v639 = vsel %vm34, %v619, 0
  %v642 = vsel %vm34, %v620, 0
  %644 = vmatprep.subr.bf16.mxu0 0
  %645 = vmatpush1.bf16.msra.mxu0 %v634
  %646 = vmatprep.subr.bf16.mxu0 0
  %647 = vmatpush1.bf16.msra.mxu0 %v635
  %648 = vmatprep.subr.bf16.mxu0 0
  %649 = vmatpush1.bf16.msra.mxu0 0
  %650 = vmatprep.subr.bf16.mxu0 0
  %651 = vmatpush1.bf16.msra.mxu0 0
  %652 = vmatprep.subr.bf16.mxu0 0
  %653 = vmatpush1.bf16.msra.mxu0 0
  %654 = vmatprep.subr.bf16.mxu0 0
  %655 = vmatpush1.bf16.msra.mxu0 0
  %656 = vmatprep.subr.bf16.mxu0 0
  %657 = vmatpush1.bf16.msra.mxu0 0
  %658 = vmatprep.subr.bf16.mxu0 0
  %659 = vmatpush1.bf16.msra.mxu0 0
  %660 = vmatprep.subr.bf16.mxu0 0
  %661 = vmatpush1.bf16.msra.mxu0 0
  %662 = vmatprep.subr.bf16.mxu0 0
  %663 = vmatpush1.bf16.msra.mxu0 0
  %664 = vmatprep.subr.bf16.mxu0 0
  %665 = vmatpush1.bf16.msra.mxu0 0
  %666 = vmatprep.subr.bf16.mxu0 0
  %667 = vmatpush1.bf16.msra.mxu0 0
  %668 = vmatprep.subr.bf16.mxu0 0
  %669 = vmatpush1.bf16.msra.mxu0 0
  %670 = vmatprep.subr.bf16.mxu0 0
  %671 = vmatpush1.bf16.msra.mxu0 0
  %672 = vmatprep.subr.bf16.mxu0 0
  %673 = vmatpush1.bf16.msra.mxu0 0
  %674 = vmatprep.subr.bf16.mxu0 0
  %675 = vmatpush1.bf16.msra.mxu0 0
  %676 = vmatprep.mubr.bf16.mxu0 0
  %677 = vmatmul.mubr.bf16.gmra.mrb[0].mxu0 %v639
  %v678 = vpop.f32.mrb[0].mxu0
  %v679 = vadd.f32 0.0, %v678
  %v680 = vpop.f32.mrb[0].mxu0
  %v681 = vpop.f32.mrb[0].mxu0
  %v682 = vadd.f32 0.0, %v681
  %v683 = vpop.f32.mrb[0].mxu0
  %684 = vmatprep.mubr.bf16.mxu0 0
  %685 = vmatmul.mubr.bf16.gmra.mrb[0].mxu0 %v642
  %v686 = vpop.f32.mrb[0].mxu0
  %v687 = vadd.f32 0.0, %v686
  %v688 = vpop.f32.mrb[0].mxu0
  %v689 = vpop.f32.mrb[0].mxu0
  %v690 = vadd.f32 0.0, %v689
  %v691 = vpop.f32.mrb[0].mxu0
  %692 = vdwg.mxu0
  %v693 = vadd.f32 %v601, %v679
  %v694 = vadd.f32 %v604, %v682
  %v695 = vadd.f32 %v609, %v687
  %v696 = vadd.f32 %v612, %v690
  %v697 = vld [vmem:[#allocation2 + $0x6] sm:$0xff]
  %v698 = vld [vmem:[#allocation2 + $0xe] sm:$0xff]
  %v699 = vld [vmem:[#allocation2 + $0x16] sm:$0xff]
  %v700 = vld [vmem:[#allocation2 + $0x1e] sm:$0xff]
  %v701 = vpack.c.bf16 %v698, %v697
  %v702 = vpack.c.bf16 %v700, %v699
  %s703 = scalar_lea.vmem %s2, 128
  %v704 = vld [vmem:[%s703] sm:$0xf]
  %v705 = vld [vmem:[%s703 + $0x4] sm:$0xf]
  %v706 = vld [vmem:[%s703 + $0x8] sm:$0xf]
  %v707 = vld [vmem:[%s703 + $0xc] sm:$0xf]
  %v712 = vunpack.c.l.b16 %v704
  %v713 = vunpack.c.l.b16 %v705
  %v714 = vunpack.c.l.b16 %v706
  %v715 = vunpack.c.l.b16 %v707
  %v716 = vpack.c.b16 %v713, %v712
  %v717 = vpack.c.b16 %v715, %v714
  %v721 = vsel %vm34, %v701, 0
  %v724 = vsel %vm34, %v702, 0
  %726 = vmatprep.subr.bf16.mxu0 0
  %727 = vmatpush1.bf16.msra.mxu0 %v716
  %728 = vmatprep.subr.bf16.mxu0 0
  %729 = vmatpush1.bf16.msra.mxu0 %v717
  %730 = vmatprep.subr.bf16.mxu0 0
  %731 = vmatpush1.bf16.msra.mxu0 0
  %732 = vmatprep.subr.bf16.mxu0 0
  %733 = vmatpush1.bf16.msra.mxu0 0
  %734 = vmatprep.subr.bf16.mxu0 0
  %735 = vmatpush1.bf16.msra.mxu0 0
  %736 = vmatprep.subr.bf16.mxu0 0
  %737 = vmatpush1.bf16.msra.mxu0 0
  %738 = vmatprep.subr.bf16.mxu0 0
  %739 = vmatpush1.bf16.msra.mxu0 0
  %740 = vmatprep.subr.bf16.mxu0 0
  %741 = vmatpush1.bf16.msra.mxu0 0
  %742 = vmatprep.subr.bf16.mxu0 0
  %743 = vmatpush1.bf16.msra.mxu0 0
  %744 = vmatprep.subr.bf16.mxu0 0
  %745 = vmatpush1.bf16.msra.mxu0 0
  %746 = vmatprep.subr.bf16.mxu0 0
  %747 = vmatpush1.bf16.msra.mxu0 0
  %748 = vmatprep.subr.bf16.mxu0 0
  %749 = vmatpush1.bf16.msra.mxu0 0
  %750 = vmatprep.subr.bf16.mxu0 0
  %751 = vmatpush1.bf16.msra.mxu0 0
  %752 = vmatprep.subr.bf16.mxu0 0
  %753 = vmatpush1.bf16.msra.mxu0 0
  %754 = vmatprep.subr.bf16.mxu0 0
  %755 = vmatpush1.bf16.msra.mxu0 0
  %756 = vmatprep.subr.bf16.mxu0 0
  %757 = vmatpush1.bf16.msra.mxu0 0
  %758 = vmatprep.mubr.bf16.mxu0 0
  %759 = vmatmul.mubr.bf16.gmra.mrb[0].mxu0 %v721
  %v760 = vpop.f32.mrb[0].mxu0
  %v761 = vadd.f32 0.0, %v760
  %v762 = vpop.f32.mrb[0].mxu0
  %v763 = vpop.f32.mrb[0].mxu0
  %v764 = vadd.f32 0.0, %v763
  %v765 = vpop.f32.mrb[0].mxu0
  %766 = vmatprep.mubr.bf16.mxu0 0
  %767 = vmatmul.mubr.bf16.gmra.mrb[0].mxu0 %v724
  %v768 = vpop.f32.mrb[0].mxu0
  %v769 = vadd.f32 0.0, %v768
  %v770 = vpop.f32.mrb[0].mxu0
  %v771 = vpop.f32.mrb[0].mxu0
  %v772 = vadd.f32 0.0, %v771
  %v773 = vpop.f32.mrb[0].mxu0
  %774 = vdwg.mxu0
  %v775 = vadd.f32 %v693, %v761
  %v776 = vadd.f32 %v694, %v764
  %v777 = vadd.f32 %v695, %v769
  %v778 = vadd.f32 %v696, %v772
  %v779 = vld [vmem:[#allocation2 + $0x8] sm:$0xff]
  %v780 = vld [vmem:[#allocation2 + $0x10] sm:$0xff]
  %v781 = vld [vmem:[#allocation2 + $0x18] sm:$0xff]
  %v782 = vld [vmem:[#allocation2 + $0x20] sm:$0xff]
  %v783 = vpack.c.bf16 %v780, %v779
  %v784 = vpack.c.bf16 %v782, %v781
  %s785 = scalar_lea.vmem %s2, 144
  %v786 = vld [vmem:[%s785] sm:$0xf]
  %v787 = vld [vmem:[%s785 + $0x4] sm:$0xf]
  %v788 = vld [vmem:[%s785 + $0x8] sm:$0xf]
  %v789 = vld [vmem:[%s785 + $0xc] sm:$0xf]
  %v794 = vunpack.c.l.b16 %v786
  %v795 = vunpack.c.l.b16 %v787
  %v796 = vunpack.c.l.b16 %v788
  %v797 = vunpack.c.l.b16 %v789
  %v798 = vpack.c.b16 %v795, %v794
  %v799 = vpack.c.b16 %v797, %v796
  %v803 = vsel %vm34, %v783, 0
  %v806 = vsel %vm34, %v784, 0
  %808 = vmatprep.subr.bf16.mxu0 0
  %809 = vmatpush1.bf16.msra.mxu0 %v798
  %810 = vmatprep.subr.bf16.mxu0 0
  %811 = vmatpush1.bf16.msra.mxu0 %v799
  %812 = vmatprep.subr.bf16.mxu0 0
  %813 = vmatpush1.bf16.msra.mxu0 0
  %814 = vmatprep.subr.bf16.mxu0 0
  %815 = vmatpush1.bf16.msra.mxu0 0
  %816 = vmatprep.subr.bf16.mxu0 0
  %817 = vmatpush1.bf16.msra.mxu0 0
  %818 = vmatprep.subr.bf16.mxu0 0
  %819 = vmatpush1.bf16.msra.mxu0 0
  %820 = vmatprep.subr.bf16.mxu0 0
  %821 = vmatpush1.bf16.msra.mxu0 0
  %822 = vmatprep.subr.bf16.mxu0 0
  %823 = vmatpush1.bf16.msra.mxu0 0
  %824 = vmatprep.subr.bf16.mxu0 0
  %825 = vmatpush1.bf16.msra.mxu0 0
  %826 = vmatprep.subr.bf16.mxu0 0
  %827 = vmatpush1.bf16.msra.mxu0 0
  %828 = vmatprep.subr.bf16.mxu0 0
  %829 = vmatpush1.bf16.msra.mxu0 0
  %830 = vmatprep.subr.bf16.mxu0 0
  %831 = vmatpush1.bf16.msra.mxu0 0
  %832 = vmatprep.subr.bf16.mxu0 0
  %833 = vmatpush1.bf16.msra.mxu0 0
  %834 = vmatprep.subr.bf16.mxu0 0
  %835 = vmatpush1.bf16.msra.mxu0 0
  %836 = vmatprep.subr.bf16.mxu0 0
  %837 = vmatpush1.bf16.msra.mxu0 0
  %838 = vmatprep.subr.bf16.mxu0 0
  %839 = vmatpush1.bf16.msra.mxu0 0
  %840 = vmatprep.mubr.bf16.mxu0 0
  %841 = vmatmul.mubr.bf16.gmra.mrb[0].mxu0 %v803
  %v842 = vpop.f32.mrb[0].mxu0
  %v843 = vadd.f32 0.0, %v842
  %v844 = vpop.f32.mrb[0].mxu0
  %v845 = vpop.f32.mrb[0].mxu0
  %v846 = vadd.f32 0.0, %v845
  %v847 = vpop.f32.mrb[0].mxu0
  %848 = vmatprep.mubr.bf16.mxu0 0
  %849 = vmatmul.mubr.bf16.gmra.mrb[0].mxu0 %v806
  %v850 = vpop.f32.mrb[0].mxu0
  %v851 = vadd.f32 0.0, %v850
  %v852 = vpop.f32.mrb[0].mxu0
  %v853 = vpop.f32.mrb[0].mxu0
  %v854 = vadd.f32 0.0, %v853
  %v855 = vpop.f32.mrb[0].mxu0
  %856 = vdwg.mxu0
  %v857 = vadd.f32 %v775, %v843
  %v858 = vadd.f32 %v776, %v846
  %v859 = vadd.f32 %v777, %v851
  %v860 = vadd.f32 %v778, %v854
  %s861 = scalar_lea.vmem %s3, 1
  %v862 = vld [vmem:[%s861] sm:$0x1]
  %v864 = vlaneseq
  %v865 = vshrl.u32 %v864, 7
  %v866 = vsub.s32 0, %v865
  %v867 = vrot.slane %v862, %v866
  %v869 = vadd.f32 %v857, %v867
  %v870 = vadd.f32 %v858, %v867
  %v871 = vadd.f32 %v859, %v867
  %v872 = vadd.f32 %v860, %v867
  %v873 = vmax.f32 %v869, 0.0
  %v874 = vmax.f32 %v870, 0.0
  %v875 = vmax.f32 %v871, 0.0
  %v876 = vmax.f32 %v872, 0.0
  %877 = vst.msk [vmem:[#allocation3] sm:$0xff] %vm34, %v873
  %878 = vst.msk [vmem:[#allocation3 + $0x8] sm:$0xff] %vm34, %v874
  %879 = vst.msk [vmem:[#allocation3 + $0x10] sm:$0xff] %vm34, %v875
  %880 = vst.msk [vmem:[#allocation3 + $0x18] sm:$0xff] %vm34, %v876
  %882 = vrot.lane.b32.xlu0 %v876, 32
  %v883 = vpop.permute.xlu0 %882
  %vm885 = vcmask 523526
  %886 = vst.msk [vmem:[#allocation3 - $0x6] sm:$0xc0] %vm885, %v883
  %vm887 = vcmask 521476
  %888 = vst.msk [vmem:[#allocation3 - $0x2] sm:$0x30] %vm887, %v883
  %vm889 = vcmask 519426
  %890 = vst.msk [vmem:[#allocation3 + $0x2] sm:$0xc] %vm889, %v883
  %vm891 = vcmask 517376
  %892 = vst.msk [vmem:[#allocation3 + $0x6] sm:$0x3] %vm891, %v883
  %894 = vrot.lane.b32.xlu0 %v875, 32
  %v895 = vpop.permute.xlu0 %894
  %897 = vst.msk [vmem:[#allocation3 + $0x2] sm:$0xc0] %vm885, %v895
  %898 = vst.msk [vmem:[#allocation3 + $0x6] sm:$0x30] %vm887, %v895
  %899 = vst.msk [vmem:[#allocation3 + $0xa] sm:$0xc] %vm889, %v895
  %900 = vst.msk [vmem:[#allocation3 + $0xe] sm:$0x3] %vm891, %v895
  %902 = vrot.lane.b32.xlu0 %v874, 32
  %v903 = vpop.permute.xlu0 %902
  %905 = vst.msk [vmem:[#allocation3 + $0xa] sm:$0xc0] %vm885, %v903
  %906 = vst.msk [vmem:[#allocation3 + $0xe] sm:$0x30] %vm887, %v903
  %907 = vst.msk [vmem:[#allocation3 + $0x12] sm:$0xc] %vm889, %v903
  %908 = vst.msk [vmem:[#allocation3 + $0x16] sm:$0x3] %vm891, %v903
  %910 = vrot.lane.b32.xlu0 %v873, 32
  %v911 = vpop.permute.xlu0 %910
  %913 = vst.msk [vmem:[#allocation3 + $0x12] sm:$0xc0] %vm885, %v911
  %914 = vst.msk [vmem:[#allocation3 + $0x16] sm:$0x30] %vm887, %v911
  %915 = vst.msk [vmem:[#allocation3 + $0x1a] sm:$0xc] %vm889, %v911
  %916 = vst.msk [vmem:[#allocation3 + $0x1e] sm:$0x3] %vm891, %v911
  %v917 = vld [vmem:[#allocation3] sm:$0xff]
  %v918 = vld [vmem:[#allocation3 + $0x8] sm:$0xff]
  %v919 = vld [vmem:[#allocation3 + $0x10] sm:$0xff]
  %v920 = vld [vmem:[#allocation3 + $0x18] sm:$0xff]
  %v921 = vpack.c.bf16 %v918, %v917
  %v922 = vpack.c.bf16 %v920, %v919
  %v923 = vld [vmem:[%s4] sm:$0xf]
  %v924 = vld [vmem:[%s4 + $0x4] sm:$0xf]
  %v925 = vld [vmem:[%s4 + $0x8] sm:$0xf]
  %v926 = vld [vmem:[%s4 + $0xc] sm:$0xf]
  %v927 = vld [vmem:[%s4 + $0x10] sm:$0xf]
  %v928 = vld [vmem:[%s4 + $0x14] sm:$0xf]
  %v929 = vld [vmem:[%s4 + $0x18] sm:$0xf]
  %v930 = vld [vmem:[%s4 + $0x1c] sm:$0xf]
  %v931 = vld [vmem:[%s5] sm:$0x1]
  %v933 = vlaneseq
  %v934 = vshrl.u32 %v933, 7
  %v935 = vsub.s32 0, %v934
  %v936 = vrot.slane %v931, %v935
  %v946 = vunpack.c.l.b16 %v923
  %v947 = vunpack.c.l.b16 %v924
  %v948 = vunpack.c.l.b16 %v925
  %v949 = vunpack.c.l.b16 %v926
  %v950 = vunpack.c.l.b16 %v927
  %v951 = vunpack.c.l.b16 %v928
  %v952 = vunpack.c.l.b16 %v929
  %v953 = vunpack.c.l.b16 %v930
  %v954 = vpack.c.b16 %v947, %v946
  %v955 = vpack.c.b16 %v949, %v948
  %v956 = vpack.c.b16 %v951, %v950
  %v957 = vpack.c.b16 %v953, %v952
  %vm962 = vcmask 523264
  %v964 = vsel %vm962, %v921, 0
  %v967 = vsel %vm962, %v922, 0
  %969 = vmatprep.subr.bf16.mxu0 0
  %970 = vmatpush1.bf16.msra.mxu0 %v954
  %971 = vmatprep.subr.bf16.mxu0 0
  %972 = vmatpush1.bf16.msra.mxu0 %v955
  %973 = vmatprep.subr.bf16.mxu0 0
  %974 = vmatpush1.bf16.msra.mxu0 %v956
  %975 = vmatprep.subr.bf16.mxu0 0
  %976 = vmatpush1.bf16.msra.mxu0 %v957
  %977 = vmatprep.subr.bf16.mxu0 0
  %978 = vmatpush1.bf16.msra.mxu0 0
  %979 = vmatprep.subr.bf16.mxu0 0
  %980 = vmatpush1.bf16.msra.mxu0 0
  %981 = vmatprep.subr.bf16.mxu0 0
  %982 = vmatpush1.bf16.msra.mxu0 0
  %983 = vmatprep.subr.bf16.mxu0 0
  %984 = vmatpush1.bf16.msra.mxu0 0
  %985 = vmatprep.subr.bf16.mxu0 0
  %986 = vmatpush1.bf16.msra.mxu0 0
  %987 = vmatprep.subr.bf16.mxu0 0
  %988 = vmatpush1.bf16.msra.mxu0 0
  %989 = vmatprep.subr.bf16.mxu0 0
  %990 = vmatpush1.bf16.msra.mxu0 0
  %991 = vmatprep.subr.bf16.mxu0 0
  %992 = vmatpush1.bf16.msra.mxu0 0
  %993 = vmatprep.subr.bf16.mxu0 0
  %994 = vmatpush1.bf16.msra.mxu0 0
  %995 = vmatprep.subr.bf16.mxu0 0
  %996 = vmatpush1.bf16.msra.mxu0 0
  %997 = vmatprep.subr.bf16.mxu0 0
  %998 = vmatpush1.bf16.msra.mxu0 0
  %999 = vmatprep.subr.bf16.mxu0 0
  %1000 = vmatpush1.bf16.msra.mxu0 0
  %1001 = vmatprep.mubr.bf16.mxu0 0
  %1002 = vmatmul.mubr.bf16.gmra.mrb[0].mxu0 %v964
  %v1003 = vpop.f32.mrb[0].mxu0
  %v1004 = vadd.f32 %v936, %v1003
  %v1005 = vpop.f32.mrb[0].mxu0
  %v1006 = vpop.f32.mrb[0].mxu0
  %v1007 = vadd.f32 %v936, %v1006
  %v1008 = vpop.f32.mrb[0].mxu0
  %1009 = vmatprep.mubr.bf16.mxu0 0
  %1010 = vmatmul.mubr.bf16.gmra.mrb[0].mxu0 %v967
  %v1011 = vpop.f32.mrb[0].mxu0
  %v1012 = vadd.f32 %v936, %v1011
  %v1013 = vpop.f32.mrb[0].mxu0
  %v1014 = vpop.f32.mrb[0].mxu0
  %v1015 = vadd.f32 %v936, %v1014
  %v1016 = vpop.f32.mrb[0].mxu0
  %1017 = vdwg.mxu0
  %1018 = vst [vmem:[#allocation4] sm:$0xff] %v1004
  %1019 = vst [vmem:[#allocation4 + $0x8] sm:$0xff] %v1007
  %1020 = vst [vmem:[#allocation4 + $0x10] sm:$0xff] %v1012
  %1021 = vst [vmem:[#allocation4 + $0x18] sm:$0xff] %v1015
  %v1022 = vld [vmem:[%s1] sm:$0x3]
  %v1023 = vld [vmem:[%s6] sm:$0xf]
  %v1024 = vld [vmem:[%s6 + $0x4] sm:$0xf]
  %v1025 = vld [vmem:[%s6 + $0x8] sm:$0xf]
  %v1026 = vld [vmem:[%s6 + $0xc] sm:$0xf]
  %v1027 = vlaneseq
  %v1028 = vand.u32 %v1027, 127
  %vm1029 = vcmp.lt.s32.totalorder %v1028, 16
  %v1030 = vld [vmem:[#allocation4] sm:$0x3]
  %v1035 = vunpack.c.l.b16 %v1023
  %v1036 = vunpack.c.l.b16 %v1024
  %v1037 = vunpack.c.l.b16 %v1025
  %v1038 = vunpack.c.l.b16 %v1026
  %v1039 = vpack.c.b16 %v1036, %v1035
  %v1040 = vpack.c.b16 %v1038, %v1037
  %v1044 = vsel %vm34, 0, 0
  %1046 = vmatprep.subr.bf16.mxu0 0
  %1047 = vmatpush1.bf16.msra.mxu0 %v1039
  %1048 = vmatprep.subr.bf16.mxu0 0
  %1049 = vmatpush1.bf16.msra.mxu0 %v1040
  %1050 = vmatprep.subr.bf16.mxu0 0
  %1051 = vmatpush1.bf16.msra.mxu0 0
  %1052 = vmatprep.subr.bf16.mxu0 0
  %1053 = vmatpush1.bf16.msra.mxu0 0
  %1054 = vmatprep.subr.bf16.mxu0 0
  %1055 = vmatpush1.bf16.msra.mxu0 0
  %1056 = vmatprep.subr.bf16.mxu0 0
  %1057 = vmatpush1.bf16.msra.mxu0 0
  %1058 = vmatprep.subr.bf16.mxu0 0
  %1059 = vmatpush1.bf16.msra.mxu0 0
  %1060 = vmatprep.subr.bf16.mxu0 0
  %1061 = vmatpush1.bf16.msra.mxu0 0
  %1062 = vmatprep.subr.bf16.mxu0 0
  %1063 = vmatpush1.bf16.msra.mxu0 0
  %1064 = vmatprep.subr.bf16.mxu0 0
  %1065 = vmatpush1.bf16.msra.mxu0 0
  %1066 = vmatprep.subr.bf16.mxu0 0
  %1067 = vmatpush1.bf16.msra.mxu0 0
  %1068 = vmatprep.subr.bf16.mxu0 0
  %1069 = vmatpush1.bf16.msra.mxu0 0
  %1070 = vmatprep.subr.bf16.mxu0 0
  %1071 = vmatpush1.bf16.msra.mxu0 0
  %1072 = vmatprep.subr.bf16.mxu0 0
  %1073 = vmatpush1.bf16.msra.mxu0 0
  %1074 = vmatprep.subr.bf16.mxu0 0
  %1075 = vmatpush1.bf16.msra.mxu0 0
  %1076 = vmatprep.subr.bf16.mxu0 0
  %1077 = vmatpush1.bf16.msra.mxu0 0
  %1078 = vmatprep.mubr.bf16.mxu0 0
  %1079 = vmatmul.mubr.bf16.gmra.mrb[0].mxu0 %v1044
  %v1080 = vpop.f32.mrb[0].mxu0
  %v1081 = vadd.f32 0.0, %v1080
  %v1082 = vpop.f32.mrb[0].mxu0
  %v1083 = vpop.f32.mrb[0].mxu0
  %v1084 = vpop.f32.mrb[0].mxu0
  %1085 = vdwg.mxu0
  %v1086 = vadd.f32 %v1030, %v1081
  %v1087 = vxor.u32 %v1086, 2147483648
  %v1088 = vmul.f32 %v1087, 1.442695
  %v1089 = vpow.pop %v1088
  %v1090 = vadd.f32 %v1089, 1.0
  %v1091 = vrcp.pop %v1090
  %v1092 = vmul.f32 1.0, %v1091
  %v1093 = vtanh.pop %v1086
  %v1094 = vmul.f32 %v1092, 0.0
  %1096 = vrot.lane.b32.xlu0 %v1093, 32
  %v1097 = vpop.permute.xlu0 %1096
  %v1099 = vmul.f32 %v1092, %v1097
  %1101 = vrot.lane.b32.xlu0 %v1099, 32
  %v1102 = vpop.permute.xlu0 %1101
  %v1104 = vadd.f32 %v1094, %v1102
  %v1105 = vtanh.pop %v1104
  %1107 = vrot.lane.b32.xlu0 %v1105, 32
  %v1108 = vpop.permute.xlu0 %1107
  %v1110 = vmul.f32 %v1092, %v1108
  %v1111 = vsel %vm1029, 0, 15
  %1112 = vset.pattern.permute.xlu0 0
  %1113 = vperm.xlu0 %1112, %v1022
  %v1114 = vpop.permute.xlu0 %1113
  %vm1115 = vcmp.gt.s32.totalorder %v1114, %v1111
  %1117 = vrot.lane.b32.xlu0 %v1110, 64
  %v1118 = vpop.permute.xlu0 %1117
  %v1120 = vsel %vm1115, %v1118, 0.0
  %1122 = vrot.lane.b32.xlu0 %v1104, 96
  %v1123 = vpop.permute.xlu0 %1122
  %v1125 = vsel %vm1115, %v1123, 0.0
  %vm1126 = vcmask 123904
  %1127 = vst.msk [vmem:[%s7] sm:$0x3] %vm1126, %v1120
  %vm1128 = vcmask 255104
  %1129 = vst.msk [vmem:[%s7 + $0x1e] sm:$0x3] %vm1128, %v1120
  %v1130 = vld [vmem:[#allocation4 + $0x2] sm:$0x3]
  %v1131 = vpack.c.bf16 %v1120, %v1120
  %v1133 = vsel %vm34, %v1131, 0
  %1135 = vmatprep.subr.bf16.mxu0 0
  %1136 = vmatpush1.bf16.msra.mxu0 %v1039
  %1137 = vmatprep.subr.bf16.mxu0 0
  %1138 = vmatpush1.bf16.msra.mxu0 %v1040
  %1139 = vmatprep.subr.bf16.mxu0 0
  %1140 = vmatpush1.bf16.msra.mxu0 0
  %1141 = vmatprep.subr.bf16.mxu0 0
  %1142 = vmatpush1.bf16.msra.mxu0 0
  %1143 = vmatprep.subr.bf16.mxu0 0
  %1144 = vmatpush1.bf16.msra.mxu0 0
  %1145 = vmatprep.subr.bf16.mxu0 0
  %1146 = vmatpush1.bf16.msra.mxu0 0
  %1147 = vmatprep.subr.bf16.mxu0 0
  %1148 = vmatpush1.bf16.msra.mxu0 0
  %1149 = vmatprep.subr.bf16.mxu0 0
  %1150 = vmatpush1.bf16.msra.mxu0 0
  %1151 = vmatprep.subr.bf16.mxu0 0
  %1152 = vmatpush1.bf16.msra.mxu0 0
  %1153 = vmatprep.subr.bf16.mxu0 0
  %1154 = vmatpush1.bf16.msra.mxu0 0
  %1155 = vmatprep.subr.bf16.mxu0 0
  %1156 = vmatpush1.bf16.msra.mxu0 0
  %1157 = vmatprep.subr.bf16.mxu0 0
  %1158 = vmatpush1.bf16.msra.mxu0 0
  %1159 = vmatprep.subr.bf16.mxu0 0
  %1160 = vmatpush1.bf16.msra.mxu0 0
  %1161 = vmatprep.subr.bf16.mxu0 0
  %1162 = vmatpush1.bf16.msra.mxu0 0
  %1163 = vmatprep.subr.bf16.mxu0 0
  %1164 = vmatpush1.bf16.msra.mxu0 0
  %1165 = vmatprep.subr.bf16.mxu0 0
  %1166 = vmatpush1.bf16.msra.mxu0 0
  %1167 = vmatprep.mubr.bf16.mxu0 0
  %1168 = vmatmul.mubr.bf16.gmra.mrb[0].mxu0 %v1133
  %v1169 = vpop.f32.mrb[0].mxu0
  %v1170 = vadd.f32 0.0, %v1169
  %v1171 = vpop.f32.mrb[0].mxu0
  %v1172 = vpop.f32.mrb[0].mxu0
  %v1173 = vpop.f32.mrb[0].mxu0
  %1174 = vdwg.mxu0
  %v1175 = vadd.f32 %v1130, %v1170
  %v1176 = vxor.u32 %v1175, 2147483648
  %v1177 = vmul.f32 %v1176, 1.442695
  %v1178 = vpow.pop %v1177
  %v1179 = vadd.f32 %v1178, 1.0
  %v1180 = vrcp.pop %v1179
  %v1181 = vmul.f32 1.0, %v1180
  %v1182 = vtanh.pop %v1175
  %1184 = vrot.lane.b32.xlu0 %v1125, 32
  %v1185 = vpop.permute.xlu0 %1184
  %v1187 = vmul.f32 %v1181, %v1185
  %1189 = vrot.lane.b32.xlu0 %v1182, 32
  %v1190 = vpop.permute.xlu0 %1189
  %v1192 = vmul.f32 %v1181, %v1190
  %1194 = vrot.lane.b32.xlu0 %v1192, 32
  %v1195 = vpop.permute.xlu0 %1194
  %v1197 = vadd.f32 %v1187, %v1195
  %v1198 = vtanh.pop %v1197
  %1200 = vrot.lane.b32.xlu0 %v1198, 32
  %v1201 = vpop.permute.xlu0 %1200
  %v1203 = vmul.f32 %v1181, %v1201
  %v1204 = vsel %vm1029, 1, 14
  %vm1205 = vcmp.gt.s32.totalorder %v1114, %v1204
  %1207 = vrot.lane.b32.xlu0 %v1203, 64
  %v1208 = vpop.permute.xlu0 %1207
  %v1210 = vsel %vm1205, %v1208, %v1120
  %1212 = vrot.lane.b32.xlu0 %v1197, 96
  %v1213 = vpop.permute.xlu0 %1212
  %v1215 = vsel %vm1205, %v1213, %v1125
  %v1216 = vsel %vm1205, %v1208, 0.0
  %1217 = vst.msk [vmem:[%s7 + $0x2] sm:$0x3] %vm1126, %v1216
  %1218 = vst.msk [vmem:[%s7 + $0x1c] sm:$0x3] %vm1128, %v1216
  %v1219 = vld [vmem:[#allocation4 + $0x4] sm:$0x3]
  %v1220 = vpack.c.bf16 %v1210, %v1210
  %v1222 = vsel %vm34, %v1220, 0
  %1224 = vmatprep.subr.bf16.mxu0 0
  %1225 = vmatpush1.bf16.msra.mxu0 %v1039
  %1226 = vmatprep.subr.bf16.mxu0 0
  %1227 = vmatpush1.bf16.msra.mxu0 %v1040
  %1228 = vmatprep.subr.bf16.mxu0 0
  %1229 = vmatpush1.bf16.msra.mxu0 0
  %1230 = vmatprep.subr.bf16.mxu0 0
  %1231 = vmatpush1.bf16.msra.mxu0 0
  %1232 = vmatprep.subr.bf16.mxu0 0
  %1233 = vmatpush1.bf16.msra.mxu0 0
  %1234 = vmatprep.subr.bf16.mxu0 0
  %1235 = vmatpush1.bf16.msra.mxu0 0
  %1236 = vmatprep.subr.bf16.mxu0 0
  %1237 = vmatpush1.bf16.msra.mxu0 0
  %1238 = vmatprep.subr.bf16.mxu0 0
  %1239 = vmatpush1.bf16.msra.mxu0 0
  %1240 = vmatprep.subr.bf16.mxu0 0
  %1241 = vmatpush1.bf16.msra.mxu0 0
  %1242 = vmatprep.subr.bf16.mxu0 0
  %1243 = vmatpush1.bf16.msra.mxu0 0
  %1244 = vmatprep.subr.bf16.mxu0 0
  %1245 = vmatpush1.bf16.msra.mxu0 0
  %1246 = vmatprep.subr.bf16.mxu0 0
  %1247 = vmatpush1.bf16.msra.mxu0 0
  %1248 = vmatprep.subr.bf16.mxu0 0
  %1249 = vmatpush1.bf16.msra.mxu0 0
  %1250 = vmatprep.subr.bf16.mxu0 0
  %1251 = vmatpush1.bf16.msra.mxu0 0
  %1252 = vmatprep.subr.bf16.mxu0 0
  %1253 = vmatpush1.bf16.msra.mxu0 0
  %1254 = vmatprep.subr.bf16.mxu0 0
  %1255 = vmatpush1.bf16.msra.mxu0 0
  %1256 = vmatprep.mubr.bf16.mxu0 0
  %1257 = vmatmul.mubr.bf16.gmra.mrb[0].mxu0 %v1222
  %v1258 = vpop.f32.mrb[0].mxu0
  %v1259 = vadd.f32 0.0, %v1258
  %v1260 = vpop.f32.mrb[0].mxu0
  %v1261 = vpop.f32.mrb[0].mxu0
  %v1262 = vpop.f32.mrb[0].mxu0
  %1263 = vdwg.mxu0
  %v1264 = vadd.f32 %v1219, %v1259
  %v1265 = vxor.u32 %v1264, 2147483648
  %v1266 = vmul.f32 %v1265, 1.442695
  %v1267 = vpow.pop %v1266
  %v1268 = vadd.f32 %v1267, 1.0
  %v1269 = vrcp.pop %v1268
  %v1270 = vmul.f32 1.0, %v1269
  %v1271 = vtanh.pop %v1264
  %1273 = vrot.lane.b32.xlu0 %v1215, 32
  %v1274 = vpop.permute.xlu0 %1273
  %v1276 = vmul.f32 %v1270, %v1274
  %1278 = vrot.lane.b32.xlu0 %v1271, 32
  %v1279 = vpop.permute.xlu0 %1278
  %v1281 = vmul.f32 %v1270, %v1279
  %1283 = vrot.lane.b32.xlu0 %v1281, 32
  %v1284 = vpop.permute.xlu0 %1283
  %v1286 = vadd.f32 %v1276, %v1284
  %v1287 = vtanh.pop %v1286
  %1289 = vrot.lane.b32.xlu0 %v1287, 32
  %v1290 = vpop.permute.xlu0 %1289
  %v1292 = vmul.f32 %v1270, %v1290
  %v1293 = vsel %vm1029, 2, 13
  %vm1294 = vcmp.gt.s32.totalorder %v1114, %v1293
  %1296 = vrot.lane.b32.xlu0 %v1292, 64
  %v1297 = vpop.permute.xlu0 %1296
  %v1299 = vsel %vm1294, %v1297, %v1210
  %1301 = vrot.lane.b32.xlu0 %v1286, 96
  %v1302 = vpop.permute.xlu0 %1301
  %v1304 = vsel %vm1294, %v1302, %v1215
  %v1305 = vsel %vm1294, %v1297, 0.0
  %1306 = vst.msk [vmem:[%s7 + $0x4] sm:$0x3] %vm1126, %v1305
  %1307 = vst.msk [vmem:[%s7 + $0x1a] sm:$0x3] %vm1128, %v1305
  %v1308 = vld [vmem:[#allocation4 + $0x6] sm:$0x3]
  %v1309 = vpack.c.bf16 %v1299, %v1299
  %v1311 = vsel %vm34, %v1309, 0
  %1313 = vmatprep.subr.bf16.mxu0 0
  %1314 = vmatpush1.bf16.msra.mxu0 %v1039
  %1315 = vmatprep.subr.bf16.mxu0 0
  %1316 = vmatpush1.bf16.msra.mxu0 %v1040
  %1317 = vmatprep.subr.bf16.mxu0 0
  %1318 = vmatpush1.bf16.msra.mxu0 0
  %1319 = vmatprep.subr.bf16.mxu0 0
  %1320 = vmatpush1.bf16.msra.mxu0 0
  %1321 = vmatprep.subr.bf16.mxu0 0
  %1322 = vmatpush1.bf16.msra.mxu0 0
  %1323 = vmatprep.subr.bf16.mxu0 0
  %1324 = vmatpush1.bf16.msra.mxu0 0
  %1325 = vmatprep.subr.bf16.mxu0 0
  %1326 = vmatpush1.bf16.msra.mxu0 0
  %1327 = vmatprep.subr.bf16.mxu0 0
  %1328 = vmatpush1.bf16.msra.mxu0 0
  %1329 = vmatprep.subr.bf16.mxu0 0
  %1330 = vmatpush1.bf16.msra.mxu0 0
  %1331 = vmatprep.subr.bf16.mxu0 0
  %1332 = vmatpush1.bf16.msra.mxu0 0
  %1333 = vmatprep.subr.bf16.mxu0 0
  %1334 = vmatpush1.bf16.msra.mxu0 0
  %1335 = vmatprep.subr.bf16.mxu0 0
  %1336 = vmatpush1.bf16.msra.mxu0 0
  %1337 = vmatprep.subr.bf16.mxu0 0
  %1338 = vmatpush1.bf16.msra.mxu0 0
  %1339 = vmatprep.subr.bf16.mxu0 0
  %1340 = vmatpush1.bf16.msra.mxu0 0
  %1341 = vmatprep.subr.bf16.mxu0 0
  %1342 = vmatpush1.bf16.msra.mxu0 0
  %1343 = vmatprep.subr.bf16.mxu0 0
  %1344 = vmatpush1.bf16.msra.mxu0 0
  %1345 = vmatprep.mubr.bf16.mxu0 0
  %1346 = vmatmul.mubr.bf16.gmra.mrb[0].mxu0 %v1311
  %v1347 = vpop.f32.mrb[0].mxu0
  %v1348 = vadd.f32 0.0, %v1347
  %v1349 = vpop.f32.mrb[0].mxu0
  %v1350 = vpop.f32.mrb[0].mxu0
  %v1351 = vpop.f32.mrb[0].mxu0
  %1352 = vdwg.mxu0
  %v1353 = vadd.f32 %v1308, %v1348
  %v1354 = vxor.u32 %v1353, 2147483648
  %v1355 = vmul.f32 %v1354, 1.442695
  %v1356 = vpow.pop %v1355
  %v1357 = vadd.f32 %v1356, 1.0
  %v1358 = vrcp.pop %v1357
  %v1359 = vmul.f32 1.0, %v1358
  %v1360 = vtanh.pop %v1353
  %1362 = vrot.lane.b32.xlu0 %v1304, 32
  %v1363 = vpop.permute.xlu0 %1362
  %v1365 = vmul.f32 %v1359, %v1363
  %1367 = vrot.lane.b32.xlu0 %v1360, 32
  %v1368 = vpop.permute.xlu0 %1367
  %v1370 = vmul.f32 %v1359, %v1368
  %1372 = vrot.lane.b32.xlu0 %v1370, 32
  %v1373 = vpop.permute.xlu0 %1372
  %v1375 = vadd.f32 %v1365, %v1373
  %v1376 = vtanh.pop %v1375
  %1378 = vrot.lane.b32.xlu0 %v1376, 32
  %v1379 = vpop.permute.xlu0 %1378
  %v1381 = vmul.f32 %v1359, %v1379
  %v1382 = vsel %vm1029, 3, 12
  %vm1383 = vcmp.gt.s32.totalorder %v1114, %v1382
  %1385 = vrot.lane.b32.xlu0 %v1381, 64
  %v1386 = vpop.permute.xlu0 %1385
  %v1388 = vsel %vm1383, %v1386, %v1299
  %1390 = vrot.lane.b32.xlu0 %v1375, 96
  %v1391 = vpop.permute.xlu0 %1390
  %v1393 = vsel %vm1383, %v1391, %v1304
  %v1394 = vsel %vm1383, %v1386, 0.0
  %1395 = vst.msk [vmem:[%s7 + $0x6] sm:$0x3] %vm1126, %v1394
  %1396 = vst.msk [vmem:[%s7 + $0x18] sm:$0x3] %vm1128, %v1394
  %v1397 = vld [vmem:[#allocation4 + $0x8] sm:$0x3]
  %v1398 = vpack.c.bf16 %v1388, %v1388
  %v1400 = vsel %vm34, %v1398, 0
  %1402 = vmatprep.subr.bf16.mxu0 0
  %1403 = vmatpush1.bf16.msra.mxu0 %v1039
  %1404 = vmatprep.subr.bf16.mxu0 0
  %1405 = vmatpush1.bf16.msra.mxu0 %v1040
  %1406 = vmatprep.subr.bf16.mxu0 0
  %1407 = vmatpush1.bf16.msra.mxu0 0
  %1408 = vmatprep.subr.bf16.mxu0 0
  %1409 = vmatpush1.bf16.msra.mxu0 0
  %1410 = vmatprep.subr.bf16.mxu0 0
  %1411 = vmatpush1.bf16.msra.mxu0 0
  %1412 = vmatprep.subr.bf16.mxu0 0
  %1413 = vmatpush1.bf16.msra.mxu0 0
  %1414 = vmatprep.subr.bf16.mxu0 0
  %1415 = vmatpush1.bf16.msra.mxu0 0
  %1416 = vmatprep.subr.bf16.mxu0 0
  %1417 = vmatpush1.bf16.msra.mxu0 0
  %1418 = vmatprep.subr.bf16.mxu0 0
  %1419 = vmatpush1.bf16.msra.mxu0 0
  %1420 = vmatprep.subr.bf16.mxu0 0
  %1421 = vmatpush1.bf16.msra.mxu0 0
  %1422 = vmatprep.subr.bf16.mxu0 0
  %1423 = vmatpush1.bf16.msra.mxu0 0
  %1424 = vmatprep.subr.bf16.mxu0 0
  %1425 = vmatpush1.bf16.msra.mxu0 0
  %1426 = vmatprep.subr.bf16.mxu0 0
  %1427 = vmatpush1.bf16.msra.mxu0 0
  %1428 = vmatprep.subr.bf16.mxu0 0
  %1429 = vmatpush1.bf16.msra.mxu0 0
  %1430 = vmatprep.subr.bf16.mxu0 0
  %1431 = vmatpush1.bf16.msra.mxu0 0
  %1432 = vmatprep.subr.bf16.mxu0 0
  %1433 = vmatpush1.bf16.msra.mxu0 0
  %1434 = vmatprep.mubr.bf16.mxu0 0
  %1435 = vmatmul.mubr.bf16.gmra.mrb[0].mxu0 %v1400
  %v1436 = vpop.f32.mrb[0].mxu0
  %v1437 = vadd.f32 0.0, %v1436
  %v1438 = vpop.f32.mrb[0].mxu0
  %v1439 = vpop.f32.mrb[0].mxu0
  %v1440 = vpop.f32.mrb[0].mxu0
  %1441 = vdwg.mxu0
  %v1442 = vadd.f32 %v1397, %v1437
  %v1443 = vxor.u32 %v1442, 2147483648
  %v1444 = vmul.f32 %v1443, 1.442695
  %v1445 = vpow.pop %v1444
  %v1446 = vadd.f32 %v1445, 1.0
  %v1447 = vrcp.pop %v1446
  %v1448 = vmul.f32 1.0, %v1447
  %v1449 = vtanh.pop %v1442
  %1451 = vrot.lane.b32.xlu0 %v1393, 32
  %v1452 = vpop.permute.xlu0 %1451
  %v1454 = vmul.f32 %v1448, %v1452
  %1456 = vrot.lane.b32.xlu0 %v1449, 32
  %v1457 = vpop.permute.xlu0 %1456
  %v1459 = vmul.f32 %v1448, %v1457
  %1461 = vrot.lane.b32.xlu0 %v1459, 32
  %v1462 = vpop.permute.xlu0 %1461
  %v1464 = vadd.f32 %v1454, %v1462
  %v1465 = vtanh.pop %v1464
  %1467 = vrot.lane.b32.xlu0 %v1465, 32
  %v1468 = vpop.permute.xlu0 %1467
  %v1470 = vmul.f32 %v1448, %v1468
  %v1471 = vsel %vm1029, 4, 11
  %vm1472 = vcmp.gt.s32.totalorder %v1114, %v1471
  %1474 = vrot.lane.b32.xlu0 %v1470, 64
  %v1475 = vpop.permute.xlu0 %1474
  %v1477 = vsel %vm1472, %v1475, %v1388
  %1479 = vrot.lane.b32.xlu0 %v1464, 96
  %v1480 = vpop.permute.xlu0 %1479
  %v1482 = vsel %vm1472, %v1480, %v1393
  %v1483 = vsel %vm1472, %v1475, 0.0
  %1484 = vst.msk [vmem:[%s7 + $0x8] sm:$0x3] %vm1126, %v1483
  %1485 = vst.msk [vmem:[%s7 + $0x16] sm:$0x3] %vm1128, %v1483
  %v1486 = vld [vmem:[#allocation4 + $0xa] sm:$0x3]
  %v1487 = vpack.c.bf16 %v1477, %v1477
  %v1489 = vsel %vm34, %v1487, 0
  %1491 = vmatprep.subr.bf16.mxu0 0
  %1492 = vmatpush1.bf16.msra.mxu0 %v1039
  %1493 = vmatprep.subr.bf16.mxu0 0
  %1494 = vmatpush1.bf16.msra.mxu0 %v1040
  %1495 = vmatprep.subr.bf16.mxu0 0
  %1496 = vmatpush1.bf16.msra.mxu0 0
  %1497 = vmatprep.subr.bf16.mxu0 0
  %1498 = vmatpush1.bf16.msra.mxu0 0
  %1499 = vmatprep.subr.bf16.mxu0 0
  %1500 = vmatpush1.bf16.msra.mxu0 0
  %1501 = vmatprep.subr.bf16.mxu0 0
  %1502 = vmatpush1.bf16.msra.mxu0 0
  %1503 = vmatprep.subr.bf16.mxu0 0
  %1504 = vmatpush1.bf16.msra.mxu0 0
  %1505 = vmatprep.subr.bf16.mxu0 0
  %1506 = vmatpush1.bf16.msra.mxu0 0
  %1507 = vmatprep.subr.bf16.mxu0 0
  %1508 = vmatpush1.bf16.msra.mxu0 0
  %1509 = vmatprep.subr.bf16.mxu0 0
  %1510 = vmatpush1.bf16.msra.mxu0 0
  %1511 = vmatprep.subr.bf16.mxu0 0
  %1512 = vmatpush1.bf16.msra.mxu0 0
  %1513 = vmatprep.subr.bf16.mxu0 0
  %1514 = vmatpush1.bf16.msra.mxu0 0
  %1515 = vmatprep.subr.bf16.mxu0 0
  %1516 = vmatpush1.bf16.msra.mxu0 0
  %1517 = vmatprep.subr.bf16.mxu0 0
  %1518 = vmatpush1.bf16.msra.mxu0 0
  %1519 = vmatprep.subr.bf16.mxu0 0
  %1520 = vmatpush1.bf16.msra.mxu0 0
  %1521 = vmatprep.subr.bf16.mxu0 0
  %1522 = vmatpush1.bf16.msra.mxu0 0
  %1523 = vmatprep.mubr.bf16.mxu0 0
  %1524 = vmatmul.mubr.bf16.gmra.mrb[0].mxu0 %v1489
  %v1525 = vpop.f32.mrb[0].mxu0
  %v1526 = vadd.f32 0.0, %v1525
  %v1527 = vpop.f32.mrb[0].mxu0
  %v1528 = vpop.f32.mrb[0].mxu0
  %v1529 = vpop.f32.mrb[0].mxu0
  %1530 = vdwg.mxu0
  %v1531 = vadd.f32 %v1486, %v1526
  %v1532 = vxor.u32 %v1531, 2147483648
  %v1533 = vmul.f32 %v1532, 1.442695
  %v1534 = vpow.pop %v1533
  %v1535 = vadd.f32 %v1534, 1.0
  %v1536 = vrcp.pop %v1535
  %v1537 = vmul.f32 1.0, %v1536
  %v1538 = vtanh.pop %v1531
  %1540 = vrot.lane.b32.xlu0 %v1482, 32
  %v1541 = vpop.permute.xlu0 %1540
  %v1543 = vmul.f32 %v1537, %v1541
  %1545 = vrot.lane.b32.xlu0 %v1538, 32
  %v1546 = vpop.permute.xlu0 %1545
  %v1548 = vmul.f32 %v1537, %v1546
  %1550 = vrot.lane.b32.xlu0 %v1548, 32
  %v1551 = vpop.permute.xlu0 %1550
  %v1553 = vadd.f32 %v1543, %v1551
  %v1554 = vtanh.pop %v1553
  %1556 = vrot.lane.b32.xlu0 %v1554, 32
  %v1557 = vpop.permute.xlu0 %1556
  %v1559 = vmul.f32 %v1537, %v1557
  %v1560 = vsel %vm1029, 5, 10
  %vm1561 = vcmp.gt.s32.totalorder %v1114, %v1560
  %1563 = vrot.lane.b32.xlu0 %v1559, 64
  %v1564 = vpop.permute.xlu0 %1563
  %v1566 = vsel %vm1561, %v1564, %v1477
  %1568 = vrot.lane.b32.xlu0 %v1553, 96
  %v1569 = vpop.permute.xlu0 %1568
  %v1571 = vsel %vm1561, %v1569, %v1482
  %v1572 = vsel %vm1561, %v1564, 0.0
  %1573 = vst.msk [vmem:[%s7 + $0xa] sm:$0x3] %vm1126, %v1572
  %1574 = vst.msk [vmem:[%s7 + $0x14] sm:$0x3] %vm1128, %v1572
  %v1575 = vld [vmem:[#allocation4 + $0xc] sm:$0x3]
  %v1576 = vpack.c.bf16 %v1566, %v1566
  %v1578 = vsel %vm34, %v1576, 0
  %1580 = vmatprep.subr.bf16.mxu0 0
  %1581 = vmatpush1.bf16.msra.mxu0 %v1039
  %1582 = vmatprep.subr.bf16.mxu0 0
  %1583 = vmatpush1.bf16.msra.mxu0 %v1040
  %1584 = vmatprep.subr.bf16.mxu0 0
  %1585 = vmatpush1.bf16.msra.mxu0 0
  %1586 = vmatprep.subr.bf16.mxu0 0
  %1587 = vmatpush1.bf16.msra.mxu0 0
  %1588 = vmatprep.subr.bf16.mxu0 0
  %1589 = vmatpush1.bf16.msra.mxu0 0
  %1590 = vmatprep.subr.bf16.mxu0 0
  %1591 = vmatpush1.bf16.msra.mxu0 0
  %1592 = vmatprep.subr.bf16.mxu0 0
  %1593 = vmatpush1.bf16.msra.mxu0 0
  %1594 = vmatprep.subr.bf16.mxu0 0
  %1595 = vmatpush1.bf16.msra.mxu0 0
  %1596 = vmatprep.subr.bf16.mxu0 0
  %1597 = vmatpush1.bf16.msra.mxu0 0
  %1598 = vmatprep.subr.bf16.mxu0 0
  %1599 = vmatpush1.bf16.msra.mxu0 0
  %1600 = vmatprep.subr.bf16.mxu0 0
  %1601 = vmatpush1.bf16.msra.mxu0 0
  %1602 = vmatprep.subr.bf16.mxu0 0
  %1603 = vmatpush1.bf16.msra.mxu0 0
  %1604 = vmatprep.subr.bf16.mxu0 0
  %1605 = vmatpush1.bf16.msra.mxu0 0
  %1606 = vmatprep.subr.bf16.mxu0 0
  %1607 = vmatpush1.bf16.msra.mxu0 0
  %1608 = vmatprep.subr.bf16.mxu0 0
  %1609 = vmatpush1.bf16.msra.mxu0 0
  %1610 = vmatprep.subr.bf16.mxu0 0
  %1611 = vmatpush1.bf16.msra.mxu0 0
  %1612 = vmatprep.mubr.bf16.mxu0 0
  %1613 = vmatmul.mubr.bf16.gmra.mrb[0].mxu0 %v1578
  %v1614 = vpop.f32.mrb[0].mxu0
  %v1615 = vadd.f32 0.0, %v1614
  %v1616 = vpop.f32.mrb[0].mxu0
  %v1617 = vpop.f32.mrb[0].mxu0
  %v1618 = vpop.f32.mrb[0].mxu0
  %1619 = vdwg.mxu0
  %v1620 = vadd.f32 %v1575, %v1615
  %v1621 = vxor.u32 %v1620, 2147483648
  %v1622 = vmul.f32 %v1621, 1.442695
  %v1623 = vpow.pop %v1622
  %v1624 = vadd.f32 %v1623, 1.0
  %v1625 = vrcp.pop %v1624
  %v1626 = vmul.f32 1.0, %v1625
  %v1627 = vtanh.pop %v1620
  %1629 = vrot.lane.b32.xlu0 %v1571, 32
  %v1630 = vpop.permute.xlu0 %1629
  %v1632 = vmul.f32 %v1626, %v1630
  %1634 = vrot.lane.b32.xlu0 %v1627, 32
  %v1635 = vpop.permute.xlu0 %1634
  %v1637 = vmul.f32 %v1626, %v1635
  %1639 = vrot.lane.b32.xlu0 %v1637, 32
  %v1640 = vpop.permute.xlu0 %1639
  %v1642 = vadd.f32 %v1632, %v1640
  %v1643 = vtanh.pop %v1642
  %1645 = vrot.lane.b32.xlu0 %v1643, 32
  %v1646 = vpop.permute.xlu0 %1645
  %v1648 = vmul.f32 %v1626, %v1646
  %v1649 = vsel %vm1029, 6, 9
  %vm1650 = vcmp.gt.s32.totalorder %v1114, %v1649
  %1652 = vrot.lane.b32.xlu0 %v1648, 64
  %v1653 = vpop.permute.xlu0 %1652
  %v1655 = vsel %vm1650, %v1653, %v1566
  %1657 = vrot.lane.b32.xlu0 %v1642, 96
  %v1658 = vpop.permute.xlu0 %1657
  %v1660 = vsel %vm1650, %v1658, %v1571
  %v1661 = vsel %vm1650, %v1653, 0.0
  %1662 = vst.msk [vmem:[%s7 + $0xc] sm:$0x3] %vm1126, %v1661
  %1663 = vst.msk [vmem:[%s7 + $0x12] sm:$0x3] %vm1128, %v1661
  %v1664 = vld [vmem:[#allocation4 + $0xe] sm:$0x3]
  %v1665 = vpack.c.bf16 %v1655, %v1655
  %v1667 = vsel %vm34, %v1665, 0
  %1669 = vmatprep.subr.bf16.mxu0 0
  %1670 = vmatpush1.bf16.msra.mxu0 %v1039
  %1671 = vmatprep.subr.bf16.mxu0 0
  %1672 = vmatpush1.bf16.msra.mxu0 %v1040
  %1673 = vmatprep.subr.bf16.mxu0 0
  %1674 = vmatpush1.bf16.msra.mxu0 0
  %1675 = vmatprep.subr.bf16.mxu0 0
  %1676 = vmatpush1.bf16.msra.mxu0 0
  %1677 = vmatprep.subr.bf16.mxu0 0
  %1678 = vmatpush1.bf16.msra.mxu0 0
  %1679 = vmatprep.subr.bf16.mxu0 0
  %1680 = vmatpush1.bf16.msra.mxu0 0
  %1681 = vmatprep.subr.bf16.mxu0 0
  %1682 = vmatpush1.bf16.msra.mxu0 0
  %1683 = vmatprep.subr.bf16.mxu0 0
  %1684 = vmatpush1.bf16.msra.mxu0 0
  %1685 = vmatprep.subr.bf16.mxu0 0
  %1686 = vmatpush1.bf16.msra.mxu0 0
  %1687 = vmatprep.subr.bf16.mxu0 0
  %1688 = vmatpush1.bf16.msra.mxu0 0
  %1689 = vmatprep.subr.bf16.mxu0 0
  %1690 = vmatpush1.bf16.msra.mxu0 0
  %1691 = vmatprep.subr.bf16.mxu0 0
  %1692 = vmatpush1.bf16.msra.mxu0 0
  %1693 = vmatprep.subr.bf16.mxu0 0
  %1694 = vmatpush1.bf16.msra.mxu0 0
  %1695 = vmatprep.subr.bf16.mxu0 0
  %1696 = vmatpush1.bf16.msra.mxu0 0
  %1697 = vmatprep.subr.bf16.mxu0 0
  %1698 = vmatpush1.bf16.msra.mxu0 0
  %1699 = vmatprep.subr.bf16.mxu0 0
  %1700 = vmatpush1.bf16.msra.mxu0 0
  %1701 = vmatprep.mubr.bf16.mxu0 0
  %1702 = vmatmul.mubr.bf16.gmra.mrb[0].mxu0 %v1667
  %v1703 = vpop.f32.mrb[0].mxu0
  %v1704 = vadd.f32 0.0, %v1703
  %v1705 = vpop.f32.mrb[0].mxu0
  %v1706 = vpop.f32.mrb[0].mxu0
  %v1707 = vpop.f32.mrb[0].mxu0
  %1708 = vdwg.mxu0
  %v1709 = vadd.f32 %v1664, %v1704
  %v1710 = vxor.u32 %v1709, 2147483648
  %v1711 = vmul.f32 %v1710, 1.442695
  %v1712 = vpow.pop %v1711
  %v1713 = vadd.f32 %v1712, 1.0
  %v1714 = vrcp.pop %v1713
  %v1715 = vmul.f32 1.0, %v1714
  %v1716 = vtanh.pop %v1709
  %1718 = vrot.lane.b32.xlu0 %v1660, 32
  %v1719 = vpop.permute.xlu0 %1718
  %v1721 = vmul.f32 %v1715, %v1719
  %1723 = vrot.lane.b32.xlu0 %v1716, 32
  %v1724 = vpop.permute.xlu0 %1723
  %v1726 = vmul.f32 %v1715, %v1724
  %1728 = vrot.lane.b32.xlu0 %v1726, 32
  %v1729 = vpop.permute.xlu0 %1728
  %v1731 = vadd.f32 %v1721, %v1729
  %v1732 = vtanh.pop %v1731
  %1734 = vrot.lane.b32.xlu0 %v1732, 32
  %v1735 = vpop.permute.xlu0 %1734
  %v1737 = vmul.f32 %v1715, %v1735
  %v1738 = vsel %vm1029, 7, 8
  %vm1739 = vcmp.gt.s32.totalorder %v1114, %v1738
  %1741 = vrot.lane.b32.xlu0 %v1737, 64
  %v1742 = vpop.permute.xlu0 %1741
  %v1744 = vsel %vm1739, %v1742, %v1655
  %1746 = vrot.lane.b32.xlu0 %v1731, 96
  %v1747 = vpop.permute.xlu0 %1746
  %v1749 = vsel %vm1739, %v1747, %v1660
  %v1750 = vsel %vm1739, %v1742, 0.0
  %1751 = vst.msk [vmem:[%s7 + $0xe] sm:$0x3] %vm1126, %v1750
  %1752 = vst.msk [vmem:[%s7 + $0x10] sm:$0x3] %vm1128, %v1750
  %v1753 = vld [vmem:[#allocation4 + $0x10] sm:$0x3]
  %v1754 = vpack.c.bf16 %v1744, %v1744
  %v1756 = vsel %vm34, %v1754, 0
  %1758 = vmatprep.subr.bf16.mxu0 0
  %1759 = vmatpush1.bf16.msra.mxu0 %v1039
  %1760 = vmatprep.subr.bf16.mxu0 0
  %1761 = vmatpush1.bf16.msra.mxu0 %v1040
  %1762 = vmatprep.subr.bf16.mxu0 0
  %1763 = vmatpush1.bf16.msra.mxu0 0
  %1764 = vmatprep.subr.bf16.mxu0 0
  %1765 = vmatpush1.bf16.msra.mxu0 0
  %1766 = vmatprep.subr.bf16.mxu0 0
  %1767 = vmatpush1.bf16.msra.mxu0 0
  %1768 = vmatprep.subr.bf16.mxu0 0
  %1769 = vmatpush1.bf16.msra.mxu0 0
  %1770 = vmatprep.subr.bf16.mxu0 0
  %1771 = vmatpush1.bf16.msra.mxu0 0
  %1772 = vmatprep.subr.bf16.mxu0 0
  %1773 = vmatpush1.bf16.msra.mxu0 0
  %1774 = vmatprep.subr.bf16.mxu0 0
  %1775 = vmatpush1.bf16.msra.mxu0 0
  %1776 = vmatprep.subr.bf16.mxu0 0
  %1777 = vmatpush1.bf16.msra.mxu0 0
  %1778 = vmatprep.subr.bf16.mxu0 0
  %1779 = vmatpush1.bf16.msra.mxu0 0
  %1780 = vmatprep.subr.bf16.mxu0 0
  %1781 = vmatpush1.bf16.msra.mxu0 0
  %1782 = vmatprep.subr.bf16.mxu0 0
  %1783 = vmatpush1.bf16.msra.mxu0 0
  %1784 = vmatprep.subr.bf16.mxu0 0
  %1785 = vmatpush1.bf16.msra.mxu0 0
  %1786 = vmatprep.subr.bf16.mxu0 0
  %1787 = vmatpush1.bf16.msra.mxu0 0
  %1788 = vmatprep.subr.bf16.mxu0 0
  %1789 = vmatpush1.bf16.msra.mxu0 0
  %1790 = vmatprep.mubr.bf16.mxu0 0
  %1791 = vmatmul.mubr.bf16.gmra.mrb[0].mxu0 %v1756
  %v1792 = vpop.f32.mrb[0].mxu0
  %v1793 = vadd.f32 0.0, %v1792
  %v1794 = vpop.f32.mrb[0].mxu0
  %v1795 = vpop.f32.mrb[0].mxu0
  %v1796 = vpop.f32.mrb[0].mxu0
  %1797 = vdwg.mxu0
  %v1798 = vadd.f32 %v1753, %v1793
  %v1799 = vxor.u32 %v1798, 2147483648
  %v1800 = vmul.f32 %v1799, 1.442695
  %v1801 = vpow.pop %v1800
  %v1802 = vadd.f32 %v1801, 1.0
  %v1803 = vrcp.pop %v1802
  %v1804 = vmul.f32 1.0, %v1803
  %v1805 = vtanh.pop %v1798
  %1807 = vrot.lane.b32.xlu0 %v1749, 32
  %v1808 = vpop.permute.xlu0 %1807
  %v1810 = vmul.f32 %v1804, %v1808
  %1812 = vrot.lane.b32.xlu0 %v1805, 32
  %v1813 = vpop.permute.xlu0 %1812
  %v1815 = vmul.f32 %v1804, %v1813
  %1817 = vrot.lane.b32.xlu0 %v1815, 32
  %v1818 = vpop.permute.xlu0 %1817
  %v1820 = vadd.f32 %v1810, %v1818
  %v1821 = vtanh.pop %v1820
  %1823 = vrot.lane.b32.xlu0 %v1821, 32
  %v1824 = vpop.permute.xlu0 %1823
  %v1826 = vmul.f32 %v1804, %v1824
  %v1827 = vsel %vm1029, 8, 7
  %vm1828 = vcmp.gt.s32.totalorder %v1114, %v1827
  %1830 = vrot.lane.b32.xlu0 %v1826, 64
  %v1831 = vpop.permute.xlu0 %1830
  %v1833 = vsel %vm1828, %v1831, %v1744
  %1835 = vrot.lane.b32.xlu0 %v1820, 96
  %v1836 = vpop.permute.xlu0 %1835
  %v1838 = vsel %vm1828, %v1836, %v1749
  %v1839 = vsel %vm1828, %v1831, 0.0
  %1840 = vst.msk [vmem:[%s7 + $0x10] sm:$0x3] %vm1126, %v1839
  %1841 = vst.msk [vmem:[%s7 + $0xe] sm:$0x3] %vm1128, %v1839
  %v1842 = vld [vmem:[#allocation4 + $0x12] sm:$0x3]
  %v1843 = vpack.c.bf16 %v1833, %v1833
  %v1845 = vsel %vm34, %v1843, 0
  %1847 = vmatprep.subr.bf16.mxu0 0
  %1848 = vmatpush1.bf16.msra.mxu0 %v1039
  %1849 = vmatprep.subr.bf16.mxu0 0
  %1850 = vmatpush1.bf16.msra.mxu0 %v1040
  %1851 = vmatprep.subr.bf16.mxu0 0
  %1852 = vmatpush1.bf16.msra.mxu0 0
  %1853 = vmatprep.subr.bf16.mxu0 0
  %1854 = vmatpush1.bf16.msra.mxu0 0
  %1855 = vmatprep.subr.bf16.mxu0 0
  %1856 = vmatpush1.bf16.msra.mxu0 0
  %1857 = vmatprep.subr.bf16.mxu0 0
  %1858 = vmatpush1.bf16.msra.mxu0 0
  %1859 = vmatprep.subr.bf16.mxu0 0
  %1860 = vmatpush1.bf16.msra.mxu0 0
  %1861 = vmatprep.subr.bf16.mxu0 0
  %1862 = vmatpush1.bf16.msra.mxu0 0
  %1863 = vmatprep.subr.bf16.mxu0 0
  %1864 = vmatpush1.bf16.msra.mxu0 0
  %1865 = vmatprep.subr.bf16.mxu0 0
  %1866 = vmatpush1.bf16.msra.mxu0 0
  %1867 = vmatprep.subr.bf16.mxu0 0
  %1868 = vmatpush1.bf16.msra.mxu0 0
  %1869 = vmatprep.subr.bf16.mxu0 0
  %1870 = vmatpush1.bf16.msra.mxu0 0
  %1871 = vmatprep.subr.bf16.mxu0 0
  %1872 = vmatpush1.bf16.msra.mxu0 0
  %1873 = vmatprep.subr.bf16.mxu0 0
  %1874 = vmatpush1.bf16.msra.mxu0 0
  %1875 = vmatprep.subr.bf16.mxu0 0
  %1876 = vmatpush1.bf16.msra.mxu0 0
  %1877 = vmatprep.subr.bf16.mxu0 0
  %1878 = vmatpush1.bf16.msra.mxu0 0
  %1879 = vmatprep.mubr.bf16.mxu0 0
  %1880 = vmatmul.mubr.bf16.gmra.mrb[0].mxu0 %v1845
  %v1881 = vpop.f32.mrb[0].mxu0
  %v1882 = vadd.f32 0.0, %v1881
  %v1883 = vpop.f32.mrb[0].mxu0
  %v1884 = vpop.f32.mrb[0].mxu0
  %v1885 = vpop.f32.mrb[0].mxu0
  %1886 = vdwg.mxu0
  %v1887 = vadd.f32 %v1842, %v1882
  %v1888 = vxor.u32 %v1887, 2147483648
  %v1889 = vmul.f32 %v1888, 1.442695
  %v1890 = vpow.pop %v1889
  %v1891 = vadd.f32 %v1890, 1.0
  %v1892 = vrcp.pop %v1891
  %v1893 = vmul.f32 1.0, %v1892
  %v1894 = vtanh.pop %v1887
  %1896 = vrot.lane.b32.xlu0 %v1838, 32
  %v1897 = vpop.permute.xlu0 %1896
  %v1899 = vmul.f32 %v1893, %v1897
  %1901 = vrot.lane.b32.xlu0 %v1894, 32
  %v1902 = vpop.permute.xlu0 %1901
  %v1904 = vmul.f32 %v1893, %v1902
  %1906 = vrot.lane.b32.xlu0 %v1904, 32
  %v1907 = vpop.permute.xlu0 %1906
  %v1909 = vadd.f32 %v1899, %v1907
  %v1910 = vtanh.pop %v1909
  %1912 = vrot.lane.b32.xlu0 %v1910, 32
  %v1913 = vpop.permute.xlu0 %1912
  %v1915 = vmul.f32 %v1893, %v1913
  %v1916 = vsel %vm1029, 9, 6
  %vm1917 = vcmp.gt.s32.totalorder %v1114, %v1916
  %1919 = vrot.lane.b32.xlu0 %v1915, 64
  %v1920 = vpop.permute.xlu0 %1919
  %v1922 = vsel %vm1917, %v1920, %v1833
  %1924 = vrot.lane.b32.xlu0 %v1909, 96
  %v1925 = vpop.permute.xlu0 %1924
  %v1927 = vsel %vm1917, %v1925, %v1838
  %v1928 = vsel %vm1917, %v1920, 0.0
  %1929 = vst.msk [vmem:[%s7 + $0x12] sm:$0x3] %vm1126, %v1928
  %1930 = vst.msk [vmem:[%s7 + $0xc] sm:$0x3] %vm1128, %v1928
  %v1931 = vld [vmem:[#allocation4 + $0x14] sm:$0x3]
  %v1932 = vpack.c.bf16 %v1922, %v1922
  %v1934 = vsel %vm34, %v1932, 0
  %1936 = vmatprep.subr.bf16.mxu0 0
  %1937 = vmatpush1.bf16.msra.mxu0 %v1039
  %1938 = vmatprep.subr.bf16.mxu0 0
  %1939 = vmatpush1.bf16.msra.mxu0 %v1040
  %1940 = vmatprep.subr.bf16.mxu0 0
  %1941 = vmatpush1.bf16.msra.mxu0 0
  %1942 = vmatprep.subr.bf16.mxu0 0
  %1943 = vmatpush1.bf16.msra.mxu0 0
  %1944 = vmatprep.subr.bf16.mxu0 0
  %1945 = vmatpush1.bf16.msra.mxu0 0
  %1946 = vmatprep.subr.bf16.mxu0 0
  %1947 = vmatpush1.bf16.msra.mxu0 0
  %1948 = vmatprep.subr.bf16.mxu0 0
  %1949 = vmatpush1.bf16.msra.mxu0 0
  %1950 = vmatprep.subr.bf16.mxu0 0
  %1951 = vmatpush1.bf16.msra.mxu0 0
  %1952 = vmatprep.subr.bf16.mxu0 0
  %1953 = vmatpush1.bf16.msra.mxu0 0
  %1954 = vmatprep.subr.bf16.mxu0 0
  %1955 = vmatpush1.bf16.msra.mxu0 0
  %1956 = vmatprep.subr.bf16.mxu0 0
  %1957 = vmatpush1.bf16.msra.mxu0 0
  %1958 = vmatprep.subr.bf16.mxu0 0
  %1959 = vmatpush1.bf16.msra.mxu0 0
  %1960 = vmatprep.subr.bf16.mxu0 0
  %1961 = vmatpush1.bf16.msra.mxu0 0
  %1962 = vmatprep.subr.bf16.mxu0 0
  %1963 = vmatpush1.bf16.msra.mxu0 0
  %1964 = vmatprep.subr.bf16.mxu0 0
  %1965 = vmatpush1.bf16.msra.mxu0 0
  %1966 = vmatprep.subr.bf16.mxu0 0
  %1967 = vmatpush1.bf16.msra.mxu0 0
  %1968 = vmatprep.mubr.bf16.mxu0 0
  %1969 = vmatmul.mubr.bf16.gmra.mrb[0].mxu0 %v1934
  %v1970 = vpop.f32.mrb[0].mxu0
  %v1971 = vadd.f32 0.0, %v1970
  %v1972 = vpop.f32.mrb[0].mxu0
  %v1973 = vpop.f32.mrb[0].mxu0
  %v1974 = vpop.f32.mrb[0].mxu0
  %1975 = vdwg.mxu0
  %v1976 = vadd.f32 %v1931, %v1971
  %v1977 = vxor.u32 %v1976, 2147483648
  %v1978 = vmul.f32 %v1977, 1.442695
  %v1979 = vpow.pop %v1978
  %v1980 = vadd.f32 %v1979, 1.0
  %v1981 = vrcp.pop %v1980
  %v1982 = vmul.f32 1.0, %v1981
  %v1983 = vtanh.pop %v1976
  %1985 = vrot.lane.b32.xlu0 %v1927, 32
  %v1986 = vpop.permute.xlu0 %1985
  %v1988 = vmul.f32 %v1982, %v1986
  %1990 = vrot.lane.b32.xlu0 %v1983, 32
  %v1991 = vpop.permute.xlu0 %1990
  %v1993 = vmul.f32 %v1982, %v1991
  %1995 = vrot.lane.b32.xlu0 %v1993, 32
  %v1996 = vpop.permute.xlu0 %1995
  %v1998 = vadd.f32 %v1988, %v1996
  %v1999 = vtanh.pop %v1998
  %2001 = vrot.lane.b32.xlu0 %v1999, 32
  %v2002 = vpop.permute.xlu0 %2001
  %v2004 = vmul.f32 %v1982, %v2002
  %v2005 = vsel %vm1029, 10, 5
  %vm2006 = vcmp.gt.s32.totalorder %v1114, %v2005
  %2008 = vrot.lane.b32.xlu0 %v2004, 64
  %v2009 = vpop.permute.xlu0 %2008
  %v2011 = vsel %vm2006, %v2009, %v1922
  %2013 = vrot.lane.b32.xlu0 %v1998, 96
  %v2014 = vpop.permute.xlu0 %2013
  %v2016 = vsel %vm2006, %v2014, %v1927
  %v2017 = vsel %vm2006, %v2009, 0.0
  %2018 = vst.msk [vmem:[%s7 + $0x14] sm:$0x3] %vm1126, %v2017
  %2019 = vst.msk [vmem:[%s7 + $0xa] sm:$0x3] %vm1128, %v2017
  %v2020 = vld [vmem:[#allocation4 + $0x16] sm:$0x3]
  %v2021 = vpack.c.bf16 %v2011, %v2011
  %v2023 = vsel %vm34, %v2021, 0
  %2025 = vmatprep.subr.bf16.mxu0 0
  %2026 = vmatpush1.bf16.msra.mxu0 %v1039
  %2027 = vmatprep.subr.bf16.mxu0 0
  %2028 = vmatpush1.bf16.msra.mxu0 %v1040
  %2029 = vmatprep.subr.bf16.mxu0 0
  %2030 = vmatpush1.bf16.msra.mxu0 0
  %2031 = vmatprep.subr.bf16.mxu0 0
  %2032 = vmatpush1.bf16.msra.mxu0 0
  %2033 = vmatprep.subr.bf16.mxu0 0
  %2034 = vmatpush1.bf16.msra.mxu0 0
  %2035 = vmatprep.subr.bf16.mxu0 0
  %2036 = vmatpush1.bf16.msra.mxu0 0
  %2037 = vmatprep.subr.bf16.mxu0 0
  %2038 = vmatpush1.bf16.msra.mxu0 0
  %2039 = vmatprep.subr.bf16.mxu0 0
  %2040 = vmatpush1.bf16.msra.mxu0 0
  %2041 = vmatprep.subr.bf16.mxu0 0
  %2042 = vmatpush1.bf16.msra.mxu0 0
  %2043 = vmatprep.subr.bf16.mxu0 0
  %2044 = vmatpush1.bf16.msra.mxu0 0
  %2045 = vmatprep.subr.bf16.mxu0 0
  %2046 = vmatpush1.bf16.msra.mxu0 0
  %2047 = vmatprep.subr.bf16.mxu0 0
  %2048 = vmatpush1.bf16.msra.mxu0 0
  %2049 = vmatprep.subr.bf16.mxu0 0
  %2050 = vmatpush1.bf16.msra.mxu0 0
  %2051 = vmatprep.subr.bf16.mxu0 0
  %2052 = vmatpush1.bf16.msra.mxu0 0
  %2053 = vmatprep.subr.bf16.mxu0 0
  %2054 = vmatpush1.bf16.msra.mxu0 0
  %2055 = vmatprep.subr.bf16.mxu0 0
  %2056 = vmatpush1.bf16.msra.mxu0 0
  %2057 = vmatprep.mubr.bf16.mxu0 0
  %2058 = vmatmul.mubr.bf16.gmra.mrb[0].mxu0 %v2023
  %v2059 = vpop.f32.mrb[0].mxu0
  %v2060 = vadd.f32 0.0, %v2059
  %v2061 = vpop.f32.mrb[0].mxu0
  %v2062 = vpop.f32.mrb[0].mxu0
  %v2063 = vpop.f32.mrb[0].mxu0
  %2064 = vdwg.mxu0
  %v2065 = vadd.f32 %v2020, %v2060
  %v2066 = vxor.u32 %v2065, 2147483648
  %v2067 = vmul.f32 %v2066, 1.442695
  %v2068 = vpow.pop %v2067
  %v2069 = vadd.f32 %v2068, 1.0
  %v2070 = vrcp.pop %v2069
  %v2071 = vmul.f32 1.0, %v2070
  %v2072 = vtanh.pop %v2065
  %2074 = vrot.lane.b32.xlu0 %v2016, 32
  %v2075 = vpop.permute.xlu0 %2074
  %v2077 = vmul.f32 %v2071, %v2075
  %2079 = vrot.lane.b32.xlu0 %v2072, 32
  %v2080 = vpop.permute.xlu0 %2079
  %v2082 = vmul.f32 %v2071, %v2080
  %2084 = vrot.lane.b32.xlu0 %v2082, 32
  %v2085 = vpop.permute.xlu0 %2084
  %v2087 = vadd.f32 %v2077, %v2085
  %v2088 = vtanh.pop %v2087
  %2090 = vrot.lane.b32.xlu0 %v2088, 32
  %v2091 = vpop.permute.xlu0 %2090
  %v2093 = vmul.f32 %v2071, %v2091
  %v2094 = vsel %vm1029, 11, 4
  %vm2095 = vcmp.gt.s32.totalorder %v1114, %v2094
  %2097 = vrot.lane.b32.xlu0 %v2093, 64
  %v2098 = vpop.permute.xlu0 %2097
  %v2100 = vsel %vm2095, %v2098, %v2011
  %2102 = vrot.lane.b32.xlu0 %v2087, 96
  %v2103 = vpop.permute.xlu0 %2102
  %v2105 = vsel %vm2095, %v2103, %v2016
  %v2106 = vsel %vm2095, %v2098, 0.0
  %2107 = vst.msk [vmem:[%s7 + $0x16] sm:$0x3] %vm1126, %v2106
  %2108 = vst.msk [vmem:[%s7 + $0x8] sm:$0x3] %vm1128, %v2106
  %v2109 = vld [vmem:[#allocation4 + $0x18] sm:$0x3]
  %v2110 = vpack.c.bf16 %v2100, %v2100
  %v2112 = vsel %vm34, %v2110, 0
  %2114 = vmatprep.subr.bf16.mxu0 0
  %2115 = vmatpush1.bf16.msra.mxu0 %v1039
  %2116 = vmatprep.subr.bf16.mxu0 0
  %2117 = vmatpush1.bf16.msra.mxu0 %v1040
  %2118 = vmatprep.subr.bf16.mxu0 0
  %2119 = vmatpush1.bf16.msra.mxu0 0
  %2120 = vmatprep.subr.bf16.mxu0 0
  %2121 = vmatpush1.bf16.msra.mxu0 0
  %2122 = vmatprep.subr.bf16.mxu0 0
  %2123 = vmatpush1.bf16.msra.mxu0 0
  %2124 = vmatprep.subr.bf16.mxu0 0
  %2125 = vmatpush1.bf16.msra.mxu0 0
  %2126 = vmatprep.subr.bf16.mxu0 0
  %2127 = vmatpush1.bf16.msra.mxu0 0
  %2128 = vmatprep.subr.bf16.mxu0 0
  %2129 = vmatpush1.bf16.msra.mxu0 0
  %2130 = vmatprep.subr.bf16.mxu0 0
  %2131 = vmatpush1.bf16.msra.mxu0 0
  %2132 = vmatprep.subr.bf16.mxu0 0
  %2133 = vmatpush1.bf16.msra.mxu0 0
  %2134 = vmatprep.subr.bf16.mxu0 0
  %2135 = vmatpush1.bf16.msra.mxu0 0
  %2136 = vmatprep.subr.bf16.mxu0 0
  %2137 = vmatpush1.bf16.msra.mxu0 0
  %2138 = vmatprep.subr.bf16.mxu0 0
  %2139 = vmatpush1.bf16.msra.mxu0 0
  %2140 = vmatprep.subr.bf16.mxu0 0
  %2141 = vmatpush1.bf16.msra.mxu0 0
  %2142 = vmatprep.subr.bf16.mxu0 0
  %2143 = vmatpush1.bf16.msra.mxu0 0
  %2144 = vmatprep.subr.bf16.mxu0 0
  %2145 = vmatpush1.bf16.msra.mxu0 0
  %2146 = vmatprep.mubr.bf16.mxu0 0
  %2147 = vmatmul.mubr.bf16.gmra.mrb[0].mxu0 %v2112
  %v2148 = vpop.f32.mrb[0].mxu0
  %v2149 = vadd.f32 0.0, %v2148
  %v2150 = vpop.f32.mrb[0].mxu0
  %v2151 = vpop.f32.mrb[0].mxu0
  %v2152 = vpop.f32.mrb[0].mxu0
  %2153 = vdwg.mxu0
  %v2154 = vadd.f32 %v2109, %v2149
  %v2155 = vxor.u32 %v2154, 2147483648
  %v2156 = vmul.f32 %v2155, 1.442695
  %v2157 = vpow.pop %v2156
  %v2158 = vadd.f32 %v2157, 1.0
  %v2159 = vrcp.pop %v2158
  %v2160 = vmul.f32 1.0, %v2159
  %v2161 = vtanh.pop %v2154
  %2163 = vrot.lane.b32.xlu0 %v2105, 32
  %v2164 = vpop.permute.xlu0 %2163
  %v2166 = vmul.f32 %v2160, %v2164
  %2168 = vrot.lane.b32.xlu0 %v2161, 32
  %v2169 = vpop.permute.xlu0 %2168
  %v2171 = vmul.f32 %v2160, %v2169
  %2173 = vrot.lane.b32.xlu0 %v2171, 32
  %v2174 = vpop.permute.xlu0 %2173
  %v2176 = vadd.f32 %v2166, %v2174
  %v2177 = vtanh.pop %v2176
  %2179 = vrot.lane.b32.xlu0 %v2177, 32
  %v2180 = vpop.permute.xlu0 %2179
  %v2182 = vmul.f32 %v2160, %v2180
  %v2183 = vsel %vm1029, 12, 3
  %vm2184 = vcmp.gt.s32.totalorder %v1114, %v2183
  %2186 = vrot.lane.b32.xlu0 %v2182, 64
  %v2187 = vpop.permute.xlu0 %2186
  %v2189 = vsel %vm2184, %v2187, %v2100
  %2191 = vrot.lane.b32.xlu0 %v2176, 96
  %v2192 = vpop.permute.xlu0 %2191
  %v2194 = vsel %vm2184, %v2192, %v2105
  %v2195 = vsel %vm2184, %v2187, 0.0
  %2196 = vst.msk [vmem:[%s7 + $0x18] sm:$0x3] %vm1126, %v2195
  %2197 = vst.msk [vmem:[%s7 + $0x6] sm:$0x3] %vm1128, %v2195
  %v2198 = vld [vmem:[#allocation4 + $0x1a] sm:$0x3]
  %v2199 = vpack.c.bf16 %v2189, %v2189
  %v2201 = vsel %vm34, %v2199, 0
  %2203 = vmatprep.subr.bf16.mxu0 0
  %2204 = vmatpush1.bf16.msra.mxu0 %v1039
  %2205 = vmatprep.subr.bf16.mxu0 0
  %2206 = vmatpush1.bf16.msra.mxu0 %v1040
  %2207 = vmatprep.subr.bf16.mxu0 0
  %2208 = vmatpush1.bf16.msra.mxu0 0
  %2209 = vmatprep.subr.bf16.mxu0 0
  %2210 = vmatpush1.bf16.msra.mxu0 0
  %2211 = vmatprep.subr.bf16.mxu0 0
  %2212 = vmatpush1.bf16.msra.mxu0 0
  %2213 = vmatprep.subr.bf16.mxu0 0
  %2214 = vmatpush1.bf16.msra.mxu0 0
  %2215 = vmatprep.subr.bf16.mxu0 0
  %2216 = vmatpush1.bf16.msra.mxu0 0
  %2217 = vmatprep.subr.bf16.mxu0 0
  %2218 = vmatpush1.bf16.msra.mxu0 0
  %2219 = vmatprep.subr.bf16.mxu0 0
  %2220 = vmatpush1.bf16.msra.mxu0 0
  %2221 = vmatprep.subr.bf16.mxu0 0
  %2222 = vmatpush1.bf16.msra.mxu0 0
  %2223 = vmatprep.subr.bf16.mxu0 0
  %2224 = vmatpush1.bf16.msra.mxu0 0
  %2225 = vmatprep.subr.bf16.mxu0 0
  %2226 = vmatpush1.bf16.msra.mxu0 0
  %2227 = vmatprep.subr.bf16.mxu0 0
  %2228 = vmatpush1.bf16.msra.mxu0 0
  %2229 = vmatprep.subr.bf16.mxu0 0
  %2230 = vmatpush1.bf16.msra.mxu0 0
  %2231 = vmatprep.subr.bf16.mxu0 0
  %2232 = vmatpush1.bf16.msra.mxu0 0
  %2233 = vmatprep.subr.bf16.mxu0 0
  %2234 = vmatpush1.bf16.msra.mxu0 0
  %2235 = vmatprep.mubr.bf16.mxu0 0
  %2236 = vmatmul.mubr.bf16.gmra.mrb[0].mxu0 %v2201
  %v2237 = vpop.f32.mrb[0].mxu0
  %v2238 = vadd.f32 0.0, %v2237
  %v2239 = vpop.f32.mrb[0].mxu0
  %v2240 = vpop.f32.mrb[0].mxu0
  %v2241 = vpop.f32.mrb[0].mxu0
  %2242 = vdwg.mxu0
  %v2243 = vadd.f32 %v2198, %v2238
  %v2244 = vxor.u32 %v2243, 2147483648
  %v2245 = vmul.f32 %v2244, 1.442695
  %v2246 = vpow.pop %v2245
  %v2247 = vadd.f32 %v2246, 1.0
  %v2248 = vrcp.pop %v2247
  %v2249 = vmul.f32 1.0, %v2248
  %v2250 = vtanh.pop %v2243
  %2252 = vrot.lane.b32.xlu0 %v2194, 32
  %v2253 = vpop.permute.xlu0 %2252
  %v2255 = vmul.f32 %v2249, %v2253
  %2257 = vrot.lane.b32.xlu0 %v2250, 32
  %v2258 = vpop.permute.xlu0 %2257
  %v2260 = vmul.f32 %v2249, %v2258
  %2262 = vrot.lane.b32.xlu0 %v2260, 32
  %v2263 = vpop.permute.xlu0 %2262
  %v2265 = vadd.f32 %v2255, %v2263
  %v2266 = vtanh.pop %v2265
  %2268 = vrot.lane.b32.xlu0 %v2266, 32
  %v2269 = vpop.permute.xlu0 %2268
  %v2271 = vmul.f32 %v2249, %v2269
  %v2272 = vsel %vm1029, 13, 2
  %vm2273 = vcmp.gt.s32.totalorder %v1114, %v2272
  %2275 = vrot.lane.b32.xlu0 %v2271, 64
  %v2276 = vpop.permute.xlu0 %2275
  %v2278 = vsel %vm2273, %v2276, %v2189
  %2280 = vrot.lane.b32.xlu0 %v2265, 96
  %v2281 = vpop.permute.xlu0 %2280
  %v2283 = vsel %vm2273, %v2281, %v2194
  %v2284 = vsel %vm2273, %v2276, 0.0
  %2285 = vst.msk [vmem:[%s7 + $0x1a] sm:$0x3] %vm1126, %v2284
  %2286 = vst.msk [vmem:[%s7 + $0x4] sm:$0x3] %vm1128, %v2284
  %v2287 = vld [vmem:[#allocation4 + $0x1c] sm:$0x3]
  %v2288 = vpack.c.bf16 %v2278, %v2278
  %v2290 = vsel %vm34, %v2288, 0
  %2292 = vmatprep.subr.bf16.mxu0 0
  %2293 = vmatpush1.bf16.msra.mxu0 %v1039
  %2294 = vmatprep.subr.bf16.mxu0 0
  %2295 = vmatpush1.bf16.msra.mxu0 %v1040
  %2296 = vmatprep.subr.bf16.mxu0 0
  %2297 = vmatpush1.bf16.msra.mxu0 0
  %2298 = vmatprep.subr.bf16.mxu0 0
  %2299 = vmatpush1.bf16.msra.mxu0 0
  %2300 = vmatprep.subr.bf16.mxu0 0
  %2301 = vmatpush1.bf16.msra.mxu0 0
  %2302 = vmatprep.subr.bf16.mxu0 0
  %2303 = vmatpush1.bf16.msra.mxu0 0
  %2304 = vmatprep.subr.bf16.mxu0 0
  %2305 = vmatpush1.bf16.msra.mxu0 0
  %2306 = vmatprep.subr.bf16.mxu0 0
  %2307 = vmatpush1.bf16.msra.mxu0 0
  %2308 = vmatprep.subr.bf16.mxu0 0
  %2309 = vmatpush1.bf16.msra.mxu0 0
  %2310 = vmatprep.subr.bf16.mxu0 0
  %2311 = vmatpush1.bf16.msra.mxu0 0
  %2312 = vmatprep.subr.bf16.mxu0 0
  %2313 = vmatpush1.bf16.msra.mxu0 0
  %2314 = vmatprep.subr.bf16.mxu0 0
  %2315 = vmatpush1.bf16.msra.mxu0 0
  %2316 = vmatprep.subr.bf16.mxu0 0
  %2317 = vmatpush1.bf16.msra.mxu0 0
  %2318 = vmatprep.subr.bf16.mxu0 0
  %2319 = vmatpush1.bf16.msra.mxu0 0
  %2320 = vmatprep.subr.bf16.mxu0 0
  %2321 = vmatpush1.bf16.msra.mxu0 0
  %2322 = vmatprep.subr.bf16.mxu0 0
  %2323 = vmatpush1.bf16.msra.mxu0 0
  %2324 = vmatprep.mubr.bf16.mxu0 0
  %2325 = vmatmul.mubr.bf16.gmra.mrb[0].mxu0 %v2290
  %v2326 = vpop.f32.mrb[0].mxu0
  %v2327 = vadd.f32 0.0, %v2326
  %v2328 = vpop.f32.mrb[0].mxu0
  %v2329 = vpop.f32.mrb[0].mxu0
  %v2330 = vpop.f32.mrb[0].mxu0
  %2331 = vdwg.mxu0
  %v2332 = vadd.f32 %v2287, %v2327
  %v2333 = vxor.u32 %v2332, 2147483648
  %v2334 = vmul.f32 %v2333, 1.442695
  %v2335 = vpow.pop %v2334
  %v2336 = vadd.f32 %v2335, 1.0
  %v2337 = vrcp.pop %v2336
  %v2338 = vmul.f32 1.0, %v2337
  %v2339 = vtanh.pop %v2332
  %2341 = vrot.lane.b32.xlu0 %v2283, 32
  %v2342 = vpop.permute.xlu0 %2341
  %v2344 = vmul.f32 %v2338, %v2342
  %2346 = vrot.lane.b32.xlu0 %v2339, 32
  %v2347 = vpop.permute.xlu0 %2346
  %v2349 = vmul.f32 %v2338, %v2347
  %2351 = vrot.lane.b32.xlu0 %v2349, 32
  %v2352 = vpop.permute.xlu0 %2351
  %v2354 = vadd.f32 %v2344, %v2352
  %v2355 = vtanh.pop %v2354
  %2357 = vrot.lane.b32.xlu0 %v2355, 32
  %v2358 = vpop.permute.xlu0 %2357
  %v2360 = vmul.f32 %v2338, %v2358
  %v2361 = vsel %vm1029, 14, 1
  %vm2362 = vcmp.gt.s32.totalorder %v1114, %v2361
  %2364 = vrot.lane.b32.xlu0 %v2360, 64
  %v2365 = vpop.permute.xlu0 %2364
  %v2367 = vsel %vm2362, %v2365, %v2278
  %2369 = vrot.lane.b32.xlu0 %v2354, 96
  %v2370 = vpop.permute.xlu0 %2369
  %v2372 = vsel %vm2362, %v2370, %v2283
  %v2373 = vsel %vm2362, %v2365, 0.0
  %2374 = vst.msk [vmem:[%s7 + $0x1c] sm:$0x3] %vm1126, %v2373
  %2375 = vst.msk [vmem:[%s7 + $0x2] sm:$0x3] %vm1128, %v2373
  %v2376 = vld [vmem:[#allocation4 + $0x1e] sm:$0x3]
  %v2377 = vpack.c.bf16 %v2367, %v2367
  %v2379 = vsel %vm34, %v2377, 0
  %2381 = vmatprep.subr.bf16.mxu0 0
  %2382 = vmatpush1.bf16.msra.mxu0 %v1039
  %2383 = vmatprep.subr.bf16.mxu0 0
  %2384 = vmatpush1.bf16.msra.mxu0 %v1040
  %2385 = vmatprep.subr.bf16.mxu0 0
  %2386 = vmatpush1.bf16.msra.mxu0 0
  %2387 = vmatprep.subr.bf16.mxu0 0
  %2388 = vmatpush1.bf16.msra.mxu0 0
  %2389 = vmatprep.subr.bf16.mxu0 0
  %2390 = vmatpush1.bf16.msra.mxu0 0
  %2391 = vmatprep.subr.bf16.mxu0 0
  %2392 = vmatpush1.bf16.msra.mxu0 0
  %2393 = vmatprep.subr.bf16.mxu0 0
  %2394 = vmatpush1.bf16.msra.mxu0 0
  %2395 = vmatprep.subr.bf16.mxu0 0
  %2396 = vmatpush1.bf16.msra.mxu0 0
  %2397 = vmatprep.subr.bf16.mxu0 0
  %2398 = vmatpush1.bf16.msra.mxu0 0
  %2399 = vmatprep.subr.bf16.mxu0 0
  %2400 = vmatpush1.bf16.msra.mxu0 0
  %2401 = vmatprep.subr.bf16.mxu0 0
  %2402 = vmatpush1.bf16.msra.mxu0 0
  %2403 = vmatprep.subr.bf16.mxu0 0
  %2404 = vmatpush1.bf16.msra.mxu0 0
  %2405 = vmatprep.subr.bf16.mxu0 0
  %2406 = vmatpush1.bf16.msra.mxu0 0
  %2407 = vmatprep.subr.bf16.mxu0 0
  %2408 = vmatpush1.bf16.msra.mxu0 0
  %2409 = vmatprep.subr.bf16.mxu0 0
  %2410 = vmatpush1.bf16.msra.mxu0 0
  %2411 = vmatprep.subr.bf16.mxu0 0
  %2412 = vmatpush1.bf16.msra.mxu0 0
  %2413 = vmatprep.mubr.bf16.mxu0 0
  %2414 = vmatmul.mubr.bf16.gmra.mrb[0].mxu0 %v2379
  %v2415 = vpop.f32.mrb[0].mxu0
  %v2416 = vadd.f32 0.0, %v2415
  %v2417 = vpop.f32.mrb[0].mxu0
  %v2418 = vpop.f32.mrb[0].mxu0
  %v2419 = vpop.f32.mrb[0].mxu0
  %2420 = vdwg.mxu0
  %v2421 = vadd.f32 %v2376, %v2416
  %v2422 = vxor.u32 %v2421, 2147483648
  %v2423 = vmul.f32 %v2422, 1.442695
  %v2424 = vpow.pop %v2423
  %v2425 = vadd.f32 %v2424, 1.0
  %v2426 = vrcp.pop %v2425
  %v2427 = vmul.f32 1.0, %v2426
  %v2428 = vtanh.pop %v2421
  %2430 = vrot.lane.b32.xlu0 %v2372, 32
  %v2431 = vpop.permute.xlu0 %2430
  %v2433 = vmul.f32 %v2427, %v2431
  %2435 = vrot.lane.b32.xlu0 %v2428, 32
  %v2436 = vpop.permute.xlu0 %2435
  %v2438 = vmul.f32 %v2427, %v2436
  %2440 = vrot.lane.b32.xlu0 %v2438, 32
  %v2441 = vpop.permute.xlu0 %2440
  %v2443 = vadd.f32 %v2433, %v2441
  %v2444 = vtanh.pop %v2443
  %2446 = vrot.lane.b32.xlu0 %v2444, 32
  %v2447 = vpop.permute.xlu0 %2446
  %v2449 = vmul.f32 %v2427, %v2447
  %v2450 = vsel %vm1029, 15, 0
  %vm2451 = vcmp.gt.s32.totalorder %v1114, %v2450
  %2453 = vrot.lane.b32.xlu0 %v2449, 64
  %v2454 = vpop.permute.xlu0 %2453
  %v2456 = vsel %vm2451, %v2454, 0.0
  %2457 = vst.msk [vmem:[%s7 + $0x1e] sm:$0x3] %vm1126, %v2456
  %2458 = vst.msk [vmem:[%s7] sm:$0x3] %vm1128, %v2456
  // Predicated region
  $region30: #{text_encoder_forward.1} parent=0 // pred_check
    _
  $region31: #{text_encoder_forward.1} parent=0 // pred_check_branch
    %2460 = sbr.rel (0) target = $region33
  $region32: #{text_encoder_forward.1} parent=0 // pred_region
    _
  $region33: #{text_encoder_forward.1} parent=0 // pred_fallthru
    _
  // Predicated region
  $region34: #{text_encoder_forward.1} parent=0 // pred_check
    _
  $region35: #{text_encoder_forward.1} parent=0 // pred_check_branch
    %2462 = sbr.rel (0) target = $region37
  $region36: #{text_encoder_forward.1} parent=0 // pred_region
    _
  $region37: #{text_encoder_forward.1} parent=0 // pred_fallthru
    _

</llo_original>
